<compile_context>
chip_gen: v7x
topology: tpu7x:2x2x1
jax: 0.10.0
libtpu: 0.0.40
codegen_flags: <defaults>
</compile_context>

<pallas_src>
import jax
import jax.numpy as jnp
from jax import lax
from jax.experimental import pallas as pl
from jax.experimental.pallas import tpu as pltpu

BN_EPS = 1e-5


def _bn_scale_shift(h, gamma, beta):
    """Training-mode BatchNorm1d -> folded per-feature (scale, shift).

    Single reduction pass (sum and sum-of-squares), biased variance as in
    PyTorch training normalization, variance clamped at 0 before rsqrt.
    """
    n = h.shape[0]
    inv_n = 1.0 / n
    s = jnp.sum(h, axis=0, keepdims=True)
    sq = jnp.sum(h * h, axis=0, keepdims=True)
    mean = s * inv_n
    var = jnp.maximum(sq * inv_n - mean * mean, 0.0)     # clamp: no NaN risk
    scale = gamma * lax.rsqrt(var + BN_EPS)              # rsqrt -> EUP slot
    shift = beta - mean * scale
    return scale, shift


def reg_kernel(x_ref, w1_ref, bn1_ref, w2_ref, bn2_ref, fc3_ref, o_ref):
    x = x_ref[0]                                                     # (N, 1024) f32

    # ---- fc1 (bf16 MXU, f32 acc) -> dropout(identity) -> relu -> BN1 ----
    h1 = jnp.dot(x.astype(jnp.bfloat16), w1_ref[...],
                 preferred_element_type=jnp.float32)
    h1 = jnp.maximum(h1 + bn1_ref[0:1, :], 0.0)                      # +b1, relu
    s1, t1 = _bn_scale_shift(h1, bn1_ref[1:2, :], bn1_ref[2:3, :])
    h1 = h1 * s1 + t1                                                # (N, L1)

    # ---- fc2 (bf16 MXU, f32 acc) -> dropout(identity) -> relu ----
    h2 = jnp.dot(h1.astype(jnp.bfloat16), w2_ref[...],
                 preferred_element_type=jnp.float32)
    h2 = jnp.maximum(h2 + bn2_ref[0:1, :], 0.0)                      # +b2, relu

    # ---- BN2 folded into fc3 (fc3 is linear in BN2's output) ----
    #   out = sum((h2*scale2 + shift2) * w3) + b3
    #       = sum(h2 * (scale2*w3), -1) + (sum(shift2*w3) + b3)
    s2, t2 = _bn_scale_shift(h2, bn2_ref[1:2, :], bn2_ref[2:3, :])
    w3_row = fc3_ref[0:1, :]                                         # (1, L2)
    b3 = fc3_ref[1:2, 0:1]                                           # (1, 1)
    scale2p = s2 * w3_row                                            # (1, L2) vector op
    const = jnp.sum(t2 * w3_row, axis=-1, keepdims=True) + b3        # (1, 1)
    out = jnp.sum(h2 * scale2p, axis=-1, keepdims=True) + const      # (N, 1)
    o_ref[0] = out.astype(o_ref.dtype)


def reg_forward(x, params):
    """x: (B, N, 1024) — B independent BN batches of N rows each."""
    w1, bn1, w2, bn2, fc3 = params
    b, n, in_dim = x.shape
    l1 = w1.shape[1]
    l2 = w2.shape[1]

    const_map = lambda i: (0, 0)                      # weights: same block every step

    cost = pl.CostEstimate(
        flops=2 * b * n * (in_dim * l1 + l1 * l2 + l2),
        transcendentals=b * (l1 + l2),                # rsqrt per BN feature
        bytes_accessed=(x.size * 4 + w1.size * 2 + w2.size * 2
                        + bn1.size * 4 + bn2.size * 4 + fc3.size * 4
                        + b * n * 4),
    )

    return pl.pallas_call(
        reg_kernel,
        out_shape=jax.ShapeDtypeStruct((b, n, 1), jnp.float32),
        grid=(b,),
        in_specs=[
            pl.BlockSpec((1, n, in_dim), lambda i: (i, 0, 0)),   # per-batch x tile
            pl.BlockSpec((in_dim, l1), const_map),               # w1 (bf16), resident
            pl.BlockSpec((3, l1), const_map),                    # [b1; gamma1; beta1]
            pl.BlockSpec((l1, l2), const_map),                   # w2 (bf16), resident
            pl.BlockSpec((3, l2), const_map),                    # [b2; gamma2; beta2]
            pl.BlockSpec((2, l2), const_map),                    # [w3_row; b3_row]
        ],
        out_specs=pl.BlockSpec((1, n, 1), lambda i: (i, 0, 0)),
        compiler_params=pltpu.CompilerParams(
            dimension_semantics=("parallel",)),       # shard batches across v7x TCs
        cost_estimate=cost,
    )(x, w1, bn1, w2, bn2, fc3)


def init_params(key, in_dim, l1, l2):
    ks = jax.random.split(key, 8)

    def linear(kw, kb, fan_in, fan_out):
        bound = 1.0 / jnp.sqrt(fan_in)
        w = jax.random.uniform(kw, (fan_in, fan_out), jnp.float32, -bound, bound)
        b = jax.random.uniform(kb, (1, fan_out), jnp.float32, -bound, bound)
        return w, b

    w1, b1 = linear(ks[0], ks[1], in_dim, l1)
    w2, b2 = linear(ks[2], ks[3], l1, l2)
    w3, b3 = linear(ks[4], ks[5], l2, 1)              # w3: (l2, 1), b3: (1, 1)

    # BatchNorm affine params (PyTorch default gamma=1, beta=0; gamma perturbed
    # slightly so the BN math is exercised).
    g1 = 1.0 + 0.1 * jax.random.normal(ks[6], (1, l1), jnp.float32)
    be1 = jnp.zeros((1, l1), jnp.float32)
    g2 = 1.0 + 0.1 * jax.random.normal(ks[7], (1, l2), jnp.float32)
    be2 = jnp.zeros((1, l2), jnp.float32)

    # Pack: matmul weights in bf16, per-feature vectors concatenated, fc3 packed.
    w1_p = w1.astype(jnp.bfloat16)                                   # (in_dim, l1)
    w2_p = w2.astype(jnp.bfloat16)                                   # (l1, l2)
    bn1_p = jnp.concatenate([b1, g1, be1], axis=0)                   # (3, l1)
    bn2_p = jnp.concatenate([b2, g2, be2], axis=0)                   # (3, l2)
    fc3_p = jnp.zeros((2, l2), jnp.float32)
    fc3_p = fc3_p.at[0, :].set(w3[:, 0]).at[1, 0].set(b3[0, 0])      # (2, l2)
    return (w1_p, bn1_p, w2_p, bn2_p, fc3_p)


def _bn_reference(h, gamma, beta):
    mean = jnp.mean(h, axis=0, keepdims=True)
    var = jnp.mean(jnp.square(h - mean), axis=0, keepdims=True)
    return (h - mean) * lax.rsqrt(var + BN_EPS) * gamma + beta


def reg_reference(x, params):
    """Plain-JAX reference (same stored bf16 weights), per-batch BN stats."""
    w1, bn1, w2, bn2, fc3 = params
    b1, g1, be1 = bn1[0:1], bn1[1:2], bn1[2:3]
    b2, g2, be2 = bn2[0:1], bn2[1:2], bn2[2:3]
    w3_row, b3 = fc3[0:1, :], fc3[1, 0]

    def one_batch(xb):
        h1 = jnp.dot(xb.astype(jnp.bfloat16), w1,
                     preferred_element_type=jnp.float32) + b1
        h1 = _bn_reference(jnp.maximum(h1, 0.0), g1, be1)
        h2 = jnp.dot(h1.astype(jnp.bfloat16), w2,
                     preferred_element_type=jnp.float32) + b2
        h2 = _bn_reference(jnp.maximum(h2, 0.0), g2, be2)
        return jnp.sum(h2 * w3_row, axis=-1, keepdims=True) + b3

    return jax.vmap(one_batch)(x)


if __name__ == "__main__":
    # B=2 independent BN batches of N=256 rows (multiple of 256 fills the
    # v6e/v7x MXU and amortizes the resident-weight DMA), input=1024 (fixed by
    # the module), layer_1_dim=256, layer_2_dim=128, dropout_rate=0.0.
    B, N, IN_DIM, L1, L2 = 2, 256, 1024, 256, 128
    key = jax.random.PRNGKey(0)
    kx, kp = jax.random.split(key)
    x = jax.random.normal(kx, (B, N, IN_DIM), jnp.float32)
    params = init_params(kp, IN_DIM, L1, L2)

    out = jax.block_until_ready(reg_forward(x, params))

    ref = reg_reference(x, params)
    assert out.shape == (B, N, 1)
    assert jnp.allclose(out, ref, atol=2e-3, rtol=2e-3), (
        float(jnp.max(jnp.abs(out - ref))))

    # TODO(synk): dropout is deterministic identity (p=0.0) and BatchNorm
    # running statistics are not updated; PyTorch training-mode dropout RNG has
    # no exact Pallas equivalent.
    print("KERNEL_OK")
</pallas_src>

<mosaic_0001>
module attributes {stable_mosaic.version = 11 : i64} {
  func.func @reg_kernel(%arg0: i32, %arg1: memref<1x256x1024xf32, #tpu.memory_space<vmem>>, %arg2: memref<1024x256xbf16, #tpu.memory_space<vmem>>, %arg3: memref<3x256xf32, #tpu.memory_space<vmem>>, %arg4: memref<256x128xbf16, #tpu.memory_space<vmem>>, %arg5: memref<3x128xf32, #tpu.memory_space<vmem>>, %arg6: memref<2x128xf32, #tpu.memory_space<vmem>>, %arg7: memref<1x256x1xf32, #tpu.memory_space<vmem>>) attributes {dimension_semantics = [#tpu.dimension_semantics<parallel>], iteration_bounds = array<i64: 2>, scalar_prefetch = 0 : i64, scratch_operands = 0 : i64, tpu.core_type = #tpu.core_type<tc>, window_params = [{transform_indices = @transform_0, window_bounds = array<i64: 1, 256, 1024>}, {pipeline_mode = #tpu.pipeline_mode<synchronous>, transform_indices = @transform_1, window_bounds = array<i64: 1024, 256>}, {pipeline_mode = #tpu.pipeline_mode<synchronous>, transform_indices = @transform_2, window_bounds = array<i64: 3, 256>}, {pipeline_mode = #tpu.pipeline_mode<synchronous>, transform_indices = @transform_3, window_bounds = array<i64: 256, 128>}, {pipeline_mode = #tpu.pipeline_mode<synchronous>, transform_indices = @transform_4, window_bounds = array<i64: 3, 128>}, {pipeline_mode = #tpu.pipeline_mode<synchronous>, transform_indices = @transform_5, window_bounds = array<i64: 2, 128>}, {transform_indices = @transform_6, window_bounds = array<i64: 1, 256, 1>}]} {
    %c0 = arith.constant 0 : index
    %c0_0 = arith.constant 0 : index
    %c0_1 = arith.constant 0 : index
    %0 = vector.load %arg1[%c0, %c0_0, %c0_1] : memref<1x256x1024xf32, #tpu.memory_space<vmem>>, vector<1x256x1024xf32>
    %1 = vector.shape_cast %0 : vector<1x256x1024xf32> to vector<256x1024xf32>
    %2 = arith.truncf %1 : vector<256x1024xf32> to vector<256x1024xbf16>
    %c0_2 = arith.constant 0 : index
    %c0_3 = arith.constant 0 : index
    %3 = vector.load %arg2[%c0_2, %c0_3] : memref<1024x256xbf16, #tpu.memory_space<vmem>>, vector<1024x256xbf16>
    %cst = arith.constant dense<0.000000e+00> : vector<256x256xf32>
    %4 = tpu.matmul %2, %3, %cst {dimension_numbers = #tpu.dot_dimension_numbers<[1], [0], [0], [1], [0, 0, 1, 1], [], []>} : vector<256x1024xbf16>, vector<1024x256xbf16>, vector<256x256xf32> -> vector<256x256xf32>
    %c0_4 = arith.constant 0 : index
    %c0_5 = arith.constant 0 : index
    %5 = vector.load %arg3[%c0_4, %c0_5] : memref<3x256xf32, #tpu.memory_space<vmem>>, vector<1x256xf32>
    %6 = vector.broadcast %5 : vector<1x256xf32> to vector<256x256xf32>
    %7 = arith.addf %4, %6 : vector<256x256xf32>
    %cst_6 = arith.constant 0.000000e+00 : f32
    %8 = vector.broadcast %cst_6 : f32 to vector<256x256xf32>
    %9 = arith.maximumf %7, %8 : vector<256x256xf32>
    %c1 = arith.constant 1 : index
    %c0_7 = arith.constant 0 : index
    %10 = vector.load %arg3[%c1, %c0_7] : memref<3x256xf32, #tpu.memory_space<vmem>>, vector<1x256xf32>
    %c2 = arith.constant 2 : index
    %c0_8 = arith.constant 0 : index
    %11 = vector.load %arg3[%c2, %c0_8] : memref<3x256xf32, #tpu.memory_space<vmem>>, vector<1x256xf32>
    %cst_9 = arith.constant dense<0.000000e+00> : vector<256xf32>
    %12 = vector.multi_reduction <add>, %9, %cst_9 [0] : vector<256x256xf32> to vector<256xf32>
    %13 = vector.shape_cast %12 : vector<256xf32> to vector<1x256xf32>
    %14 = arith.mulf %9, %9 : vector<256x256xf32>
    %cst_10 = arith.constant dense<0.000000e+00> : vector<256xf32>
    %15 = vector.multi_reduction <add>, %14, %cst_10 [0] : vector<256x256xf32> to vector<256xf32>
    %16 = vector.shape_cast %15 : vector<256xf32> to vector<1x256xf32>
    %cst_11 = arith.constant 3.906250e-03 : f32
    %17 = vector.broadcast %cst_11 : f32 to vector<1x256xf32>
    %18 = arith.mulf %13, %17 : vector<1x256xf32>
    %cst_12 = arith.constant 3.906250e-03 : f32
    %19 = vector.broadcast %cst_12 : f32 to vector<1x256xf32>
    %20 = arith.mulf %16, %19 : vector<1x256xf32>
    %21 = arith.mulf %18, %18 : vector<1x256xf32>
    %22 = arith.subf %20, %21 : vector<1x256xf32>
    %cst_13 = arith.constant 0.000000e+00 : f32
    %23 = vector.broadcast %cst_13 : f32 to vector<1x256xf32>
    %24 = arith.maximumf %22, %23 : vector<1x256xf32>
    %cst_14 = arith.constant 9.99999974E-6 : f32
    %25 = vector.broadcast %cst_14 : f32 to vector<1x256xf32>
    %26 = arith.addf %24, %25 : vector<1x256xf32>
    %27 = math.rsqrt %26 : vector<1x256xf32>
    %28 = arith.mulf %10, %27 : vector<1x256xf32>
    %29 = arith.mulf %18, %28 : vector<1x256xf32>
    %30 = arith.subf %11, %29 : vector<1x256xf32>
    %31 = vector.broadcast %28 : vector<1x256xf32> to vector<256x256xf32>
    %32 = arith.mulf %9, %31 : vector<256x256xf32>
    %33 = vector.broadcast %30 : vector<1x256xf32> to vector<256x256xf32>
    %34 = arith.addf %32, %33 : vector<256x256xf32>
    %35 = arith.truncf %34 : vector<256x256xf32> to vector<256x256xbf16>
    %c0_15 = arith.constant 0 : index
    %c0_16 = arith.constant 0 : index
    %36 = vector.load %arg4[%c0_15, %c0_16] : memref<256x128xbf16, #tpu.memory_space<vmem>>, vector<256x128xbf16>
    %cst_17 = arith.constant dense<0.000000e+00> : vector<256x128xf32>
    %37 = tpu.matmul %35, %36, %cst_17 {dimension_numbers = #tpu.dot_dimension_numbers<[1], [0], [0], [1], [0, 0, 1, 1], [], []>} : vector<256x256xbf16>, vector<256x128xbf16>, vector<256x128xf32> -> vector<256x128xf32>
    %c0_18 = arith.constant 0 : index
    %c0_19 = arith.constant 0 : index
    %38 = vector.load %arg5[%c0_18, %c0_19] : memref<3x128xf32, #tpu.memory_space<vmem>>, vector<1x128xf32>
    %39 = vector.broadcast %38 : vector<1x128xf32> to vector<256x128xf32>
    %40 = arith.addf %37, %39 : vector<256x128xf32>
    %cst_20 = arith.constant 0.000000e+00 : f32
    %41 = vector.broadcast %cst_20 : f32 to vector<256x128xf32>
    %42 = arith.maximumf %40, %41 : vector<256x128xf32>
    %c1_21 = arith.constant 1 : index
    %c0_22 = arith.constant 0 : index
    %43 = vector.load %arg5[%c1_21, %c0_22] : memref<3x128xf32, #tpu.memory_space<vmem>>, vector<1x128xf32>
    %c2_23 = arith.constant 2 : index
    %c0_24 = arith.constant 0 : index
    %44 = vector.load %arg5[%c2_23, %c0_24] : memref<3x128xf32, #tpu.memory_space<vmem>>, vector<1x128xf32>
    %cst_25 = arith.constant dense<0.000000e+00> : vector<128xf32>
    %45 = vector.multi_reduction <add>, %42, %cst_25 [0] : vector<256x128xf32> to vector<128xf32>
    %46 = vector.shape_cast %45 : vector<128xf32> to vector<1x128xf32>
    %47 = arith.mulf %42, %42 : vector<256x128xf32>
    %cst_26 = arith.constant dense<0.000000e+00> : vector<128xf32>
    %48 = vector.multi_reduction <add>, %47, %cst_26 [0] : vector<256x128xf32> to vector<128xf32>
    %49 = vector.shape_cast %48 : vector<128xf32> to vector<1x128xf32>
    %cst_27 = arith.constant 3.906250e-03 : f32
    %50 = vector.broadcast %cst_27 : f32 to vector<1x128xf32>
    %51 = arith.mulf %46, %50 : vector<1x128xf32>
    %cst_28 = arith.constant 3.906250e-03 : f32
    %52 = vector.broadcast %cst_28 : f32 to vector<1x128xf32>
    %53 = arith.mulf %49, %52 : vector<1x128xf32>
    %54 = arith.mulf %51, %51 : vector<1x128xf32>
    %55 = arith.subf %53, %54 : vector<1x128xf32>
    %cst_29 = arith.constant 0.000000e+00 : f32
    %56 = vector.broadcast %cst_29 : f32 to vector<1x128xf32>
    %57 = arith.maximumf %55, %56 : vector<1x128xf32>
    %cst_30 = arith.constant 9.99999974E-6 : f32
    %58 = vector.broadcast %cst_30 : f32 to vector<1x128xf32>
    %59 = arith.addf %57, %58 : vector<1x128xf32>
    %60 = math.rsqrt %59 : vector<1x128xf32>
    %61 = arith.mulf %43, %60 : vector<1x128xf32>
    %62 = arith.mulf %51, %61 : vector<1x128xf32>
    %63 = arith.subf %44, %62 : vector<1x128xf32>
    %c0_31 = arith.constant 0 : index
    %c0_32 = arith.constant 0 : index
    %64 = vector.load %arg6[%c0_31, %c0_32] : memref<2x128xf32, #tpu.memory_space<vmem>>, vector<1x128xf32>
    %c1_33 = arith.constant 1 : index
    %c0_34 = arith.constant 0 : index
    %65 = vector.load %arg6[%c1_33, %c0_34] : memref<2x128xf32, #tpu.memory_space<vmem>>, vector<1x1xf32>
    %66 = arith.mulf %61, %64 : vector<1x128xf32>
    %67 = arith.mulf %63, %64 : vector<1x128xf32>
    %cst_35 = arith.constant dense<0.000000e+00> : vector<1xf32>
    %68 = vector.multi_reduction <add>, %67, %cst_35 [1] : vector<1x128xf32> to vector<1xf32>
    %69 = vector.shape_cast %68 : vector<1xf32> to vector<1x1xf32>
    %70 = arith.addf %69, %65 : vector<1x1xf32>
    %71 = vector.broadcast %66 : vector<1x128xf32> to vector<256x128xf32>
    %72 = arith.mulf %42, %71 : vector<256x128xf32>
    %cst_36 = arith.constant dense<0.000000e+00> : vector<256xf32>
    %73 = vector.multi_reduction <add>, %72, %cst_36 [1] : vector<256x128xf32> to vector<256xf32>
    %74 = vector.shape_cast %73 : vector<256xf32> to vector<256x1xf32>
    %75 = vector.broadcast %70 : vector<1x1xf32> to vector<256x1xf32>
    %76 = arith.addf %74, %75 : vector<256x1xf32>
    %c0_37 = arith.constant 0 : index
    %c0_38 = arith.constant 0 : index
    %c0_39 = arith.constant 0 : index
    %77 = vector.load %arg7[%c0_37, %c0_38, %c0_39] : memref<1x256x1xf32, #tpu.memory_space<vmem>>, vector<1x256x1xf32>
    %78 = vector.shape_cast %77 : vector<1x256x1xf32> to vector<256x1xf32>
    %79 = vector.shape_cast %76 : vector<256x1xf32> to vector<1x256x1xf32>
    tpu.vector_store %arg7[%c0_37, %c0_38, %c0_39], %79 {strides = array<i32>} : memref<1x256x1xf32, #tpu.memory_space<vmem>>, vector<1x256x1xf32>,
    return
  }
  func.func @transform_0(%arg0: i32) -> (i32, i32, i32) {
    %c0_i32 = arith.constant 0 : i32
    %c0_i32_0 = arith.constant 0 : i32
    %c0_i32_1 = arith.constant 0 : i32
    return %arg0, %c0_i32, %c0_i32_0 : i32, i32, i32
  }
  func.func @transform_1(%arg0: i32) -> (i32, i32) {
    %c0_i32 = arith.constant 0 : i32
    %c0_i32_0 = arith.constant 0 : i32
    %c0_i32_1 = arith.constant 0 : i32
    return %c0_i32, %c0_i32_0 : i32, i32
  }
  func.func @transform_2(%arg0: i32) -> (i32, i32) {
    %c0_i32 = arith.constant 0 : i32
    %c0_i32_0 = arith.constant 0 : i32
    %c0_i32_1 = arith.constant 0 : i32
    return %c0_i32, %c0_i32_0 : i32, i32
  }
  func.func @transform_3(%arg0: i32) -> (i32, i32) {
    %c0_i32 = arith.constant 0 : i32
    %c0_i32_0 = arith.constant 0 : i32
    %c0_i32_1 = arith.constant 0 : i32
    return %c0_i32, %c0_i32_0 : i32, i32
  }
  func.func @transform_4(%arg0: i32) -> (i32, i32) {
    %c0_i32 = arith.constant 0 : i32
    %c0_i32_0 = arith.constant 0 : i32
    %c0_i32_1 = arith.constant 0 : i32
    return %c0_i32, %c0_i32_0 : i32, i32
  }
  func.func @transform_5(%arg0: i32) -> (i32, i32) {
    %c0_i32 = arith.constant 0 : i32
    %c0_i32_0 = arith.constant 0 : i32
    %c0_i32_1 = arith.constant 0 : i32
    return %c0_i32, %c0_i32_0 : i32, i32
  }
  func.func @transform_6(%arg0: i32) -> (i32, i32, i32) {
    %c0_i32 = arith.constant 0 : i32
    %c0_i32_0 = arith.constant 0 : i32
    %c0_i32_1 = arith.constant 0 : i32
    return %arg0, %c0_i32, %c0_i32_0 : i32, i32, i32
  }
}

</mosaic_0001>

<llo_original>
// kernel: tpu_custom_call.1
$region0: #{tpu_custom_call.1}
  #allocation0 [shape = 'u32[]', space=smem, size = 0x4, offset = 0x4, fixed_abs, tag = 'smem constant byte address 0x4 - core index']
  #allocation1 [shape = 'u32[144,128]{1,0:T(1,128)}', space=vmem, size = 0x12000, scoped, tag = 'internal scratch']
  %s0 = inlined_call_operand.hbm [shape: f32[2,256,1024], index: 0, kind: input, shape index: {}]
  %s1 = inlined_call_operand.hbm [shape: bf16[1024,256], index: 1, kind: input, shape index: {}]
  %s2 = inlined_call_operand.hbm [shape: f32[3,256], index: 2, kind: input, shape index: {}]
  %s3 = inlined_call_operand.hbm [shape: bf16[256,128], index: 3, kind: input, shape index: {}]
  %s4 = inlined_call_operand.hbm [shape: f32[3,128], index: 4, kind: input, shape index: {}]
  %s5 = inlined_call_operand.hbm [shape: f32[2,128], index: 5, kind: input, shape index: {}]
  %s6 = inlined_call_operand.vmem [shape: f32[2,256,1], index: 6, kind: output, shape index: {}]
  %s7 = sld [smem:[#allocation0]]
  $region81: #{tpu_custom_call.1} parent=0
    _
  %s9 = ssub.s32 1, %s7
  %s10 = scalar_select 0, %s9, %s7
  $region1: #{tpu_custom_call.1} parent=0
    #allocation2 [shape = 'u8[2097152]{0}', space=vmem, size = 0x200000, scoped, tag = 'input window, operand 0']
    #allocation3 [shape = 's32[2]{0}', space=sflag, size = 0x8, scoped, tag = 'scoped memory for tpu_custom_call.1']
    #allocation4 [shape = 'u8[524288]{0}', space=vmem, size = 0x80000, scoped, tag = 'input window, operand 1, single buffered']
    #allocation5 [shape = 's32[1]{0}', space=sflag, size = 0x4, scoped, tag = 'scoped memory for tpu_custom_call.1']
    #allocation6 [shape = 'u8[4096]{0}', space=vmem, size = 0x1000, scoped, tag = 'input window, operand 2, single buffered']
    #allocation7 [shape = 'u8[65536]{0}', space=vmem, size = 0x10000, scoped, tag = 'input window, operand 3, single buffered']
    #allocation8 [shape = 's32[1]{0}', space=sflag, size = 0x4, scoped, tag = 'scoped memory for tpu_custom_call.1']
    #allocation9 [shape = 'u8[2048]{0}', space=vmem, size = 0x800, scoped, tag = 'input window, operand 4, single buffered']
    #allocation10 [shape = 'u8[1024]{0}', space=vmem, size = 0x400, scoped, tag = 'input window, operand 5, single buffered']
    #allocation11 [shape = 's32[1]{0}', space=sflag, size = 0x4, scoped, tag = 'scoped memory for tpu_custom_call.1']
    %11 = vsyncpa [#allocation3], 0
    %s12 = scalar_lea.sflag [#allocation3], 1
    %13 = vsyncpa %s12, 0
    %14 = vsyncpa [#allocation5], 0
    %15 = vsyncpa [#allocation8], 0
    %16 = vsyncpa [#allocation11], 0
    loop: start=0, step=1, limit=4
    $region2: #{tpu_custom_call.1} parent=1 // loop_pre_header
      _
    $region3: #{tpu_custom_call.1} parent=1 // loop_header
      %s18 = sphi 0, %s22
      %p19 = scmp.ge.s32.totalorder %s18, 4
      %s28 = sphi 0, %s30
      %s31 = sphi 0, %s28
      %s32 = sphi 0, %s31
      %s48 = sphi 0, %s32
      %s52 = sphi 0, %s52
      %s54 = sphi 0, %s52
      %s55 = sphi 0, %s54
      %s69 = sphi 0, %s55
      %s73 = sphi 0, %s73
      %s75 = sphi 0, %s73
      %s76 = sphi 0, %s75
      %s90 = sphi 0, %s76
      %s94 = sphi 0, %s94
      %s96 = sphi 0, %s94
      %s97 = sphi 0, %s96
      %s111 = sphi 0, %s97
      %s115 = sphi 0, %s115
      %s117 = sphi 0, %s115
      %s118 = sphi 0, %s117
      %s132 = sphi 0, %s118
      %s136 = sphi 0, %s136
      %s138 = sphi 0, %s136
      %s139 = sphi 0, %s138
      %s153 = sphi 0, %s139
      %s159 = sphi 0, %s161
      %s162 = sphi 0, %s159
      %s163 = sphi 0, %s162
      %s179 = sphi 0, %s163
    $region4: #{tpu_custom_call.1} parent=1 // loop_header_branch
      %21 = sbr.rel (%p19) target = $region8
    $region5: #{tpu_custom_call.1} parent=1 // loop_body
      %s23 = ssub.s32 %s18, 1
      %s24 = ssub.s32 %s18, 2
      %s25 = sadd.s32 %s18, 1
      %s26 = ssub.s32 %s18, %s25
      %p27 = scmp.eq.s32.totalorder %s26, 0
      %s29 = sadd.s32 %s28, 1
      %s30 = scalar_select %p27, %s28, %s29
      %p33 = pneg %p27
      %p34 = scmp.eq.s32.totalorder %s18, 1
      %p35 = por %p33, %p34
      %p36 = scmp.ne.s32.totalorder %s28, %s31
      %p37 = scmp.eq.s32.totalorder %s18, 0
      %p38 = por %p36, %p37
      %p39 = scmp.ne.s32.totalorder %s28, %s31
      %p40 = scmp.eq.s32.totalorder %s23, 1
      %p41 = por %p39, %p40
      %p42 = scmp.ne.s32.totalorder %s31, %s32
      %p43 = scmp.eq.s32.totalorder %s23, 0
      %p44 = por %p42, %p43
      %p45 = scmp.ne.s32.totalorder %s31, %s32
      %p46 = scmp.eq.s32.totalorder %s24, 1
      %p47 = por %p45, %p46
      %p49 = scmp.ne.s32.totalorder %s32, %s48
      %p50 = scmp.eq.s32.totalorder %s24, 0
      %p51 = por %p49, %p50
      %s53 = sadd.s32 %s52, 1
      %p56 = scmp.eq.s32.totalorder %s18, 1
      %p57 = scmp.ne.s32.totalorder %s52, %s54
      %p58 = scmp.eq.s32.totalorder %s18, 0
      %p59 = por %p57, %p58
      %p60 = scmp.ne.s32.totalorder %s52, %s54
      %p61 = scmp.eq.s32.totalorder %s23, 1
      %p62 = por %p60, %p61
      %p63 = scmp.ne.s32.totalorder %s54, %s55
      %p64 = scmp.eq.s32.totalorder %s23, 0
      %p65 = por %p63, %p64
      %p66 = scmp.ne.s32.totalorder %s54, %s55
      %p67 = scmp.eq.s32.totalorder %s24, 1
      %p68 = por %p66, %p67
      %p70 = scmp.ne.s32.totalorder %s55, %s69
      %p71 = scmp.eq.s32.totalorder %s24, 0
      %p72 = por %p70, %p71
      %s74 = sadd.s32 %s73, 1
      %p77 = scmp.eq.s32.totalorder %s18, 1
      %p78 = scmp.ne.s32.totalorder %s73, %s75
      %p79 = scmp.eq.s32.totalorder %s18, 0
      %p80 = por %p78, %p79
      %p81 = scmp.ne.s32.totalorder %s73, %s75
      %p82 = scmp.eq.s32.totalorder %s23, 1
      %p83 = por %p81, %p82
      %p84 = scmp.ne.s32.totalorder %s75, %s76
      %p85 = scmp.eq.s32.totalorder %s23, 0
      %p86 = por %p84, %p85
      %p87 = scmp.ne.s32.totalorder %s75, %s76
      %p88 = scmp.eq.s32.totalorder %s24, 1
      %p89 = por %p87, %p88
      %p91 = scmp.ne.s32.totalorder %s76, %s90
      %p92 = scmp.eq.s32.totalorder %s24, 0
      %p93 = por %p91, %p92
      %s95 = sadd.s32 %s94, 1
      %p98 = scmp.eq.s32.totalorder %s18, 1
      %p99 = scmp.ne.s32.totalorder %s94, %s96
      %p100 = scmp.eq.s32.totalorder %s18, 0
      %p101 = por %p99, %p100
      %p102 = scmp.ne.s32.totalorder %s94, %s96
      %p103 = scmp.eq.s32.totalorder %s23, 1
      %p104 = por %p102, %p103
      %p105 = scmp.ne.s32.totalorder %s96, %s97
      %p106 = scmp.eq.s32.totalorder %s23, 0
      %p107 = por %p105, %p106
      %p108 = scmp.ne.s32.totalorder %s96, %s97
      %p109 = scmp.eq.s32.totalorder %s24, 1
      %p110 = por %p108, %p109
      %p112 = scmp.ne.s32.totalorder %s97, %s111
      %p113 = scmp.eq.s32.totalorder %s24, 0
      %p114 = por %p112, %p113
      %s116 = sadd.s32 %s115, 1
      %p119 = scmp.eq.s32.totalorder %s18, 1
      %p120 = scmp.ne.s32.totalorder %s115, %s117
      %p121 = scmp.eq.s32.totalorder %s18, 0
      %p122 = por %p120, %p121
      %p123 = scmp.ne.s32.totalorder %s115, %s117
      %p124 = scmp.eq.s32.totalorder %s23, 1
      %p125 = por %p123, %p124
      %p126 = scmp.ne.s32.totalorder %s117, %s118
      %p127 = scmp.eq.s32.totalorder %s23, 0
      %p128 = por %p126, %p127
      %p129 = scmp.ne.s32.totalorder %s117, %s118
      %p130 = scmp.eq.s32.totalorder %s24, 1
      %p131 = por %p129, %p130
      %p133 = scmp.ne.s32.totalorder %s118, %s132
      %p134 = scmp.eq.s32.totalorder %s24, 0
      %p135 = por %p133, %p134
      %s137 = sadd.s32 %s136, 1
      %p140 = scmp.eq.s32.totalorder %s18, 1
      %p141 = scmp.ne.s32.totalorder %s136, %s138
      %p142 = scmp.eq.s32.totalorder %s18, 0
      %p143 = por %p141, %p142
      %p144 = scmp.ne.s32.totalorder %s136, %s138
      %p145 = scmp.eq.s32.totalorder %s23, 1
      %p146 = por %p144, %p145
      %p147 = scmp.ne.s32.totalorder %s138, %s139
      %p148 = scmp.eq.s32.totalorder %s23, 0
      %p149 = por %p147, %p148
      %p150 = scmp.ne.s32.totalorder %s138, %s139
      %p151 = scmp.eq.s32.totalorder %s24, 1
      %p152 = por %p150, %p151
      %p154 = scmp.ne.s32.totalorder %s139, %s153
      %p155 = scmp.eq.s32.totalorder %s24, 0
      %p156 = por %p154, %p155
      %s157 = ssub.s32 %s18, %s25
      %p158 = scmp.eq.s32.totalorder %s157, 0
      %s160 = sadd.s32 %s159, 1
      %s161 = scalar_select %p158, %s159, %s160
      %p164 = pneg %p158
      %p165 = scmp.eq.s32.totalorder %s18, 1
      %p166 = por %p164, %p165
      %p167 = scmp.ne.s32.totalorder %s159, %s162
      %p168 = scmp.eq.s32.totalorder %s18, 0
      %p169 = por %p167, %p168
      %p170 = scmp.ne.s32.totalorder %s159, %s162
      %p171 = scmp.eq.s32.totalorder %s23, 1
      %p172 = por %p170, %p171
      %p173 = scmp.ne.s32.totalorder %s162, %s163
      %p174 = scmp.eq.s32.totalorder %s23, 0
      %p175 = por %p173, %p174
      %p176 = scmp.ne.s32.totalorder %s162, %s163
      %p177 = scmp.eq.s32.totalorder %s24, 1
      %p178 = por %p176, %p177
      %p180 = scmp.ne.s32.totalorder %s163, %s179
      %p181 = scmp.eq.s32.totalorder %s24, 0
      %p182 = por %p180, %p181
      %p183 = scmp.le.s32.totalorder 1, %s18
      %p184 = scmp.lt.s32.totalorder %s18, 3
      %p185 = pnand %p183, %p184
      %p186 = pneg %p185
      // Predicated region
      $region9: #{tpu_custom_call.1} parent=5 // pred_check
        _
      $region10: #{tpu_custom_call.1} parent=5 // pred_check_branch
        %188 = sbr.rel (%p185) target = $region12
      $region11: #{tpu_custom_call.1} parent=5 // pred_region
        %s189 = ssub.s32 %s18, 1
        // Predicated region
        $region13: #{tpu_custom_call.1} parent=11 // pred_check
          %p190 = pneg %p65
        $region14: #{tpu_custom_call.1} parent=11 // pred_check_branch
          %192 = sbr.rel (%p190) target = $region16
        $region15: #{tpu_custom_call.1} parent=11 // pred_region
          %s194 = ssub.s32 16384, 16384
          %195 = vsyncadd [#allocation5], %s194
          %s196 = sshll.u32 [#allocation4], 4
          %s197 = int_to_ptr.vmem [resolvable:$true] %s196
          %202 = dma.hbm_to_vmem [thread:$0]  %s1, 16384, %s197, [#allocation5], 128, 128, 8
        $region16: #{tpu_custom_call.1} parent=11 // pred_fallthru
          _
        // Predicated region
        $region17: #{tpu_custom_call.1} parent=11 // pred_check
          %p203 = pneg %p86
        $region18: #{tpu_custom_call.1} parent=11 // pred_check_branch
          %205 = sbr.rel (%p203) target = $region20
        $region19: #{tpu_custom_call.1} parent=11 // pred_region
          %s207 = ssub.s32 128, 128
          %208 = vsyncadd [#allocation5], %s207
          %s210 = sshll.u32 [#allocation6], 4
          %s211 = int_to_ptr.vmem [resolvable:$true] %s210
          %213 = dma.hbm_to_vmem [thread:$0]  %s2, 128, %s211, [#allocation5]
        $region20: #{tpu_custom_call.1} parent=11 // pred_fallthru
          _
        // Predicated region
        $region21: #{tpu_custom_call.1} parent=11 // pred_check
          %p214 = pneg %p107
        $region22: #{tpu_custom_call.1} parent=11 // pred_check_branch
          %216 = sbr.rel (%p214) target = $region24
        $region23: #{tpu_custom_call.1} parent=11 // pred_region
          %s218 = ssub.s32 2048, 2048
          %219 = vsyncadd [#allocation8], %s218
          %s220 = sshll.u32 [#allocation7], 4
          %s221 = int_to_ptr.vmem [resolvable:$true] %s220
          %226 = dma.hbm_to_vmem [thread:$0]  %s3, 2048, %s221, [#allocation8], 64, 64, 4
        $region24: #{tpu_custom_call.1} parent=11 // pred_fallthru
          _
        // Predicated region
        $region25: #{tpu_custom_call.1} parent=11 // pred_check
          %p227 = pneg %p128
        $region26: #{tpu_custom_call.1} parent=11 // pred_check_branch
          %229 = sbr.rel (%p227) target = $region28
        $region27: #{tpu_custom_call.1} parent=11 // pred_region
          %s231 = ssub.s32 64, 64
          %232 = vsyncadd [#allocation8], %s231
          %s234 = sshll.u32 [#allocation9], 4
          %s235 = int_to_ptr.vmem [resolvable:$true] %s234
          %237 = dma.hbm_to_vmem [thread:$0]  %s4, 64, %s235, [#allocation8]
        $region28: #{tpu_custom_call.1} parent=11 // pred_fallthru
          _
        // Predicated region
        $region29: #{tpu_custom_call.1} parent=11 // pred_check
          %p238 = pneg %p149
        $region30: #{tpu_custom_call.1} parent=11 // pred_check_branch
          %240 = sbr.rel (%p238) target = $region32
        $region31: #{tpu_custom_call.1} parent=11 // pred_region
          %s242 = ssub.s32 32, 32
          %243 = vsyncadd [#allocation11], %s242
          %s245 = sshll.u32 [#allocation10], 4
          %s246 = int_to_ptr.vmem [resolvable:$true] %s245
          %248 = dma.hbm_to_vmem [thread:$0]  %s5, 32, %s246, [#allocation11]
        $region32: #{tpu_custom_call.1} parent=11 // pred_fallthru
          _
      $region12: #{tpu_custom_call.1} parent=5 // pred_fallthru
        _
      %p249 = scmp.lt.s32.totalorder %s18, 2
      // Predicated region
      $region33: #{tpu_custom_call.1} parent=5 // pred_check
        %p250 = pneg %p249
      $region34: #{tpu_custom_call.1} parent=5 // pred_check_branch
        %252 = sbr.rel (%p250) target = $region36
      $region35: #{tpu_custom_call.1} parent=5 // pred_region
        // Predicated region
        $region37: #{tpu_custom_call.1} parent=35 // pred_check
          %p253 = pneg %p38
        $region38: #{tpu_custom_call.1} parent=35 // pred_check_branch
          %255 = sbr.rel (%p253) target = $region40
        $region39: #{tpu_custom_call.1} parent=35 // pred_region
          %s256 = sand.u32 %s28, 1
          %s257 = scalar_lea.sflag [#allocation3], %s256
          %s258 = sand.u32 %s28, 1
          %s259 = smul.addr %s258, 2048
          %s260 = scalar_lea.vmem [#allocation2], %s259
          %s262 = ssub.s32 32768, 32768
          %263 = vsyncadd %s257, %s262
          %s264 = smul.addr %s18, 256
          %s265 = smul.addr %s264, 128
          %s266 = scalar_lea.hbm %s0, %s265
          %s267 = sshll.u32 %s260, 4
          %s268 = int_to_ptr.vmem [resolvable:$true] %s267
          %273 = dma.hbm_to_vmem [thread:$0]  %s266, 32768, %s268, %s257, 1024, 1024, 64
        $region40: #{tpu_custom_call.1} parent=35 // pred_fallthru
          _
      $region36: #{tpu_custom_call.1} parent=5 // pred_fallthru
        _
      %p274 = scmp.le.s32.totalorder 1, %s18
      %p275 = scmp.lt.s32.totalorder %s18, 3
      %p276 = pnand %p274, %p275
      %p277 = pneg %p276
      // Predicated region
      $region41: #{tpu_custom_call.1} parent=5 // pred_check
        _
      $region42: #{tpu_custom_call.1} parent=5 // pred_check_branch
        %279 = sbr.rel (%p276) target = $region44
      $region43: #{tpu_custom_call.1} parent=5 // pred_region
        %s280 = ssub.s32 %s18, 1
        %s281 = sand.u32 %s31, 1
        %s282 = scalar_lea.sflag [#allocation3], %s281
        %s283 = sand.u32 %s31, 1
        %s284 = smul.addr %s283, 2048
        %s285 = scalar_lea.vmem [#allocation2], %s284
        // Predicated region
        $region45: #{tpu_custom_call.1} parent=43 // pred_check
          %p286 = pneg %p44
        $region46: #{tpu_custom_call.1} parent=43 // pred_check_branch
          %288 = sbr.rel (%p286) target = $region48
        $region47: #{tpu_custom_call.1} parent=43 // pred_region
          %289 = dma.done %s282, 32768
        $region48: #{tpu_custom_call.1} parent=43 // pred_fallthru
          _
        // Predicated region
        $region49: #{tpu_custom_call.1} parent=43 // pred_check
          %p290 = pneg %p65
        $region50: #{tpu_custom_call.1} parent=43 // pred_check_branch
          %292 = sbr.rel (%p290) target = $region52
        $region51: #{tpu_custom_call.1} parent=43 // pred_region
          %293 = dma.done [#allocation5], 16384
        $region52: #{tpu_custom_call.1} parent=43 // pred_fallthru
          _
        // Predicated region
        $region53: #{tpu_custom_call.1} parent=43 // pred_check
          %p294 = pneg %p86
        $region54: #{tpu_custom_call.1} parent=43 // pred_check_branch
          %296 = sbr.rel (%p294) target = $region56
        $region55: #{tpu_custom_call.1} parent=43 // pred_region
          %297 = dma.done [#allocation5], 128
        $region56: #{tpu_custom_call.1} parent=43 // pred_fallthru
          _
        // Predicated region
        $region57: #{tpu_custom_call.1} parent=43 // pred_check
          %p298 = pneg %p107
        $region58: #{tpu_custom_call.1} parent=43 // pred_check_branch
          %300 = sbr.rel (%p298) target = $region60
        $region59: #{tpu_custom_call.1} parent=43 // pred_region
          %301 = dma.done [#allocation8], 2048
        $region60: #{tpu_custom_call.1} parent=43 // pred_fallthru
          _
        // Predicated region
        $region61: #{tpu_custom_call.1} parent=43 // pred_check
          %p302 = pneg %p128
        $region62: #{tpu_custom_call.1} parent=43 // pred_check_branch
          %304 = sbr.rel (%p302) target = $region64
        $region63: #{tpu_custom_call.1} parent=43 // pred_region
          %305 = dma.done [#allocation8], 64
        $region64: #{tpu_custom_call.1} parent=43 // pred_fallthru
          _
        // Predicated region
        $region65: #{tpu_custom_call.1} parent=43 // pred_check
          %p306 = pneg %p149
        $region66: #{tpu_custom_call.1} parent=43 // pred_check_branch
          %308 = sbr.rel (%p306) target = $region68
        $region67: #{tpu_custom_call.1} parent=43 // pred_region
          %309 = dma.done [#allocation11], 32
        $region68: #{tpu_custom_call.1} parent=43 // pred_fallthru
          _
        %s310 = sand.u32 %s31, 1
        %s311 = scalar_lea.sflag [#allocation3], %s310
        %s312 = sand.u32 %s31, 1
        %s313 = smul.addr %s312, 2048
        %s314 = scalar_lea.vmem [#allocation2], %s313
        %p315 = pneg %p44
        %p316 = pneg %p41
        %p317 = pneg %p65
        %p318 = pneg %p62
        %p319 = pneg %p86
        %p320 = pneg %p83
        %p321 = pneg %p107
        %p322 = pneg %p104
        %p323 = pneg %p128
        %p324 = pneg %p125
        %p325 = pneg %p149
        %p326 = pneg %p146
        %p327 = pneg %p175
        %p328 = pneg %p172
        %p329 = scmp.lt.s32.totalorder %s23, 1
        %s330 = scalar_select %p329, %s23, 1
        %s331 = smul.addr %s330, 32
        %s332 = smul.addr %s331, 8
        %s333 = scalar_lea.vmem %s6, %s332
        %p334 = scmp.lt.s32.totalorder %s23, 1
        %s335 = scalar_select %p334, %s23, 1
        %s336 = smul.addr %s335, 32
        %s337 = smul.addr %s336, 8
        %s338 = scalar_lea.vmem %s6, %s337
        %v340 = vld [vmem:[%s285] sm:$0xff]
        %v341 = vld [vmem:[%s285 + $0x8] sm:$0xff]
        %v342 = vld [vmem:[%s285 + $0x10] sm:$0xff]
        %v343 = vld [vmem:[%s285 + $0x18] sm:$0xff]
        %v344 = vld [vmem:[%s285 + $0x20] sm:$0xff]
        %v345 = vld [vmem:[%s285 + $0x28] sm:$0xff]
        %v346 = vld [vmem:[%s285 + $0x30] sm:$0xff]
        %v347 = vld [vmem:[%s285 + $0x38] sm:$0xff]
        %v348 = vld [vmem:[%s285 + $0x40] sm:$0xff]
        %v349 = vld [vmem:[%s285 + $0x48] sm:$0xff]
        %v350 = vld [vmem:[%s285 + $0x50] sm:$0xff]
        %v351 = vld [vmem:[%s285 + $0x58] sm:$0xff]
        %v352 = vld [vmem:[%s285 + $0x60] sm:$0xff]
        %v353 = vld [vmem:[%s285 + $0x68] sm:$0xff]
        %v354 = vld [vmem:[%s285 + $0x70] sm:$0xff]
        %v355 = vld [vmem:[%s285 + $0x78] sm:$0xff]
        %v356 = vld [vmem:[%s285 + $0x80] sm:$0xff]
        %v357 = vld [vmem:[%s285 + $0x88] sm:$0xff]
        %v358 = vld [vmem:[%s285 + $0x90] sm:$0xff]
        %v359 = vld [vmem:[%s285 + $0x98] sm:$0xff]
        %v360 = vld [vmem:[%s285 + $0xa0] sm:$0xff]
        %v361 = vld [vmem:[%s285 + $0xa8] sm:$0xff]
        %v362 = vld [vmem:[%s285 + $0xb0] sm:$0xff]
        %v363 = vld [vmem:[%s285 + $0xb8] sm:$0xff]
        %v364 = vld [vmem:[%s285 + $0xc0] sm:$0xff]
        %v365 = vld [vmem:[%s285 + $0xc8] sm:$0xff]
        %v366 = vld [vmem:[%s285 + $0xd0] sm:$0xff]
        %v367 = vld [vmem:[%s285 + $0xd8] sm:$0xff]
        %v368 = vld [vmem:[%s285 + $0xe0] sm:$0xff]
        %v369 = vld [vmem:[%s285 + $0xe8] sm:$0xff]
        %v370 = vld [vmem:[%s285 + $0xf0] sm:$0xff]
        %v371 = vld [vmem:[%s285 + $0xf8] sm:$0xff]
        %v372 = vld [vmem:[%s285 + $0x100] sm:$0xff]
        %v373 = vld [vmem:[%s285 + $0x108] sm:$0xff]
        %v374 = vld [vmem:[%s285 + $0x110] sm:$0xff]
        %v375 = vld [vmem:[%s285 + $0x118] sm:$0xff]
        %v376 = vld [vmem:[%s285 + $0x120] sm:$0xff]
        %v377 = vld [vmem:[%s285 + $0x128] sm:$0xff]
        %v378 = vld [vmem:[%s285 + $0x130] sm:$0xff]
        %v379 = vld [vmem:[%s285 + $0x138] sm:$0xff]
        %v380 = vld [vmem:[%s285 + $0x140] sm:$0xff]
        %v381 = vld [vmem:[%s285 + $0x148] sm:$0xff]
        %v382 = vld [vmem:[%s285 + $0x150] sm:$0xff]
        %v383 = vld [vmem:[%s285 + $0x158] sm:$0xff]
        %v384 = vld [vmem:[%s285 + $0x160] sm:$0xff]
        %v385 = vld [vmem:[%s285 + $0x168] sm:$0xff]
        %v386 = vld [vmem:[%s285 + $0x170] sm:$0xff]
        %v387 = vld [vmem:[%s285 + $0x178] sm:$0xff]
        %v388 = vld [vmem:[%s285 + $0x180] sm:$0xff]
        %v389 = vld [vmem:[%s285 + $0x188] sm:$0xff]
        %v390 = vld [vmem:[%s285 + $0x190] sm:$0xff]
        %v391 = vld [vmem:[%s285 + $0x198] sm:$0xff]
        %v392 = vld [vmem:[%s285 + $0x1a0] sm:$0xff]
        %v393 = vld [vmem:[%s285 + $0x1a8] sm:$0xff]
        %v394 = vld [vmem:[%s285 + $0x1b0] sm:$0xff]
        %v395 = vld [vmem:[%s285 + $0x1b8] sm:$0xff]
        %v396 = vld [vmem:[%s285 + $0x1c0] sm:$0xff]
        %v397 = vld [vmem:[%s285 + $0x1c8] sm:$0xff]
        %v398 = vld [vmem:[%s285 + $0x1d0] sm:$0xff]
        %v399 = vld [vmem:[%s285 + $0x1d8] sm:$0xff]
        %v400 = vld [vmem:[%s285 + $0x1e0] sm:$0xff]
        %v401 = vld [vmem:[%s285 + $0x1e8] sm:$0xff]
        %v402 = vld [vmem:[%s285 + $0x1f0] sm:$0xff]
        %v403 = vld [vmem:[%s285 + $0x1f8] sm:$0xff]
        %v404 = vld [vmem:[%s285 + $0x200] sm:$0xff]
        %v405 = vld [vmem:[%s285 + $0x208] sm:$0xff]
        %v406 = vld [vmem:[%s285 + $0x210] sm:$0xff]
        %v407 = vld [vmem:[%s285 + $0x218] sm:$0xff]
        %v408 = vld [vmem:[%s285 + $0x220] sm:$0xff]
        %v409 = vld [vmem:[%s285 + $0x228] sm:$0xff]
        %v410 = vld [vmem:[%s285 + $0x230] sm:$0xff]
        %v411 = vld [vmem:[%s285 + $0x238] sm:$0xff]
        %v412 = vld [vmem:[%s285 + $0x240] sm:$0xff]
        %v413 = vld [vmem:[%s285 + $0x248] sm:$0xff]
        %v414 = vld [vmem:[%s285 + $0x250] sm:$0xff]
        %v415 = vld [vmem:[%s285 + $0x258] sm:$0xff]
        %v416 = vld [vmem:[%s285 + $0x260] sm:$0xff]
        %v417 = vld [vmem:[%s285 + $0x268] sm:$0xff]
        %v418 = vld [vmem:[%s285 + $0x270] sm:$0xff]
        %v419 = vld [vmem:[%s285 + $0x278] sm:$0xff]
        %v420 = vld [vmem:[%s285 + $0x280] sm:$0xff]
        %v421 = vld [vmem:[%s285 + $0x288] sm:$0xff]
        %v422 = vld [vmem:[%s285 + $0x290] sm:$0xff]
        %v423 = vld [vmem:[%s285 + $0x298] sm:$0xff]
        %v424 = vld [vmem:[%s285 + $0x2a0] sm:$0xff]
        %v425 = vld [vmem:[%s285 + $0x2a8] sm:$0xff]
        %v426 = vld [vmem:[%s285 + $0x2b0] sm:$0xff]
        %v427 = vld [vmem:[%s285 + $0x2b8] sm:$0xff]
        %v428 = vld [vmem:[%s285 + $0x2c0] sm:$0xff]
        %v429 = vld [vmem:[%s285 + $0x2c8] sm:$0xff]
        %v430 = vld [vmem:[%s285 + $0x2d0] sm:$0xff]
        %v431 = vld [vmem:[%s285 + $0x2d8] sm:$0xff]
        %v432 = vld [vmem:[%s285 + $0x2e0] sm:$0xff]
        %v433 = vld [vmem:[%s285 + $0x2e8] sm:$0xff]
        %v434 = vld [vmem:[%s285 + $0x2f0] sm:$0xff]
        %v435 = vld [vmem:[%s285 + $0x2f8] sm:$0xff]
        %v436 = vld [vmem:[%s285 + $0x300] sm:$0xff]
        %v437 = vld [vmem:[%s285 + $0x308] sm:$0xff]
        %v438 = vld [vmem:[%s285 + $0x310] sm:$0xff]
        %v439 = vld [vmem:[%s285 + $0x318] sm:$0xff]
        %v440 = vld [vmem:[%s285 + $0x320] sm:$0xff]
        %v441 = vld [vmem:[%s285 + $0x328] sm:$0xff]
        %v442 = vld [vmem:[%s285 + $0x330] sm:$0xff]
        %v443 = vld [vmem:[%s285 + $0x338] sm:$0xff]
        %v444 = vld [vmem:[%s285 + $0x340] sm:$0xff]
        %v445 = vld [vmem:[%s285 + $0x348] sm:$0xff]
        %v446 = vld [vmem:[%s285 + $0x350] sm:$0xff]
        %v447 = vld [vmem:[%s285 + $0x358] sm:$0xff]
        %v448 = vld [vmem:[%s285 + $0x360] sm:$0xff]
        %v449 = vld [vmem:[%s285 + $0x368] sm:$0xff]
        %v450 = vld [vmem:[%s285 + $0x370] sm:$0xff]
        %v451 = vld [vmem:[%s285 + $0x378] sm:$0xff]
        %v452 = vld [vmem:[%s285 + $0x380] sm:$0xff]
        %v453 = vld [vmem:[%s285 + $0x388] sm:$0xff]
        %v454 = vld [vmem:[%s285 + $0x390] sm:$0xff]
        %v455 = vld [vmem:[%s285 + $0x398] sm:$0xff]
        %v456 = vld [vmem:[%s285 + $0x3a0] sm:$0xff]
        %v457 = vld [vmem:[%s285 + $0x3a8] sm:$0xff]
        %v458 = vld [vmem:[%s285 + $0x3b0] sm:$0xff]
        %v459 = vld [vmem:[%s285 + $0x3b8] sm:$0xff]
        %v460 = vld [vmem:[%s285 + $0x3c0] sm:$0xff]
        %v461 = vld [vmem:[%s285 + $0x3c8] sm:$0xff]
        %v462 = vld [vmem:[%s285 + $0x3d0] sm:$0xff]
        %v463 = vld [vmem:[%s285 + $0x3d8] sm:$0xff]
        %v464 = vld [vmem:[%s285 + $0x3e0] sm:$0xff]
        %v465 = vld [vmem:[%s285 + $0x3e8] sm:$0xff]
        %v466 = vld [vmem:[%s285 + $0x3f0] sm:$0xff]
        %v467 = vld [vmem:[%s285 + $0x3f8] sm:$0xff]
        %v468 = vld [vmem:[%s285 + $0x400] sm:$0xff]
        %v469 = vld [vmem:[%s285 + $0x408] sm:$0xff]
        %v470 = vld [vmem:[%s285 + $0x410] sm:$0xff]
        %v471 = vld [vmem:[%s285 + $0x418] sm:$0xff]
        %v472 = vld [vmem:[%s285 + $0x420] sm:$0xff]
        %v473 = vld [vmem:[%s285 + $0x428] sm:$0xff]
        %v474 = vld [vmem:[%s285 + $0x430] sm:$0xff]
        %v475 = vld [vmem:[%s285 + $0x438] sm:$0xff]
        %v476 = vld [vmem:[%s285 + $0x440] sm:$0xff]
        %v477 = vld [vmem:[%s285 + $0x448] sm:$0xff]
        %v478 = vld [vmem:[%s285 + $0x450] sm:$0xff]
        %v479 = vld [vmem:[%s285 + $0x458] sm:$0xff]
        %v480 = vld [vmem:[%s285 + $0x460] sm:$0xff]
        %v481 = vld [vmem:[%s285 + $0x468] sm:$0xff]
        %v482 = vld [vmem:[%s285 + $0x470] sm:$0xff]
        %v483 = vld [vmem:[%s285 + $0x478] sm:$0xff]
        %v484 = vld [vmem:[%s285 + $0x480] sm:$0xff]
        %v485 = vld [vmem:[%s285 + $0x488] sm:$0xff]
        %v486 = vld [vmem:[%s285 + $0x490] sm:$0xff]
        %v487 = vld [vmem:[%s285 + $0x498] sm:$0xff]
        %v488 = vld [vmem:[%s285 + $0x4a0] sm:$0xff]
        %v489 = vld [vmem:[%s285 + $0x4a8] sm:$0xff]
        %v490 = vld [vmem:[%s285 + $0x4b0] sm:$0xff]
        %v491 = vld [vmem:[%s285 + $0x4b8] sm:$0xff]
        %v492 = vld [vmem:[%s285 + $0x4c0] sm:$0xff]
        %v493 = vld [vmem:[%s285 + $0x4c8] sm:$0xff]
        %v494 = vld [vmem:[%s285 + $0x4d0] sm:$0xff]
        %v495 = vld [vmem:[%s285 + $0x4d8] sm:$0xff]
        %v496 = vld [vmem:[%s285 + $0x4e0] sm:$0xff]
        %v497 = vld [vmem:[%s285 + $0x4e8] sm:$0xff]
        %v498 = vld [vmem:[%s285 + $0x4f0] sm:$0xff]
        %v499 = vld [vmem:[%s285 + $0x4f8] sm:$0xff]
        %v500 = vld [vmem:[%s285 + $0x500] sm:$0xff]
        %v501 = vld [vmem:[%s285 + $0x508] sm:$0xff]
        %v502 = vld [vmem:[%s285 + $0x510] sm:$0xff]
        %v503 = vld [vmem:[%s285 + $0x518] sm:$0xff]
        %v504 = vld [vmem:[%s285 + $0x520] sm:$0xff]
        %v505 = vld [vmem:[%s285 + $0x528] sm:$0xff]
        %v506 = vld [vmem:[%s285 + $0x530] sm:$0xff]
        %v507 = vld [vmem:[%s285 + $0x538] sm:$0xff]
        %v508 = vld [vmem:[%s285 + $0x540] sm:$0xff]
        %v509 = vld [vmem:[%s285 + $0x548] sm:$0xff]
        %v510 = vld [vmem:[%s285 + $0x550] sm:$0xff]
        %v511 = vld [vmem:[%s285 + $0x558] sm:$0xff]
        %v512 = vld [vmem:[%s285 + $0x560] sm:$0xff]
        %v513 = vld [vmem:[%s285 + $0x568] sm:$0xff]
        %v514 = vld [vmem:[%s285 + $0x570] sm:$0xff]
        %v515 = vld [vmem:[%s285 + $0x578] sm:$0xff]
        %v516 = vld [vmem:[%s285 + $0x580] sm:$0xff]
        %v517 = vld [vmem:[%s285 + $0x588] sm:$0xff]
        %v518 = vld [vmem:[%s285 + $0x590] sm:$0xff]
        %v519 = vld [vmem:[%s285 + $0x598] sm:$0xff]
        %v520 = vld [vmem:[%s285 + $0x5a0] sm:$0xff]
        %v521 = vld [vmem:[%s285 + $0x5a8] sm:$0xff]
        %v522 = vld [vmem:[%s285 + $0x5b0] sm:$0xff]
        %v523 = vld [vmem:[%s285 + $0x5b8] sm:$0xff]
        %v524 = vld [vmem:[%s285 + $0x5c0] sm:$0xff]
        %v525 = vld [vmem:[%s285 + $0x5c8] sm:$0xff]
        %v526 = vld [vmem:[%s285 + $0x5d0] sm:$0xff]
        %v527 = vld [vmem:[%s285 + $0x5d8] sm:$0xff]
        %v528 = vld [vmem:[%s285 + $0x5e0] sm:$0xff]
        %v529 = vld [vmem:[%s285 + $0x5e8] sm:$0xff]
        %v530 = vld [vmem:[%s285 + $0x5f0] sm:$0xff]
        %v531 = vld [vmem:[%s285 + $0x5f8] sm:$0xff]
        %v532 = vld [vmem:[%s285 + $0x600] sm:$0xff]
        %v533 = vld [vmem:[%s285 + $0x608] sm:$0xff]
        %v534 = vld [vmem:[%s285 + $0x610] sm:$0xff]
        %v535 = vld [vmem:[%s285 + $0x618] sm:$0xff]
        %v536 = vld [vmem:[%s285 + $0x620] sm:$0xff]
        %v537 = vld [vmem:[%s285 + $0x628] sm:$0xff]
        %v538 = vld [vmem:[%s285 + $0x630] sm:$0xff]
        %v539 = vld [vmem:[%s285 + $0x638] sm:$0xff]
        %v540 = vld [vmem:[%s285 + $0x640] sm:$0xff]
        %v541 = vld [vmem:[%s285 + $0x648] sm:$0xff]
        %v542 = vld [vmem:[%s285 + $0x650] sm:$0xff]
        %v543 = vld [vmem:[%s285 + $0x658] sm:$0xff]
        %v544 = vld [vmem:[%s285 + $0x660] sm:$0xff]
        %v545 = vld [vmem:[%s285 + $0x668] sm:$0xff]
        %v546 = vld [vmem:[%s285 + $0x670] sm:$0xff]
        %v547 = vld [vmem:[%s285 + $0x678] sm:$0xff]
        %v548 = vld [vmem:[%s285 + $0x680] sm:$0xff]
        %v549 = vld [vmem:[%s285 + $0x688] sm:$0xff]
        %v550 = vld [vmem:[%s285 + $0x690] sm:$0xff]
        %v551 = vld [vmem:[%s285 + $0x698] sm:$0xff]
        %v552 = vld [vmem:[%s285 + $0x6a0] sm:$0xff]
        %v553 = vld [vmem:[%s285 + $0x6a8] sm:$0xff]
        %v554 = vld [vmem:[%s285 + $0x6b0] sm:$0xff]
        %v555 = vld [vmem:[%s285 + $0x6b8] sm:$0xff]
        %v556 = vld [vmem:[%s285 + $0x6c0] sm:$0xff]
        %v557 = vld [vmem:[%s285 + $0x6c8] sm:$0xff]
        %v558 = vld [vmem:[%s285 + $0x6d0] sm:$0xff]
        %v559 = vld [vmem:[%s285 + $0x6d8] sm:$0xff]
        %v560 = vld [vmem:[%s285 + $0x6e0] sm:$0xff]
        %v561 = vld [vmem:[%s285 + $0x6e8] sm:$0xff]
        %v562 = vld [vmem:[%s285 + $0x6f0] sm:$0xff]
        %v563 = vld [vmem:[%s285 + $0x6f8] sm:$0xff]
        %v564 = vld [vmem:[%s285 + $0x700] sm:$0xff]
        %v565 = vld [vmem:[%s285 + $0x708] sm:$0xff]
        %v566 = vld [vmem:[%s285 + $0x710] sm:$0xff]
        %v567 = vld [vmem:[%s285 + $0x718] sm:$0xff]
        %v568 = vld [vmem:[%s285 + $0x720] sm:$0xff]
        %v569 = vld [vmem:[%s285 + $0x728] sm:$0xff]
        %v570 = vld [vmem:[%s285 + $0x730] sm:$0xff]
        %v571 = vld [vmem:[%s285 + $0x738] sm:$0xff]
        %v572 = vld [vmem:[%s285 + $0x740] sm:$0xff]
        %v573 = vld [vmem:[%s285 + $0x748] sm:$0xff]
        %v574 = vld [vmem:[%s285 + $0x750] sm:$0xff]
        %v575 = vld [vmem:[%s285 + $0x758] sm:$0xff]
        %v576 = vld [vmem:[%s285 + $0x760] sm:$0xff]
        %v577 = vld [vmem:[%s285 + $0x768] sm:$0xff]
        %v578 = vld [vmem:[%s285 + $0x770] sm:$0xff]
        %v579 = vld [vmem:[%s285 + $0x778] sm:$0xff]
        %v580 = vld [vmem:[%s285 + $0x780] sm:$0xff]
        %v581 = vld [vmem:[%s285 + $0x788] sm:$0xff]
        %v582 = vld [vmem:[%s285 + $0x790] sm:$0xff]
        %v583 = vld [vmem:[%s285 + $0x798] sm:$0xff]
        %v584 = vld [vmem:[%s285 + $0x7a0] sm:$0xff]
        %v585 = vld [vmem:[%s285 + $0x7a8] sm:$0xff]
        %v586 = vld [vmem:[%s285 + $0x7b0] sm:$0xff]
        %v587 = vld [vmem:[%s285 + $0x7b8] sm:$0xff]
        %v588 = vld [vmem:[%s285 + $0x7c0] sm:$0xff]
        %v589 = vld [vmem:[%s285 + $0x7c8] sm:$0xff]
        %v590 = vld [vmem:[%s285 + $0x7d0] sm:$0xff]
        %v591 = vld [vmem:[%s285 + $0x7d8] sm:$0xff]
        %v592 = vld [vmem:[%s285 + $0x7e0] sm:$0xff]
        %v593 = vld [vmem:[%s285 + $0x7e8] sm:$0xff]
        %v594 = vld [vmem:[%s285 + $0x7f0] sm:$0xff]
        %v595 = vld [vmem:[%s285 + $0x7f8] sm:$0xff]
        %v596 = vpack.c.bf16 %v348, %v340
        %v597 = vpack.c.bf16 %v349, %v341
        %v598 = vpack.c.bf16 %v350, %v342
        %v599 = vpack.c.bf16 %v351, %v343
        %v600 = vpack.c.bf16 %v352, %v344
        %v601 = vpack.c.bf16 %v353, %v345
        %v602 = vpack.c.bf16 %v354, %v346
        %v603 = vpack.c.bf16 %v355, %v347
        %v604 = vpack.c.bf16 %v364, %v356
        %v605 = vpack.c.bf16 %v365, %v357
        %v606 = vpack.c.bf16 %v366, %v358
        %v607 = vpack.c.bf16 %v367, %v359
        %v608 = vpack.c.bf16 %v368, %v360
        %v609 = vpack.c.bf16 %v369, %v361
        %v610 = vpack.c.bf16 %v370, %v362
        %v611 = vpack.c.bf16 %v371, %v363
        %v612 = vpack.c.bf16 %v380, %v372
        %v613 = vpack.c.bf16 %v381, %v373
        %v614 = vpack.c.bf16 %v382, %v374
        %v615 = vpack.c.bf16 %v383, %v375
        %v616 = vpack.c.bf16 %v384, %v376
        %v617 = vpack.c.bf16 %v385, %v377
        %v618 = vpack.c.bf16 %v386, %v378
        %v619 = vpack.c.bf16 %v387, %v379
        %v620 = vpack.c.bf16 %v396, %v388
        %v621 = vpack.c.bf16 %v397, %v389
        %v622 = vpack.c.bf16 %v398, %v390
        %v623 = vpack.c.bf16 %v399, %v391
        %v624 = vpack.c.bf16 %v400, %v392
        %v625 = vpack.c.bf16 %v401, %v393
        %v626 = vpack.c.bf16 %v402, %v394
        %v627 = vpack.c.bf16 %v403, %v395
        %v628 = vpack.c.bf16 %v412, %v404
        %v629 = vpack.c.bf16 %v413, %v405
        %v630 = vpack.c.bf16 %v414, %v406
        %v631 = vpack.c.bf16 %v415, %v407
        %v632 = vpack.c.bf16 %v416, %v408
        %v633 = vpack.c.bf16 %v417, %v409
        %v634 = vpack.c.bf16 %v418, %v410
        %v635 = vpack.c.bf16 %v419, %v411
        %v636 = vpack.c.bf16 %v428, %v420
        %v637 = vpack.c.bf16 %v429, %v421
        %v638 = vpack.c.bf16 %v430, %v422
        %v639 = vpack.c.bf16 %v431, %v423
        %v640 = vpack.c.bf16 %v432, %v424
        %v641 = vpack.c.bf16 %v433, %v425
        %v642 = vpack.c.bf16 %v434, %v426
        %v643 = vpack.c.bf16 %v435, %v427
        %v644 = vpack.c.bf16 %v444, %v436
        %v645 = vpack.c.bf16 %v445, %v437
        %v646 = vpack.c.bf16 %v446, %v438
        %v647 = vpack.c.bf16 %v447, %v439
        %v648 = vpack.c.bf16 %v448, %v440
        %v649 = vpack.c.bf16 %v449, %v441
        %v650 = vpack.c.bf16 %v450, %v442
        %v651 = vpack.c.bf16 %v451, %v443
        %v652 = vpack.c.bf16 %v460, %v452
        %v653 = vpack.c.bf16 %v461, %v453
        %v654 = vpack.c.bf16 %v462, %v454
        %v655 = vpack.c.bf16 %v463, %v455
        %v656 = vpack.c.bf16 %v464, %v456
        %v657 = vpack.c.bf16 %v465, %v457
        %v658 = vpack.c.bf16 %v466, %v458
        %v659 = vpack.c.bf16 %v467, %v459
        %v660 = vpack.c.bf16 %v476, %v468
        %v661 = vpack.c.bf16 %v477, %v469
        %v662 = vpack.c.bf16 %v478, %v470
        %v663 = vpack.c.bf16 %v479, %v471
        %v664 = vpack.c.bf16 %v480, %v472
        %v665 = vpack.c.bf16 %v481, %v473
        %v666 = vpack.c.bf16 %v482, %v474
        %v667 = vpack.c.bf16 %v483, %v475
        %v668 = vpack.c.bf16 %v492, %v484
        %v669 = vpack.c.bf16 %v493, %v485
        %v670 = vpack.c.bf16 %v494, %v486
        %v671 = vpack.c.bf16 %v495, %v487
        %v672 = vpack.c.bf16 %v496, %v488
        %v673 = vpack.c.bf16 %v497, %v489
        %v674 = vpack.c.bf16 %v498, %v490
        %v675 = vpack.c.bf16 %v499, %v491
        %v676 = vpack.c.bf16 %v508, %v500
        %v677 = vpack.c.bf16 %v509, %v501
        %v678 = vpack.c.bf16 %v510, %v502
        %v679 = vpack.c.bf16 %v511, %v503
        %v680 = vpack.c.bf16 %v512, %v504
        %v681 = vpack.c.bf16 %v513, %v505
        %v682 = vpack.c.bf16 %v514, %v506
        %v683 = vpack.c.bf16 %v515, %v507
        %v684 = vpack.c.bf16 %v524, %v516
        %v685 = vpack.c.bf16 %v525, %v517
        %v686 = vpack.c.bf16 %v526, %v518
        %v687 = vpack.c.bf16 %v527, %v519
        %v688 = vpack.c.bf16 %v528, %v520
        %v689 = vpack.c.bf16 %v529, %v521
        %v690 = vpack.c.bf16 %v530, %v522
        %v691 = vpack.c.bf16 %v531, %v523
        %v692 = vpack.c.bf16 %v540, %v532
        %v693 = vpack.c.bf16 %v541, %v533
        %v694 = vpack.c.bf16 %v542, %v534
        %v695 = vpack.c.bf16 %v543, %v535
        %v696 = vpack.c.bf16 %v544, %v536
        %v697 = vpack.c.bf16 %v545, %v537
        %v698 = vpack.c.bf16 %v546, %v538
        %v699 = vpack.c.bf16 %v547, %v539
        %v700 = vpack.c.bf16 %v556, %v548
        %v701 = vpack.c.bf16 %v557, %v549
        %v702 = vpack.c.bf16 %v558, %v550
        %v703 = vpack.c.bf16 %v559, %v551
        %v704 = vpack.c.bf16 %v560, %v552
        %v705 = vpack.c.bf16 %v561, %v553
        %v706 = vpack.c.bf16 %v562, %v554
        %v707 = vpack.c.bf16 %v563, %v555
        %v708 = vpack.c.bf16 %v572, %v564
        %v709 = vpack.c.bf16 %v573, %v565
        %v710 = vpack.c.bf16 %v574, %v566
        %v711 = vpack.c.bf16 %v575, %v567
        %v712 = vpack.c.bf16 %v576, %v568
        %v713 = vpack.c.bf16 %v577, %v569
        %v714 = vpack.c.bf16 %v578, %v570
        %v715 = vpack.c.bf16 %v579, %v571
        %v716 = vpack.c.bf16 %v588, %v580
        %v717 = vpack.c.bf16 %v589, %v581
        %v718 = vpack.c.bf16 %v590, %v582
        %v719 = vpack.c.bf16 %v591, %v583
        %v720 = vpack.c.bf16 %v592, %v584
        %v721 = vpack.c.bf16 %v593, %v585
        %v722 = vpack.c.bf16 %v594, %v586
        %v723 = vpack.c.bf16 %v595, %v587
        %v724 = vld [vmem:[#allocation4] sm:$0xff]
        %v725 = vld [vmem:[#allocation4 + $0x8] sm:$0xff]
        %v726 = vld [vmem:[#allocation4 + $0x10] sm:$0xff]
        %v727 = vld [vmem:[#allocation4 + $0x18] sm:$0xff]
        %v728 = vld [vmem:[#allocation4 + $0x20] sm:$0xff]
        %v729 = vld [vmem:[#allocation4 + $0x28] sm:$0xff]
        %v730 = vld [vmem:[#allocation4 + $0x30] sm:$0xff]
        %v731 = vld [vmem:[#allocation4 + $0x38] sm:$0xff]
        %v732 = vld [vmem:[#allocation4 + $0x40] sm:$0xff]
        %v733 = vld [vmem:[#allocation4 + $0x48] sm:$0xff]
        %v734 = vld [vmem:[#allocation4 + $0x50] sm:$0xff]
        %v735 = vld [vmem:[#allocation4 + $0x58] sm:$0xff]
        %v736 = vld [vmem:[#allocation4 + $0x60] sm:$0xff]
        %v737 = vld [vmem:[#allocation4 + $0x68] sm:$0xff]
        %v738 = vld [vmem:[#allocation4 + $0x70] sm:$0xff]
        %v739 = vld [vmem:[#allocation4 + $0x78] sm:$0xff]
        %v740 = vld [vmem:[#allocation4 + $0x80] sm:$0xff]
        %v741 = vld [vmem:[#allocation4 + $0x88] sm:$0xff]
        %v742 = vld [vmem:[#allocation4 + $0x90] sm:$0xff]
        %v743 = vld [vmem:[#allocation4 + $0x98] sm:$0xff]
        %v744 = vld [vmem:[#allocation4 + $0xa0] sm:$0xff]
        %v745 = vld [vmem:[#allocation4 + $0xa8] sm:$0xff]
        %v746 = vld [vmem:[#allocation4 + $0xb0] sm:$0xff]
        %v747 = vld [vmem:[#allocation4 + $0xb8] sm:$0xff]
        %v748 = vld [vmem:[#allocation4 + $0xc0] sm:$0xff]
        %v749 = vld [vmem:[#allocation4 + $0xc8] sm:$0xff]
        %v750 = vld [vmem:[#allocation4 + $0xd0] sm:$0xff]
        %v751 = vld [vmem:[#allocation4 + $0xd8] sm:$0xff]
        %v752 = vld [vmem:[#allocation4 + $0xe0] sm:$0xff]
        %v753 = vld [vmem:[#allocation4 + $0xe8] sm:$0xff]
        %v754 = vld [vmem:[#allocation4 + $0xf0] sm:$0xff]
        %v755 = vld [vmem:[#allocation4 + $0xf8] sm:$0xff]
        %v756 = vld [vmem:[#allocation4 + $0x100] sm:$0xff]
        %v757 = vld [vmem:[#allocation4 + $0x108] sm:$0xff]
        %v758 = vld [vmem:[#allocation4 + $0x110] sm:$0xff]
        %v759 = vld [vmem:[#allocation4 + $0x118] sm:$0xff]
        %v760 = vld [vmem:[#allocation4 + $0x120] sm:$0xff]
        %v761 = vld [vmem:[#allocation4 + $0x128] sm:$0xff]
        %v762 = vld [vmem:[#allocation4 + $0x130] sm:$0xff]
        %v763 = vld [vmem:[#allocation4 + $0x138] sm:$0xff]
        %v764 = vld [vmem:[#allocation4 + $0x140] sm:$0xff]
        %v765 = vld [vmem:[#allocation4 + $0x148] sm:$0xff]
        %v766 = vld [vmem:[#allocation4 + $0x150] sm:$0xff]
        %v767 = vld [vmem:[#allocation4 + $0x158] sm:$0xff]
        %v768 = vld [vmem:[#allocation4 + $0x160] sm:$0xff]
        %v769 = vld [vmem:[#allocation4 + $0x168] sm:$0xff]
        %v770 = vld [vmem:[#allocation4 + $0x170] sm:$0xff]
        %v771 = vld [vmem:[#allocation4 + $0x178] sm:$0xff]
        %v772 = vld [vmem:[#allocation4 + $0x180] sm:$0xff]
        %v773 = vld [vmem:[#allocation4 + $0x188] sm:$0xff]
        %v774 = vld [vmem:[#allocation4 + $0x190] sm:$0xff]
        %v775 = vld [vmem:[#allocation4 + $0x198] sm:$0xff]
        %v776 = vld [vmem:[#allocation4 + $0x1a0] sm:$0xff]
        %v777 = vld [vmem:[#allocation4 + $0x1a8] sm:$0xff]
        %v778 = vld [vmem:[#allocation4 + $0x1b0] sm:$0xff]
        %v779 = vld [vmem:[#allocation4 + $0x1b8] sm:$0xff]
        %v780 = vld [vmem:[#allocation4 + $0x1c0] sm:$0xff]
        %v781 = vld [vmem:[#allocation4 + $0x1c8] sm:$0xff]
        %v782 = vld [vmem:[#allocation4 + $0x1d0] sm:$0xff]
        %v783 = vld [vmem:[#allocation4 + $0x1d8] sm:$0xff]
        %v784 = vld [vmem:[#allocation4 + $0x1e0] sm:$0xff]
        %v785 = vld [vmem:[#allocation4 + $0x1e8] sm:$0xff]
        %v786 = vld [vmem:[#allocation4 + $0x1f0] sm:$0xff]
        %v787 = vld [vmem:[#allocation4 + $0x1f8] sm:$0xff]
        %v788 = vld [vmem:[#allocation4 + $0x200] sm:$0xff]
        %v789 = vld [vmem:[#allocation4 + $0x208] sm:$0xff]
        %v790 = vld [vmem:[#allocation4 + $0x210] sm:$0xff]
        %v791 = vld [vmem:[#allocation4 + $0x218] sm:$0xff]
        %v792 = vld [vmem:[#allocation4 + $0x220] sm:$0xff]
        %v793 = vld [vmem:[#allocation4 + $0x228] sm:$0xff]
        %v794 = vld [vmem:[#allocation4 + $0x230] sm:$0xff]
        %v795 = vld [vmem:[#allocation4 + $0x238] sm:$0xff]
        %v796 = vld [vmem:[#allocation4 + $0x240] sm:$0xff]
        %v797 = vld [vmem:[#allocation4 + $0x248] sm:$0xff]
        %v798 = vld [vmem:[#allocation4 + $0x250] sm:$0xff]
        %v799 = vld [vmem:[#allocation4 + $0x258] sm:$0xff]
        %v800 = vld [vmem:[#allocation4 + $0x260] sm:$0xff]
        %v801 = vld [vmem:[#allocation4 + $0x268] sm:$0xff]
        %v802 = vld [vmem:[#allocation4 + $0x270] sm:$0xff]
        %v803 = vld [vmem:[#allocation4 + $0x278] sm:$0xff]
        %v804 = vld [vmem:[#allocation4 + $0x280] sm:$0xff]
        %v805 = vld [vmem:[#allocation4 + $0x288] sm:$0xff]
        %v806 = vld [vmem:[#allocation4 + $0x290] sm:$0xff]
        %v807 = vld [vmem:[#allocation4 + $0x298] sm:$0xff]
        %v808 = vld [vmem:[#allocation4 + $0x2a0] sm:$0xff]
        %v809 = vld [vmem:[#allocation4 + $0x2a8] sm:$0xff]
        %v810 = vld [vmem:[#allocation4 + $0x2b0] sm:$0xff]
        %v811 = vld [vmem:[#allocation4 + $0x2b8] sm:$0xff]
        %v812 = vld [vmem:[#allocation4 + $0x2c0] sm:$0xff]
        %v813 = vld [vmem:[#allocation4 + $0x2c8] sm:$0xff]
        %v814 = vld [vmem:[#allocation4 + $0x2d0] sm:$0xff]
        %v815 = vld [vmem:[#allocation4 + $0x2d8] sm:$0xff]
        %v816 = vld [vmem:[#allocation4 + $0x2e0] sm:$0xff]
        %v817 = vld [vmem:[#allocation4 + $0x2e8] sm:$0xff]
        %v818 = vld [vmem:[#allocation4 + $0x2f0] sm:$0xff]
        %v819 = vld [vmem:[#allocation4 + $0x2f8] sm:$0xff]
        %v820 = vld [vmem:[#allocation4 + $0x300] sm:$0xff]
        %v821 = vld [vmem:[#allocation4 + $0x308] sm:$0xff]
        %v822 = vld [vmem:[#allocation4 + $0x310] sm:$0xff]
        %v823 = vld [vmem:[#allocation4 + $0x318] sm:$0xff]
        %v824 = vld [vmem:[#allocation4 + $0x320] sm:$0xff]
        %v825 = vld [vmem:[#allocation4 + $0x328] sm:$0xff]
        %v826 = vld [vmem:[#allocation4 + $0x330] sm:$0xff]
        %v827 = vld [vmem:[#allocation4 + $0x338] sm:$0xff]
        %v828 = vld [vmem:[#allocation4 + $0x340] sm:$0xff]
        %v829 = vld [vmem:[#allocation4 + $0x348] sm:$0xff]
        %v830 = vld [vmem:[#allocation4 + $0x350] sm:$0xff]
        %v831 = vld [vmem:[#allocation4 + $0x358] sm:$0xff]
        %v832 = vld [vmem:[#allocation4 + $0x360] sm:$0xff]
        %v833 = vld [vmem:[#allocation4 + $0x368] sm:$0xff]
        %v834 = vld [vmem:[#allocation4 + $0x370] sm:$0xff]
        %v835 = vld [vmem:[#allocation4 + $0x378] sm:$0xff]
        %v836 = vld [vmem:[#allocation4 + $0x380] sm:$0xff]
        %v837 = vld [vmem:[#allocation4 + $0x388] sm:$0xff]
        %v838 = vld [vmem:[#allocation4 + $0x390] sm:$0xff]
        %v839 = vld [vmem:[#allocation4 + $0x398] sm:$0xff]
        %v840 = vld [vmem:[#allocation4 + $0x3a0] sm:$0xff]
        %v841 = vld [vmem:[#allocation4 + $0x3a8] sm:$0xff]
        %v842 = vld [vmem:[#allocation4 + $0x3b0] sm:$0xff]
        %v843 = vld [vmem:[#allocation4 + $0x3b8] sm:$0xff]
        %v844 = vld [vmem:[#allocation4 + $0x3c0] sm:$0xff]
        %v845 = vld [vmem:[#allocation4 + $0x3c8] sm:$0xff]
        %v846 = vld [vmem:[#allocation4 + $0x3d0] sm:$0xff]
        %v847 = vld [vmem:[#allocation4 + $0x3d8] sm:$0xff]
        %v848 = vld [vmem:[#allocation4 + $0x3e0] sm:$0xff]
        %v849 = vld [vmem:[#allocation4 + $0x3e8] sm:$0xff]
        %v850 = vld [vmem:[#allocation4 + $0x3f0] sm:$0xff]
        %v851 = vld [vmem:[#allocation4 + $0x3f8] sm:$0xff]
        %v852 = vld [vmem:[#allocation6] ss:$4 sm:$0x3]
        %v854 = vlaneseq
        %v855 = vshrl.u32 %v854, 7
        %v856 = vsub.s32 0, %v855
        %v857 = vrot.slane %v852, %v856
        %v858 = vlaneseq
        %v859 = vshrl.u32 %v858, 7
        %v860 = vsub.s32 1, %v859
        %v861 = vrot.slane %v852, %v860
        %v992 = vunpack.c.l.b16 %v724
        %v993 = vunpack.c.h.b16 %v724
        %v994 = vunpack.c.l.b16 %v725
        %v995 = vunpack.c.h.b16 %v725
        %v996 = vunpack.c.l.b16 %v726
        %v997 = vunpack.c.h.b16 %v726
        %v998 = vunpack.c.l.b16 %v727
        %v999 = vunpack.c.h.b16 %v727
        %v1000 = vunpack.c.l.b16 %v728
        %v1001 = vunpack.c.h.b16 %v728
        %v1002 = vunpack.c.l.b16 %v729
        %v1003 = vunpack.c.h.b16 %v729
        %v1004 = vunpack.c.l.b16 %v730
        %v1005 = vunpack.c.h.b16 %v730
        %v1006 = vunpack.c.l.b16 %v731
        %v1007 = vunpack.c.h.b16 %v731
        %v1008 = vunpack.c.l.b16 %v732
        %v1009 = vunpack.c.h.b16 %v732
        %v1010 = vunpack.c.l.b16 %v733
        %v1011 = vunpack.c.h.b16 %v733
        %v1012 = vunpack.c.l.b16 %v734
        %v1013 = vunpack.c.h.b16 %v734
        %v1014 = vunpack.c.l.b16 %v735
        %v1015 = vunpack.c.h.b16 %v735
        %v1016 = vunpack.c.l.b16 %v736
        %v1017 = vunpack.c.h.b16 %v736
        %v1018 = vunpack.c.l.b16 %v737
        %v1019 = vunpack.c.h.b16 %v737
        %v1020 = vunpack.c.l.b16 %v738
        %v1021 = vunpack.c.h.b16 %v738
        %v1022 = vunpack.c.l.b16 %v739
        %v1023 = vunpack.c.h.b16 %v739
        %v1024 = vunpack.c.l.b16 %v740
        %v1025 = vunpack.c.h.b16 %v740
        %v1026 = vunpack.c.l.b16 %v741
        %v1027 = vunpack.c.h.b16 %v741
        %v1028 = vunpack.c.l.b16 %v742
        %v1029 = vunpack.c.h.b16 %v742
        %v1030 = vunpack.c.l.b16 %v743
        %v1031 = vunpack.c.h.b16 %v743
        %v1032 = vunpack.c.l.b16 %v744
        %v1033 = vunpack.c.h.b16 %v744
        %v1034 = vunpack.c.l.b16 %v745
        %v1035 = vunpack.c.h.b16 %v745
        %v1036 = vunpack.c.l.b16 %v746
        %v1037 = vunpack.c.h.b16 %v746
        %v1038 = vunpack.c.l.b16 %v747
        %v1039 = vunpack.c.h.b16 %v747
        %v1040 = vunpack.c.l.b16 %v748
        %v1041 = vunpack.c.h.b16 %v748
        %v1042 = vunpack.c.l.b16 %v749
        %v1043 = vunpack.c.h.b16 %v749
        %v1044 = vunpack.c.l.b16 %v750
        %v1045 = vunpack.c.h.b16 %v750
        %v1046 = vunpack.c.l.b16 %v751
        %v1047 = vunpack.c.h.b16 %v751
        %v1048 = vunpack.c.l.b16 %v752
        %v1049 = vunpack.c.h.b16 %v752
        %v1050 = vunpack.c.l.b16 %v753
        %v1051 = vunpack.c.h.b16 %v753
        %v1052 = vunpack.c.l.b16 %v754
        %v1053 = vunpack.c.h.b16 %v754
        %v1054 = vunpack.c.l.b16 %v755
        %v1055 = vunpack.c.h.b16 %v755
        %v1056 = vunpack.c.l.b16 %v756
        %v1057 = vunpack.c.h.b16 %v756
        %v1058 = vunpack.c.l.b16 %v757
        %v1059 = vunpack.c.h.b16 %v757
        %v1060 = vunpack.c.l.b16 %v758
        %v1061 = vunpack.c.h.b16 %v758
        %v1062 = vunpack.c.l.b16 %v759
        %v1063 = vunpack.c.h.b16 %v759
        %v1064 = vunpack.c.l.b16 %v760
        %v1065 = vunpack.c.h.b16 %v760
        %v1066 = vunpack.c.l.b16 %v761
        %v1067 = vunpack.c.h.b16 %v761
        %v1068 = vunpack.c.l.b16 %v762
        %v1069 = vunpack.c.h.b16 %v762
        %v1070 = vunpack.c.l.b16 %v763
        %v1071 = vunpack.c.h.b16 %v763
        %v1072 = vunpack.c.l.b16 %v764
        %v1073 = vunpack.c.h.b16 %v764
        %v1074 = vunpack.c.l.b16 %v765
        %v1075 = vunpack.c.h.b16 %v765
        %v1076 = vunpack.c.l.b16 %v766
        %v1077 = vunpack.c.h.b16 %v766
        %v1078 = vunpack.c.l.b16 %v767
        %v1079 = vunpack.c.h.b16 %v767
        %v1080 = vunpack.c.l.b16 %v768
        %v1081 = vunpack.c.h.b16 %v768
        %v1082 = vunpack.c.l.b16 %v769
        %v1083 = vunpack.c.h.b16 %v769
        %v1084 = vunpack.c.l.b16 %v770
        %v1085 = vunpack.c.h.b16 %v770
        %v1086 = vunpack.c.l.b16 %v771
        %v1087 = vunpack.c.h.b16 %v771
        %v1088 = vunpack.c.l.b16 %v772
        %v1089 = vunpack.c.h.b16 %v772
        %v1090 = vunpack.c.l.b16 %v773
        %v1091 = vunpack.c.h.b16 %v773
        %v1092 = vunpack.c.l.b16 %v774
        %v1093 = vunpack.c.h.b16 %v774
        %v1094 = vunpack.c.l.b16 %v775
        %v1095 = vunpack.c.h.b16 %v775
        %v1096 = vunpack.c.l.b16 %v776
        %v1097 = vunpack.c.h.b16 %v776
        %v1098 = vunpack.c.l.b16 %v777
        %v1099 = vunpack.c.h.b16 %v777
        %v1100 = vunpack.c.l.b16 %v778
        %v1101 = vunpack.c.h.b16 %v778
        %v1102 = vunpack.c.l.b16 %v779
        %v1103 = vunpack.c.h.b16 %v779
        %v1104 = vunpack.c.l.b16 %v780
        %v1105 = vunpack.c.h.b16 %v780
        %v1106 = vunpack.c.l.b16 %v781
        %v1107 = vunpack.c.h.b16 %v781
        %v1108 = vunpack.c.l.b16 %v782
        %v1109 = vunpack.c.h.b16 %v782
        %v1110 = vunpack.c.l.b16 %v783
        %v1111 = vunpack.c.h.b16 %v783
        %v1112 = vunpack.c.l.b16 %v784
        %v1113 = vunpack.c.h.b16 %v784
        %v1114 = vunpack.c.l.b16 %v785
        %v1115 = vunpack.c.h.b16 %v785
        %v1116 = vunpack.c.l.b16 %v786
        %v1117 = vunpack.c.h.b16 %v786
        %v1118 = vunpack.c.l.b16 %v787
        %v1119 = vunpack.c.h.b16 %v787
        %v1120 = vunpack.c.l.b16 %v788
        %v1121 = vunpack.c.h.b16 %v788
        %v1122 = vunpack.c.l.b16 %v789
        %v1123 = vunpack.c.h.b16 %v789
        %v1124 = vunpack.c.l.b16 %v790
        %v1125 = vunpack.c.h.b16 %v790
        %v1126 = vunpack.c.l.b16 %v791
        %v1127 = vunpack.c.h.b16 %v791
        %v1128 = vunpack.c.l.b16 %v792
        %v1129 = vunpack.c.h.b16 %v792
        %v1130 = vunpack.c.l.b16 %v793
        %v1131 = vunpack.c.h.b16 %v793
        %v1132 = vunpack.c.l.b16 %v794
        %v1133 = vunpack.c.h.b16 %v794
        %v1134 = vunpack.c.l.b16 %v795
        %v1135 = vunpack.c.h.b16 %v795
        %v1136 = vunpack.c.l.b16 %v796
        %v1137 = vunpack.c.h.b16 %v796
        %v1138 = vunpack.c.l.b16 %v797
        %v1139 = vunpack.c.h.b16 %v797
        %v1140 = vunpack.c.l.b16 %v798
        %v1141 = vunpack.c.h.b16 %v798
        %v1142 = vunpack.c.l.b16 %v799
        %v1143 = vunpack.c.h.b16 %v799
        %v1144 = vunpack.c.l.b16 %v800
        %v1145 = vunpack.c.h.b16 %v800
        %v1146 = vunpack.c.l.b16 %v801
        %v1147 = vunpack.c.h.b16 %v801
        %v1148 = vunpack.c.l.b16 %v802
        %v1149 = vunpack.c.h.b16 %v802
        %v1150 = vunpack.c.l.b16 %v803
        %v1151 = vunpack.c.h.b16 %v803
        %v1152 = vunpack.c.l.b16 %v804
        %v1153 = vunpack.c.h.b16 %v804
        %v1154 = vunpack.c.l.b16 %v805
        %v1155 = vunpack.c.h.b16 %v805
        %v1156 = vunpack.c.l.b16 %v806
        %v1157 = vunpack.c.h.b16 %v806
        %v1158 = vunpack.c.l.b16 %v807
        %v1159 = vunpack.c.h.b16 %v807
        %v1160 = vunpack.c.l.b16 %v808
        %v1161 = vunpack.c.h.b16 %v808
        %v1162 = vunpack.c.l.b16 %v809
        %v1163 = vunpack.c.h.b16 %v809
        %v1164 = vunpack.c.l.b16 %v810
        %v1165 = vunpack.c.h.b16 %v810
        %v1166 = vunpack.c.l.b16 %v811
        %v1167 = vunpack.c.h.b16 %v811
        %v1168 = vunpack.c.l.b16 %v812
        %v1169 = vunpack.c.h.b16 %v812
        %v1170 = vunpack.c.l.b16 %v813
        %v1171 = vunpack.c.h.b16 %v813
        %v1172 = vunpack.c.l.b16 %v814
        %v1173 = vunpack.c.h.b16 %v814
        %v1174 = vunpack.c.l.b16 %v815
        %v1175 = vunpack.c.h.b16 %v815
        %v1176 = vunpack.c.l.b16 %v816
        %v1177 = vunpack.c.h.b16 %v816
        %v1178 = vunpack.c.l.b16 %v817
        %v1179 = vunpack.c.h.b16 %v817
        %v1180 = vunpack.c.l.b16 %v818
        %v1181 = vunpack.c.h.b16 %v818
        %v1182 = vunpack.c.l.b16 %v819
        %v1183 = vunpack.c.h.b16 %v819
        %v1184 = vunpack.c.l.b16 %v820
        %v1185 = vunpack.c.h.b16 %v820
        %v1186 = vunpack.c.l.b16 %v821
        %v1187 = vunpack.c.h.b16 %v821
        %v1188 = vunpack.c.l.b16 %v822
        %v1189 = vunpack.c.h.b16 %v822
        %v1190 = vunpack.c.l.b16 %v823
        %v1191 = vunpack.c.h.b16 %v823
        %v1192 = vunpack.c.l.b16 %v824
        %v1193 = vunpack.c.h.b16 %v824
        %v1194 = vunpack.c.l.b16 %v825
        %v1195 = vunpack.c.h.b16 %v825
        %v1196 = vunpack.c.l.b16 %v826
        %v1197 = vunpack.c.h.b16 %v826
        %v1198 = vunpack.c.l.b16 %v827
        %v1199 = vunpack.c.h.b16 %v827
        %v1200 = vunpack.c.l.b16 %v828
        %v1201 = vunpack.c.h.b16 %v828
        %v1202 = vunpack.c.l.b16 %v829
        %v1203 = vunpack.c.h.b16 %v829
        %v1204 = vunpack.c.l.b16 %v830
        %v1205 = vunpack.c.h.b16 %v830
        %v1206 = vunpack.c.l.b16 %v831
        %v1207 = vunpack.c.h.b16 %v831
        %v1208 = vunpack.c.l.b16 %v832
        %v1209 = vunpack.c.h.b16 %v832
        %v1210 = vunpack.c.l.b16 %v833
        %v1211 = vunpack.c.h.b16 %v833
        %v1212 = vunpack.c.l.b16 %v834
        %v1213 = vunpack.c.h.b16 %v834
        %v1214 = vunpack.c.l.b16 %v835
        %v1215 = vunpack.c.h.b16 %v835
        %v1216 = vunpack.c.l.b16 %v836
        %v1217 = vunpack.c.h.b16 %v836
        %v1218 = vunpack.c.l.b16 %v837
        %v1219 = vunpack.c.h.b16 %v837
        %v1220 = vunpack.c.l.b16 %v838
        %v1221 = vunpack.c.h.b16 %v838
        %v1222 = vunpack.c.l.b16 %v839
        %v1223 = vunpack.c.h.b16 %v839
        %v1224 = vunpack.c.l.b16 %v840
        %v1225 = vunpack.c.h.b16 %v840
        %v1226 = vunpack.c.l.b16 %v841
        %v1227 = vunpack.c.h.b16 %v841
        %v1228 = vunpack.c.l.b16 %v842
        %v1229 = vunpack.c.h.b16 %v842
        %v1230 = vunpack.c.l.b16 %v843
        %v1231 = vunpack.c.h.b16 %v843
        %v1232 = vunpack.c.l.b16 %v844
        %v1233 = vunpack.c.h.b16 %v844
        %v1234 = vunpack.c.l.b16 %v845
        %v1235 = vunpack.c.h.b16 %v845
        %v1236 = vunpack.c.l.b16 %v846
        %v1237 = vunpack.c.h.b16 %v846
        %v1238 = vunpack.c.l.b16 %v847
        %v1239 = vunpack.c.h.b16 %v847
        %v1240 = vunpack.c.l.b16 %v848
        %v1241 = vunpack.c.h.b16 %v848
        %v1242 = vunpack.c.l.b16 %v849
        %v1243 = vunpack.c.h.b16 %v849
        %v1244 = vunpack.c.l.b16 %v850
        %v1245 = vunpack.c.h.b16 %v850
        %v1246 = vunpack.c.l.b16 %v851
        %v1247 = vunpack.c.h.b16 %v851
        %v1248 = vpack.c.b16 %v994, %v992
        %v1249 = vpack.c.b16 %v995, %v993
        %v1250 = vpack.c.b16 %v998, %v996
        %v1251 = vpack.c.b16 %v999, %v997
        %v1252 = vpack.c.b16 %v1002, %v1000
        %v1253 = vpack.c.b16 %v1003, %v1001
        %v1254 = vpack.c.b16 %v1006, %v1004
        %v1255 = vpack.c.b16 %v1007, %v1005
        %v1256 = vpack.c.b16 %v1010, %v1008
        %v1257 = vpack.c.b16 %v1011, %v1009
        %v1258 = vpack.c.b16 %v1014, %v1012
        %v1259 = vpack.c.b16 %v1015, %v1013
        %v1260 = vpack.c.b16 %v1018, %v1016
        %v1261 = vpack.c.b16 %v1019, %v1017
        %v1262 = vpack.c.b16 %v1022, %v1020
        %v1263 = vpack.c.b16 %v1023, %v1021
        %v1264 = vpack.c.b16 %v1026, %v1024
        %v1265 = vpack.c.b16 %v1027, %v1025
        %v1266 = vpack.c.b16 %v1030, %v1028
        %v1267 = vpack.c.b16 %v1031, %v1029
        %v1268 = vpack.c.b16 %v1034, %v1032
        %v1269 = vpack.c.b16 %v1035, %v1033
        %v1270 = vpack.c.b16 %v1038, %v1036
        %v1271 = vpack.c.b16 %v1039, %v1037
        %v1272 = vpack.c.b16 %v1042, %v1040
        %v1273 = vpack.c.b16 %v1043, %v1041
        %v1274 = vpack.c.b16 %v1046, %v1044
        %v1275 = vpack.c.b16 %v1047, %v1045
        %v1276 = vpack.c.b16 %v1050, %v1048
        %v1277 = vpack.c.b16 %v1051, %v1049
        %v1278 = vpack.c.b16 %v1054, %v1052
        %v1279 = vpack.c.b16 %v1055, %v1053
        %v1280 = vpack.c.b16 %v1058, %v1056
        %v1281 = vpack.c.b16 %v1059, %v1057
        %v1282 = vpack.c.b16 %v1062, %v1060
        %v1283 = vpack.c.b16 %v1063, %v1061
        %v1284 = vpack.c.b16 %v1066, %v1064
        %v1285 = vpack.c.b16 %v1067, %v1065
        %v1286 = vpack.c.b16 %v1070, %v1068
        %v1287 = vpack.c.b16 %v1071, %v1069
        %v1288 = vpack.c.b16 %v1074, %v1072
        %v1289 = vpack.c.b16 %v1075, %v1073
        %v1290 = vpack.c.b16 %v1078, %v1076
        %v1291 = vpack.c.b16 %v1079, %v1077
        %v1292 = vpack.c.b16 %v1082, %v1080
        %v1293 = vpack.c.b16 %v1083, %v1081
        %v1294 = vpack.c.b16 %v1086, %v1084
        %v1295 = vpack.c.b16 %v1087, %v1085
        %v1296 = vpack.c.b16 %v1090, %v1088
        %v1297 = vpack.c.b16 %v1091, %v1089
        %v1298 = vpack.c.b16 %v1094, %v1092
        %v1299 = vpack.c.b16 %v1095, %v1093
        %v1300 = vpack.c.b16 %v1098, %v1096
        %v1301 = vpack.c.b16 %v1099, %v1097
        %v1302 = vpack.c.b16 %v1102, %v1100
        %v1303 = vpack.c.b16 %v1103, %v1101
        %v1304 = vpack.c.b16 %v1106, %v1104
        %v1305 = vpack.c.b16 %v1107, %v1105
        %v1306 = vpack.c.b16 %v1110, %v1108
        %v1307 = vpack.c.b16 %v1111, %v1109
        %v1308 = vpack.c.b16 %v1114, %v1112
        %v1309 = vpack.c.b16 %v1115, %v1113
        %v1310 = vpack.c.b16 %v1118, %v1116
        %v1311 = vpack.c.b16 %v1119, %v1117
        %v1312 = vpack.c.b16 %v1122, %v1120
        %v1313 = vpack.c.b16 %v1123, %v1121
        %v1314 = vpack.c.b16 %v1126, %v1124
        %v1315 = vpack.c.b16 %v1127, %v1125
        %v1316 = vpack.c.b16 %v1130, %v1128
        %v1317 = vpack.c.b16 %v1131, %v1129
        %v1318 = vpack.c.b16 %v1134, %v1132
        %v1319 = vpack.c.b16 %v1135, %v1133
        %v1320 = vpack.c.b16 %v1138, %v1136
        %v1321 = vpack.c.b16 %v1139, %v1137
        %v1322 = vpack.c.b16 %v1142, %v1140
        %v1323 = vpack.c.b16 %v1143, %v1141
        %v1324 = vpack.c.b16 %v1146, %v1144
        %v1325 = vpack.c.b16 %v1147, %v1145
        %v1326 = vpack.c.b16 %v1150, %v1148
        %v1327 = vpack.c.b16 %v1151, %v1149
        %v1328 = vpack.c.b16 %v1154, %v1152
        %v1329 = vpack.c.b16 %v1155, %v1153
        %v1330 = vpack.c.b16 %v1158, %v1156
        %v1331 = vpack.c.b16 %v1159, %v1157
        %v1332 = vpack.c.b16 %v1162, %v1160
        %v1333 = vpack.c.b16 %v1163, %v1161
        %v1334 = vpack.c.b16 %v1166, %v1164
        %v1335 = vpack.c.b16 %v1167, %v1165
        %v1336 = vpack.c.b16 %v1170, %v1168
        %v1337 = vpack.c.b16 %v1171, %v1169
        %v1338 = vpack.c.b16 %v1174, %v1172
        %v1339 = vpack.c.b16 %v1175, %v1173
        %v1340 = vpack.c.b16 %v1178, %v1176
        %v1341 = vpack.c.b16 %v1179, %v1177
        %v1342 = vpack.c.b16 %v1182, %v1180
        %v1343 = vpack.c.b16 %v1183, %v1181
        %v1344 = vpack.c.b16 %v1186, %v1184
        %v1345 = vpack.c.b16 %v1187, %v1185
        %v1346 = vpack.c.b16 %v1190, %v1188
        %v1347 = vpack.c.b16 %v1191, %v1189
        %v1348 = vpack.c.b16 %v1194, %v1192
        %v1349 = vpack.c.b16 %v1195, %v1193
        %v1350 = vpack.c.b16 %v1198, %v1196
        %v1351 = vpack.c.b16 %v1199, %v1197
        %v1352 = vpack.c.b16 %v1202, %v1200
        %v1353 = vpack.c.b16 %v1203, %v1201
        %v1354 = vpack.c.b16 %v1206, %v1204
        %v1355 = vpack.c.b16 %v1207, %v1205
        %v1356 = vpack.c.b16 %v1210, %v1208
        %v1357 = vpack.c.b16 %v1211, %v1209
        %v1358 = vpack.c.b16 %v1214, %v1212
        %v1359 = vpack.c.b16 %v1215, %v1213
        %v1360 = vpack.c.b16 %v1218, %v1216
        %v1361 = vpack.c.b16 %v1219, %v1217
        %v1362 = vpack.c.b16 %v1222, %v1220
        %v1363 = vpack.c.b16 %v1223, %v1221
        %v1364 = vpack.c.b16 %v1226, %v1224
        %v1365 = vpack.c.b16 %v1227, %v1225
        %v1366 = vpack.c.b16 %v1230, %v1228
        %v1367 = vpack.c.b16 %v1231, %v1229
        %v1368 = vpack.c.b16 %v1234, %v1232
        %v1369 = vpack.c.b16 %v1235, %v1233
        %v1370 = vpack.c.b16 %v1238, %v1236
        %v1371 = vpack.c.b16 %v1239, %v1237
        %v1372 = vpack.c.b16 %v1242, %v1240
        %v1373 = vpack.c.b16 %v1243, %v1241
        %v1374 = vpack.c.b16 %v1246, %v1244
        %v1375 = vpack.c.b16 %v1247, %v1245
        %1504 = vmatprep.subr.bf16.mxu0 %v1249
        %1505 = vmatpush1.bf16.msra.mxu0 %v1248
        %1506 = vmatprep.subr.bf16.mxu0 %v1251
        %1507 = vmatpush1.bf16.msra.mxu0 %v1250
        %1508 = vmatprep.subr.bf16.mxu0 %v1253
        %1509 = vmatpush1.bf16.msra.mxu0 %v1252
        %1510 = vmatprep.subr.bf16.mxu0 %v1255
        %1511 = vmatpush1.bf16.msra.mxu0 %v1254
        %1512 = vmatprep.subr.bf16.mxu0 %v1257
        %1513 = vmatpush1.bf16.msra.mxu0 %v1256
        %1514 = vmatprep.subr.bf16.mxu0 %v1259
        %1515 = vmatpush1.bf16.msra.mxu0 %v1258
        %1516 = vmatprep.subr.bf16.mxu0 %v1261
        %1517 = vmatpush1.bf16.msra.mxu0 %v1260
        %1518 = vmatprep.subr.bf16.mxu0 %v1263
        %1519 = vmatpush1.bf16.msra.mxu0 %v1262
        %1520 = vmatprep.subr.bf16.mxu0 %v1265
        %1521 = vmatpush1.bf16.msra.mxu0 %v1264
        %1522 = vmatprep.subr.bf16.mxu0 %v1267
        %1523 = vmatpush1.bf16.msra.mxu0 %v1266
        %1524 = vmatprep.subr.bf16.mxu0 %v1269
        %1525 = vmatpush1.bf16.msra.mxu0 %v1268
        %1526 = vmatprep.subr.bf16.mxu0 %v1271
        %1527 = vmatpush1.bf16.msra.mxu0 %v1270
        %1528 = vmatprep.subr.bf16.mxu0 %v1273
        %1529 = vmatpush1.bf16.msra.mxu0 %v1272
        %1530 = vmatprep.subr.bf16.mxu0 %v1275
        %1531 = vmatpush1.bf16.msra.mxu0 %v1274
        %1532 = vmatprep.subr.bf16.mxu0 %v1277
        %1533 = vmatpush1.bf16.msra.mxu0 %v1276
        %1534 = vmatprep.subr.bf16.mxu0 %v1279
        %1535 = vmatpush1.bf16.msra.mxu0 %v1278
        %1536 = vmatprep.mubr.bf16.mxu0 %v597
        %1537 = vmatmul.mubr.bf16.gmra.mrb[0].mxu0 %v596
        %v1538 = vpop.f32.mrb[0].mxu0
        %v1539 = vadd.f32 %v857, %v1538
        %v1540 = vpop.f32.mrb[0].mxu0
        %v1541 = vadd.f32 %v861, %v1540
        %v1542 = vpop.f32.mrb[0].mxu0
        %v1543 = vadd.f32 %v857, %v1542
        %v1544 = vpop.f32.mrb[0].mxu0
        %v1545 = vadd.f32 %v861, %v1544
        %1546 = vmatprep.mubr.bf16.mxu0 %v605
        %1547 = vmatmul.mubr.bf16.gmra.mrb[0].mxu0 %v604
        %v1548 = vpop.f32.mrb[0].mxu0
        %v1549 = vadd.f32 %v857, %v1548
        %v1550 = vpop.f32.mrb[0].mxu0
        %v1551 = vadd.f32 %v861, %v1550
        %v1552 = vpop.f32.mrb[0].mxu0
        %v1553 = vadd.f32 %v857, %v1552
        %v1554 = vpop.f32.mrb[0].mxu0
        %v1555 = vadd.f32 %v861, %v1554
        %1556 = vmatprep.mubr.bf16.mxu0 %v613
        %1557 = vmatmul.mubr.bf16.gmra.mrb[0].mxu0 %v612
        %v1558 = vpop.f32.mrb[0].mxu0
        %v1559 = vadd.f32 %v857, %v1558
        %v1560 = vpop.f32.mrb[0].mxu0
        %v1561 = vadd.f32 %v861, %v1560
        %v1562 = vpop.f32.mrb[0].mxu0
        %v1563 = vadd.f32 %v857, %v1562
        %v1564 = vpop.f32.mrb[0].mxu0
        %v1565 = vadd.f32 %v861, %v1564
        %1566 = vmatprep.mubr.bf16.mxu0 %v621
        %1567 = vmatmul.mubr.bf16.gmra.mrb[0].mxu0 %v620
        %v1568 = vpop.f32.mrb[0].mxu0
        %v1569 = vadd.f32 %v857, %v1568
        %v1570 = vpop.f32.mrb[0].mxu0
        %v1571 = vadd.f32 %v861, %v1570
        %v1572 = vpop.f32.mrb[0].mxu0
        %v1573 = vadd.f32 %v857, %v1572
        %v1574 = vpop.f32.mrb[0].mxu0
        %v1575 = vadd.f32 %v861, %v1574
        %1576 = vmatprep.mubr.bf16.mxu0 %v629
        %1577 = vmatmul.mubr.bf16.gmra.mrb[0].mxu0 %v628
        %v1578 = vpop.f32.mrb[0].mxu0
        %v1579 = vadd.f32 %v857, %v1578
        %v1580 = vpop.f32.mrb[0].mxu0
        %v1581 = vadd.f32 %v861, %v1580
        %v1582 = vpop.f32.mrb[0].mxu0
        %v1583 = vadd.f32 %v857, %v1582
        %v1584 = vpop.f32.mrb[0].mxu0
        %v1585 = vadd.f32 %v861, %v1584
        %1586 = vmatprep.mubr.bf16.mxu0 %v637
        %1587 = vmatmul.mubr.bf16.gmra.mrb[0].mxu0 %v636
        %v1588 = vpop.f32.mrb[0].mxu0
        %v1589 = vadd.f32 %v857, %v1588
        %v1590 = vpop.f32.mrb[0].mxu0
        %v1591 = vadd.f32 %v861, %v1590
        %v1592 = vpop.f32.mrb[0].mxu0
        %v1593 = vadd.f32 %v857, %v1592
        %v1594 = vpop.f32.mrb[0].mxu0
        %v1595 = vadd.f32 %v861, %v1594
        %1596 = vmatprep.mubr.bf16.mxu0 %v645
        %1597 = vmatmul.mubr.bf16.gmra.mrb[0].mxu0 %v644
        %v1598 = vpop.f32.mrb[0].mxu0
        %v1599 = vadd.f32 %v857, %v1598
        %v1600 = vpop.f32.mrb[0].mxu0
        %v1601 = vadd.f32 %v861, %v1600
        %v1602 = vpop.f32.mrb[0].mxu0
        %v1603 = vadd.f32 %v857, %v1602
        %v1604 = vpop.f32.mrb[0].mxu0
        %v1605 = vadd.f32 %v861, %v1604
        %1606 = vmatprep.mubr.bf16.mxu0 %v653
        %1607 = vmatmul.mubr.bf16.gmra.mrb[0].mxu0 %v652
        %v1608 = vpop.f32.mrb[0].mxu0
        %v1609 = vadd.f32 %v857, %v1608
        %v1610 = vpop.f32.mrb[0].mxu0
        %v1611 = vadd.f32 %v861, %v1610
        %v1612 = vpop.f32.mrb[0].mxu0
        %v1613 = vadd.f32 %v857, %v1612
        %v1614 = vpop.f32.mrb[0].mxu0
        %v1615 = vadd.f32 %v861, %v1614
        %1616 = vmatprep.mubr.bf16.mxu0 %v661
        %1617 = vmatmul.mubr.bf16.gmra.mrb[0].mxu0 %v660
        %v1618 = vpop.f32.mrb[0].mxu0
        %v1619 = vadd.f32 %v857, %v1618
        %v1620 = vpop.f32.mrb[0].mxu0
        %v1621 = vadd.f32 %v861, %v1620
        %v1622 = vpop.f32.mrb[0].mxu0
        %v1623 = vadd.f32 %v857, %v1622
        %v1624 = vpop.f32.mrb[0].mxu0
        %v1625 = vadd.f32 %v861, %v1624
        %1626 = vmatprep.mubr.bf16.mxu0 %v669
        %1627 = vmatmul.mubr.bf16.gmra.mrb[0].mxu0 %v668
        %v1628 = vpop.f32.mrb[0].mxu0
        %v1629 = vadd.f32 %v857, %v1628
        %v1630 = vpop.f32.mrb[0].mxu0
        %v1631 = vadd.f32 %v861, %v1630
        %v1632 = vpop.f32.mrb[0].mxu0
        %v1633 = vadd.f32 %v857, %v1632
        %v1634 = vpop.f32.mrb[0].mxu0
        %v1635 = vadd.f32 %v861, %v1634
        %1636 = vmatprep.mubr.bf16.mxu0 %v677
        %1637 = vmatmul.mubr.bf16.gmra.mrb[0].mxu0 %v676
        %v1638 = vpop.f32.mrb[0].mxu0
        %v1639 = vadd.f32 %v857, %v1638
        %v1640 = vpop.f32.mrb[0].mxu0
        %v1641 = vadd.f32 %v861, %v1640
        %v1642 = vpop.f32.mrb[0].mxu0
        %v1643 = vadd.f32 %v857, %v1642
        %v1644 = vpop.f32.mrb[0].mxu0
        %v1645 = vadd.f32 %v861, %v1644
        %1646 = vmatprep.mubr.bf16.mxu0 %v685
        %1647 = vmatmul.mubr.bf16.gmra.mrb[0].mxu0 %v684
        %v1648 = vpop.f32.mrb[0].mxu0
        %v1649 = vadd.f32 %v857, %v1648
        %v1650 = vpop.f32.mrb[0].mxu0
        %v1651 = vadd.f32 %v861, %v1650
        %v1652 = vpop.f32.mrb[0].mxu0
        %v1653 = vadd.f32 %v857, %v1652
        %v1654 = vpop.f32.mrb[0].mxu0
        %v1655 = vadd.f32 %v861, %v1654
        %1656 = vmatprep.mubr.bf16.mxu0 %v693
        %1657 = vmatmul.mubr.bf16.gmra.mrb[0].mxu0 %v692
        %v1658 = vpop.f32.mrb[0].mxu0
        %v1659 = vadd.f32 %v857, %v1658
        %v1660 = vpop.f32.mrb[0].mxu0
        %v1661 = vadd.f32 %v861, %v1660
        %v1662 = vpop.f32.mrb[0].mxu0
        %v1663 = vadd.f32 %v857, %v1662
        %v1664 = vpop.f32.mrb[0].mxu0
        %v1665 = vadd.f32 %v861, %v1664
        %1666 = vmatprep.mubr.bf16.mxu0 %v701
        %1667 = vmatmul.mubr.bf16.gmra.mrb[0].mxu0 %v700
        %v1668 = vpop.f32.mrb[0].mxu0
        %v1669 = vadd.f32 %v857, %v1668
        %v1670 = vpop.f32.mrb[0].mxu0
        %v1671 = vadd.f32 %v861, %v1670
        %v1672 = vpop.f32.mrb[0].mxu0
        %v1673 = vadd.f32 %v857, %v1672
        %v1674 = vpop.f32.mrb[0].mxu0
        %v1675 = vadd.f32 %v861, %v1674
        %1676 = vmatprep.mubr.bf16.mxu0 %v709
        %1677 = vmatmul.mubr.bf16.gmra.mrb[0].mxu0 %v708
        %v1678 = vpop.f32.mrb[0].mxu0
        %v1679 = vadd.f32 %v857, %v1678
        %v1680 = vpop.f32.mrb[0].mxu0
        %v1681 = vadd.f32 %v861, %v1680
        %v1682 = vpop.f32.mrb[0].mxu0
        %v1683 = vadd.f32 %v857, %v1682
        %v1684 = vpop.f32.mrb[0].mxu0
        %v1685 = vadd.f32 %v861, %v1684
        %1686 = vmatprep.mubr.bf16.mxu0 %v717
        %1687 = vmatmul.mubr.bf16.gmra.mrb[0].mxu0 %v716
        %v1688 = vpop.f32.mrb[0].mxu0
        %v1689 = vadd.f32 %v857, %v1688
        %v1690 = vpop.f32.mrb[0].mxu0
        %v1691 = vadd.f32 %v861, %v1690
        %v1692 = vpop.f32.mrb[0].mxu0
        %v1693 = vadd.f32 %v857, %v1692
        %v1694 = vpop.f32.mrb[0].mxu0
        %v1695 = vadd.f32 %v861, %v1694
        %1696 = vdwg.mxu0
        %1697 = vmatprep.subr.bf16.mxu0 %v1281
        %1698 = vmatpush1.bf16.msra.mxu0 %v1280
        %1699 = vmatprep.subr.bf16.mxu0 %v1283
        %1700 = vmatpush1.bf16.msra.mxu0 %v1282
        %1701 = vmatprep.subr.bf16.mxu0 %v1285
        %1702 = vmatpush1.bf16.msra.mxu0 %v1284
        %1703 = vmatprep.subr.bf16.mxu0 %v1287
        %1704 = vmatpush1.bf16.msra.mxu0 %v1286
        %1705 = vmatprep.subr.bf16.mxu0 %v1289
        %1706 = vmatpush1.bf16.msra.mxu0 %v1288
        %1707 = vmatprep.subr.bf16.mxu0 %v1291
        %1708 = vmatpush1.bf16.msra.mxu0 %v1290
        %1709 = vmatprep.subr.bf16.mxu0 %v1293
        %1710 = vmatpush1.bf16.msra.mxu0 %v1292
        %1711 = vmatprep.subr.bf16.mxu0 %v1295
        %1712 = vmatpush1.bf16.msra.mxu0 %v1294
        %1713 = vmatprep.subr.bf16.mxu0 %v1297
        %1714 = vmatpush1.bf16.msra.mxu0 %v1296
        %1715 = vmatprep.subr.bf16.mxu0 %v1299
        %1716 = vmatpush1.bf16.msra.mxu0 %v1298
        %1717 = vmatprep.subr.bf16.mxu0 %v1301
        %1718 = vmatpush1.bf16.msra.mxu0 %v1300
        %1719 = vmatprep.subr.bf16.mxu0 %v1303
        %1720 = vmatpush1.bf16.msra.mxu0 %v1302
        %1721 = vmatprep.subr.bf16.mxu0 %v1305
        %1722 = vmatpush1.bf16.msra.mxu0 %v1304
        %1723 = vmatprep.subr.bf16.mxu0 %v1307
        %1724 = vmatpush1.bf16.msra.mxu0 %v1306
        %1725 = vmatprep.subr.bf16.mxu0 %v1309
        %1726 = vmatpush1.bf16.msra.mxu0 %v1308
        %1727 = vmatprep.subr.bf16.mxu0 %v1311
        %1728 = vmatpush1.bf16.msra.mxu0 %v1310
        %1729 = vmatprep.mubr.bf16.mxu0 %v599
        %1730 = vmatmul.mubr.bf16.gmra.mrb[0].mxu0 %v598
        %v1731 = vpop.f32.mrb[0].mxu0
        %v1732 = vadd.f32 %v1539, %v1731
        %v1733 = vpop.f32.mrb[0].mxu0
        %v1734 = vadd.f32 %v1541, %v1733
        %v1735 = vpop.f32.mrb[0].mxu0
        %v1736 = vadd.f32 %v1543, %v1735
        %v1737 = vpop.f32.mrb[0].mxu0
        %v1738 = vadd.f32 %v1545, %v1737
        %1739 = vmatprep.mubr.bf16.mxu0 %v607
        %1740 = vmatmul.mubr.bf16.gmra.mrb[0].mxu0 %v606
        %v1741 = vpop.f32.mrb[0].mxu0
        %v1742 = vadd.f32 %v1549, %v1741
        %v1743 = vpop.f32.mrb[0].mxu0
        %v1744 = vadd.f32 %v1551, %v1743
        %v1745 = vpop.f32.mrb[0].mxu0
        %v1746 = vadd.f32 %v1553, %v1745
        %v1747 = vpop.f32.mrb[0].mxu0
        %v1748 = vadd.f32 %v1555, %v1747
        %1749 = vmatprep.mubr.bf16.mxu0 %v615
        %1750 = vmatmul.mubr.bf16.gmra.mrb[0].mxu0 %v614
        %v1751 = vpop.f32.mrb[0].mxu0
        %v1752 = vadd.f32 %v1559, %v1751
        %v1753 = vpop.f32.mrb[0].mxu0
        %v1754 = vadd.f32 %v1561, %v1753
        %v1755 = vpop.f32.mrb[0].mxu0
        %v1756 = vadd.f32 %v1563, %v1755
        %v1757 = vpop.f32.mrb[0].mxu0
        %v1758 = vadd.f32 %v1565, %v1757
        %1759 = vmatprep.mubr.bf16.mxu0 %v623
        %1760 = vmatmul.mubr.bf16.gmra.mrb[0].mxu0 %v622
        %v1761 = vpop.f32.mrb[0].mxu0
        %v1762 = vadd.f32 %v1569, %v1761
        %v1763 = vpop.f32.mrb[0].mxu0
        %v1764 = vadd.f32 %v1571, %v1763
        %v1765 = vpop.f32.mrb[0].mxu0
        %v1766 = vadd.f32 %v1573, %v1765
        %v1767 = vpop.f32.mrb[0].mxu0
        %v1768 = vadd.f32 %v1575, %v1767
        %1769 = vmatprep.mubr.bf16.mxu0 %v631
        %1770 = vmatmul.mubr.bf16.gmra.mrb[0].mxu0 %v630
        %v1771 = vpop.f32.mrb[0].mxu0
        %v1772 = vadd.f32 %v1579, %v1771
        %v1773 = vpop.f32.mrb[0].mxu0
        %v1774 = vadd.f32 %v1581, %v1773
        %v1775 = vpop.f32.mrb[0].mxu0
        %v1776 = vadd.f32 %v1583, %v1775
        %v1777 = vpop.f32.mrb[0].mxu0
        %v1778 = vadd.f32 %v1585, %v1777
        %1779 = vmatprep.mubr.bf16.mxu0 %v639
        %1780 = vmatmul.mubr.bf16.gmra.mrb[0].mxu0 %v638
        %v1781 = vpop.f32.mrb[0].mxu0
        %v1782 = vadd.f32 %v1589, %v1781
        %v1783 = vpop.f32.mrb[0].mxu0
        %v1784 = vadd.f32 %v1591, %v1783
        %v1785 = vpop.f32.mrb[0].mxu0
        %v1786 = vadd.f32 %v1593, %v1785
        %v1787 = vpop.f32.mrb[0].mxu0
        %v1788 = vadd.f32 %v1595, %v1787
        %1789 = vmatprep.mubr.bf16.mxu0 %v647
        %1790 = vmatmul.mubr.bf16.gmra.mrb[0].mxu0 %v646
        %v1791 = vpop.f32.mrb[0].mxu0
        %v1792 = vadd.f32 %v1599, %v1791
        %v1793 = vpop.f32.mrb[0].mxu0
        %v1794 = vadd.f32 %v1601, %v1793
        %v1795 = vpop.f32.mrb[0].mxu0
        %v1796 = vadd.f32 %v1603, %v1795
        %v1797 = vpop.f32.mrb[0].mxu0
        %v1798 = vadd.f32 %v1605, %v1797
        %1799 = vmatprep.mubr.bf16.mxu0 %v655
        %1800 = vmatmul.mubr.bf16.gmra.mrb[0].mxu0 %v654
        %v1801 = vpop.f32.mrb[0].mxu0
        %v1802 = vadd.f32 %v1609, %v1801
        %v1803 = vpop.f32.mrb[0].mxu0
        %v1804 = vadd.f32 %v1611, %v1803
        %v1805 = vpop.f32.mrb[0].mxu0
        %v1806 = vadd.f32 %v1613, %v1805
        %v1807 = vpop.f32.mrb[0].mxu0
        %v1808 = vadd.f32 %v1615, %v1807
        %1809 = vmatprep.mubr.bf16.mxu0 %v663
        %1810 = vmatmul.mubr.bf16.gmra.mrb[0].mxu0 %v662
        %v1811 = vpop.f32.mrb[0].mxu0
        %v1812 = vadd.f32 %v1619, %v1811
        %v1813 = vpop.f32.mrb[0].mxu0
        %v1814 = vadd.f32 %v1621, %v1813
        %v1815 = vpop.f32.mrb[0].mxu0
        %v1816 = vadd.f32 %v1623, %v1815
        %v1817 = vpop.f32.mrb[0].mxu0
        %v1818 = vadd.f32 %v1625, %v1817
        %1819 = vmatprep.mubr.bf16.mxu0 %v671
        %1820 = vmatmul.mubr.bf16.gmra.mrb[0].mxu0 %v670
        %v1821 = vpop.f32.mrb[0].mxu0
        %v1822 = vadd.f32 %v1629, %v1821
        %v1823 = vpop.f32.mrb[0].mxu0
        %v1824 = vadd.f32 %v1631, %v1823
        %v1825 = vpop.f32.mrb[0].mxu0
        %v1826 = vadd.f32 %v1633, %v1825
        %v1827 = vpop.f32.mrb[0].mxu0
        %v1828 = vadd.f32 %v1635, %v1827
        %1829 = vmatprep.mubr.bf16.mxu0 %v679
        %1830 = vmatmul.mubr.bf16.gmra.mrb[0].mxu0 %v678
        %v1831 = vpop.f32.mrb[0].mxu0
        %v1832 = vadd.f32 %v1639, %v1831
        %v1833 = vpop.f32.mrb[0].mxu0
        %v1834 = vadd.f32 %v1641, %v1833
        %v1835 = vpop.f32.mrb[0].mxu0
        %v1836 = vadd.f32 %v1643, %v1835
        %v1837 = vpop.f32.mrb[0].mxu0
        %v1838 = vadd.f32 %v1645, %v1837
        %1839 = vmatprep.mubr.bf16.mxu0 %v687
        %1840 = vmatmul.mubr.bf16.gmra.mrb[0].mxu0 %v686
        %v1841 = vpop.f32.mrb[0].mxu0
        %v1842 = vadd.f32 %v1649, %v1841
        %v1843 = vpop.f32.mrb[0].mxu0
        %v1844 = vadd.f32 %v1651, %v1843
        %v1845 = vpop.f32.mrb[0].mxu0
        %v1846 = vadd.f32 %v1653, %v1845
        %v1847 = vpop.f32.mrb[0].mxu0
        %v1848 = vadd.f32 %v1655, %v1847
        %1849 = vmatprep.mubr.bf16.mxu0 %v695
        %1850 = vmatmul.mubr.bf16.gmra.mrb[0].mxu0 %v694
        %v1851 = vpop.f32.mrb[0].mxu0
        %v1852 = vadd.f32 %v1659, %v1851
        %v1853 = vpop.f32.mrb[0].mxu0
        %v1854 = vadd.f32 %v1661, %v1853
        %v1855 = vpop.f32.mrb[0].mxu0
        %v1856 = vadd.f32 %v1663, %v1855
        %v1857 = vpop.f32.mrb[0].mxu0
        %v1858 = vadd.f32 %v1665, %v1857
        %1859 = vmatprep.mubr.bf16.mxu0 %v703
        %1860 = vmatmul.mubr.bf16.gmra.mrb[0].mxu0 %v702
        %v1861 = vpop.f32.mrb[0].mxu0
        %v1862 = vadd.f32 %v1669, %v1861
        %v1863 = vpop.f32.mrb[0].mxu0
        %v1864 = vadd.f32 %v1671, %v1863
        %v1865 = vpop.f32.mrb[0].mxu0
        %v1866 = vadd.f32 %v1673, %v1865
        %v1867 = vpop.f32.mrb[0].mxu0
        %v1868 = vadd.f32 %v1675, %v1867
        %1869 = vmatprep.mubr.bf16.mxu0 %v711
        %1870 = vmatmul.mubr.bf16.gmra.mrb[0].mxu0 %v710
        %v1871 = vpop.f32.mrb[0].mxu0
        %v1872 = vadd.f32 %v1679, %v1871
        %v1873 = vpop.f32.mrb[0].mxu0
        %v1874 = vadd.f32 %v1681, %v1873
        %v1875 = vpop.f32.mrb[0].mxu0
        %v1876 = vadd.f32 %v1683, %v1875
        %v1877 = vpop.f32.mrb[0].mxu0
        %v1878 = vadd.f32 %v1685, %v1877
        %1879 = vmatprep.mubr.bf16.mxu0 %v719
        %1880 = vmatmul.mubr.bf16.gmra.mrb[0].mxu0 %v718
        %v1881 = vpop.f32.mrb[0].mxu0
        %v1882 = vadd.f32 %v1689, %v1881
        %v1883 = vpop.f32.mrb[0].mxu0
        %v1884 = vadd.f32 %v1691, %v1883
        %v1885 = vpop.f32.mrb[0].mxu0
        %v1886 = vadd.f32 %v1693, %v1885
        %v1887 = vpop.f32.mrb[0].mxu0
        %v1888 = vadd.f32 %v1695, %v1887
        %1889 = vdwg.mxu0
        %1890 = vmatprep.subr.bf16.mxu0 %v1313
        %1891 = vmatpush1.bf16.msra.mxu0 %v1312
        %1892 = vmatprep.subr.bf16.mxu0 %v1315
        %1893 = vmatpush1.bf16.msra.mxu0 %v1314
        %1894 = vmatprep.subr.bf16.mxu0 %v1317
        %1895 = vmatpush1.bf16.msra.mxu0 %v1316
        %1896 = vmatprep.subr.bf16.mxu0 %v1319
        %1897 = vmatpush1.bf16.msra.mxu0 %v1318
        %1898 = vmatprep.subr.bf16.mxu0 %v1321
        %1899 = vmatpush1.bf16.msra.mxu0 %v1320
        %1900 = vmatprep.subr.bf16.mxu0 %v1323
        %1901 = vmatpush1.bf16.msra.mxu0 %v1322
        %1902 = vmatprep.subr.bf16.mxu0 %v1325
        %1903 = vmatpush1.bf16.msra.mxu0 %v1324
        %1904 = vmatprep.subr.bf16.mxu0 %v1327
        %1905 = vmatpush1.bf16.msra.mxu0 %v1326
        %1906 = vmatprep.subr.bf16.mxu0 %v1329
        %1907 = vmatpush1.bf16.msra.mxu0 %v1328
        %1908 = vmatprep.subr.bf16.mxu0 %v1331
        %1909 = vmatpush1.bf16.msra.mxu0 %v1330
        %1910 = vmatprep.subr.bf16.mxu0 %v1333
        %1911 = vmatpush1.bf16.msra.mxu0 %v1332
        %1912 = vmatprep.subr.bf16.mxu0 %v1335
        %1913 = vmatpush1.bf16.msra.mxu0 %v1334
        %1914 = vmatprep.subr.bf16.mxu0 %v1337
        %1915 = vmatpush1.bf16.msra.mxu0 %v1336
        %1916 = vmatprep.subr.bf16.mxu0 %v1339
        %1917 = vmatpush1.bf16.msra.mxu0 %v1338
        %1918 = vmatprep.subr.bf16.mxu0 %v1341
        %1919 = vmatpush1.bf16.msra.mxu0 %v1340
        %1920 = vmatprep.subr.bf16.mxu0 %v1343
        %1921 = vmatpush1.bf16.msra.mxu0 %v1342
        %1922 = vmatprep.mubr.bf16.mxu0 %v601
        %1923 = vmatmul.mubr.bf16.gmra.mrb[0].mxu0 %v600
        %v1924 = vpop.f32.mrb[0].mxu0
        %v1925 = vadd.f32 %v1732, %v1924
        %v1926 = vpop.f32.mrb[0].mxu0
        %v1927 = vadd.f32 %v1734, %v1926
        %v1928 = vpop.f32.mrb[0].mxu0
        %v1929 = vadd.f32 %v1736, %v1928
        %v1930 = vpop.f32.mrb[0].mxu0
        %v1931 = vadd.f32 %v1738, %v1930
        %1932 = vmatprep.mubr.bf16.mxu0 %v609
        %1933 = vmatmul.mubr.bf16.gmra.mrb[0].mxu0 %v608
        %v1934 = vpop.f32.mrb[0].mxu0
        %v1935 = vadd.f32 %v1742, %v1934
        %v1936 = vpop.f32.mrb[0].mxu0
        %v1937 = vadd.f32 %v1744, %v1936
        %v1938 = vpop.f32.mrb[0].mxu0
        %v1939 = vadd.f32 %v1746, %v1938
        %v1940 = vpop.f32.mrb[0].mxu0
        %v1941 = vadd.f32 %v1748, %v1940
        %1942 = vmatprep.mubr.bf16.mxu0 %v617
        %1943 = vmatmul.mubr.bf16.gmra.mrb[0].mxu0 %v616
        %v1944 = vpop.f32.mrb[0].mxu0
        %v1945 = vadd.f32 %v1752, %v1944
        %v1946 = vpop.f32.mrb[0].mxu0
        %v1947 = vadd.f32 %v1754, %v1946
        %v1948 = vpop.f32.mrb[0].mxu0
        %v1949 = vadd.f32 %v1756, %v1948
        %v1950 = vpop.f32.mrb[0].mxu0
        %v1951 = vadd.f32 %v1758, %v1950
        %1952 = vmatprep.mubr.bf16.mxu0 %v625
        %1953 = vmatmul.mubr.bf16.gmra.mrb[0].mxu0 %v624
        %v1954 = vpop.f32.mrb[0].mxu0
        %v1955 = vadd.f32 %v1762, %v1954
        %v1956 = vpop.f32.mrb[0].mxu0
        %v1957 = vadd.f32 %v1764, %v1956
        %v1958 = vpop.f32.mrb[0].mxu0
        %v1959 = vadd.f32 %v1766, %v1958
        %v1960 = vpop.f32.mrb[0].mxu0
        %v1961 = vadd.f32 %v1768, %v1960
        %1962 = vmatprep.mubr.bf16.mxu0 %v633
        %1963 = vmatmul.mubr.bf16.gmra.mrb[0].mxu0 %v632
        %v1964 = vpop.f32.mrb[0].mxu0
        %v1965 = vadd.f32 %v1772, %v1964
        %v1966 = vpop.f32.mrb[0].mxu0
        %v1967 = vadd.f32 %v1774, %v1966
        %v1968 = vpop.f32.mrb[0].mxu0
        %v1969 = vadd.f32 %v1776, %v1968
        %v1970 = vpop.f32.mrb[0].mxu0
        %v1971 = vadd.f32 %v1778, %v1970
        %1972 = vmatprep.mubr.bf16.mxu0 %v641
        %1973 = vmatmul.mubr.bf16.gmra.mrb[0].mxu0 %v640
        %v1974 = vpop.f32.mrb[0].mxu0
        %v1975 = vadd.f32 %v1782, %v1974
        %v1976 = vpop.f32.mrb[0].mxu0
        %v1977 = vadd.f32 %v1784, %v1976
        %v1978 = vpop.f32.mrb[0].mxu0
        %v1979 = vadd.f32 %v1786, %v1978
        %v1980 = vpop.f32.mrb[0].mxu0
        %v1981 = vadd.f32 %v1788, %v1980
        %1982 = vmatprep.mubr.bf16.mxu0 %v649
        %1983 = vmatmul.mubr.bf16.gmra.mrb[0].mxu0 %v648
        %v1984 = vpop.f32.mrb[0].mxu0
        %v1985 = vadd.f32 %v1792, %v1984
        %v1986 = vpop.f32.mrb[0].mxu0
        %v1987 = vadd.f32 %v1794, %v1986
        %v1988 = vpop.f32.mrb[0].mxu0
        %v1989 = vadd.f32 %v1796, %v1988
        %v1990 = vpop.f32.mrb[0].mxu0
        %v1991 = vadd.f32 %v1798, %v1990
        %1992 = vmatprep.mubr.bf16.mxu0 %v657
        %1993 = vmatmul.mubr.bf16.gmra.mrb[0].mxu0 %v656
        %v1994 = vpop.f32.mrb[0].mxu0
        %v1995 = vadd.f32 %v1802, %v1994
        %v1996 = vpop.f32.mrb[0].mxu0
        %v1997 = vadd.f32 %v1804, %v1996
        %v1998 = vpop.f32.mrb[0].mxu0
        %v1999 = vadd.f32 %v1806, %v1998
        %v2000 = vpop.f32.mrb[0].mxu0
        %v2001 = vadd.f32 %v1808, %v2000
        %2002 = vmatprep.mubr.bf16.mxu0 %v665
        %2003 = vmatmul.mubr.bf16.gmra.mrb[0].mxu0 %v664
        %v2004 = vpop.f32.mrb[0].mxu0
        %v2005 = vadd.f32 %v1812, %v2004
        %v2006 = vpop.f32.mrb[0].mxu0
        %v2007 = vadd.f32 %v1814, %v2006
        %v2008 = vpop.f32.mrb[0].mxu0
        %v2009 = vadd.f32 %v1816, %v2008
        %v2010 = vpop.f32.mrb[0].mxu0
        %v2011 = vadd.f32 %v1818, %v2010
        %2012 = vmatprep.mubr.bf16.mxu0 %v673
        %2013 = vmatmul.mubr.bf16.gmra.mrb[0].mxu0 %v672
        %v2014 = vpop.f32.mrb[0].mxu0
        %v2015 = vadd.f32 %v1822, %v2014
        %v2016 = vpop.f32.mrb[0].mxu0
        %v2017 = vadd.f32 %v1824, %v2016
        %v2018 = vpop.f32.mrb[0].mxu0
        %v2019 = vadd.f32 %v1826, %v2018
        %v2020 = vpop.f32.mrb[0].mxu0
        %v2021 = vadd.f32 %v1828, %v2020
        %2022 = vmatprep.mubr.bf16.mxu0 %v681
        %2023 = vmatmul.mubr.bf16.gmra.mrb[0].mxu0 %v680
        %v2024 = vpop.f32.mrb[0].mxu0
        %v2025 = vadd.f32 %v1832, %v2024
        %v2026 = vpop.f32.mrb[0].mxu0
        %v2027 = vadd.f32 %v1834, %v2026
        %v2028 = vpop.f32.mrb[0].mxu0
        %v2029 = vadd.f32 %v1836, %v2028
        %v2030 = vpop.f32.mrb[0].mxu0
        %v2031 = vadd.f32 %v1838, %v2030
        %2032 = vmatprep.mubr.bf16.mxu0 %v689
        %2033 = vmatmul.mubr.bf16.gmra.mrb[0].mxu0 %v688
        %v2034 = vpop.f32.mrb[0].mxu0
        %v2035 = vadd.f32 %v1842, %v2034
        %v2036 = vpop.f32.mrb[0].mxu0
        %v2037 = vadd.f32 %v1844, %v2036
        %v2038 = vpop.f32.mrb[0].mxu0
        %v2039 = vadd.f32 %v1846, %v2038
        %v2040 = vpop.f32.mrb[0].mxu0
        %v2041 = vadd.f32 %v1848, %v2040
        %2042 = vmatprep.mubr.bf16.mxu0 %v697
        %2043 = vmatmul.mubr.bf16.gmra.mrb[0].mxu0 %v696
        %v2044 = vpop.f32.mrb[0].mxu0
        %v2045 = vadd.f32 %v1852, %v2044
        %v2046 = vpop.f32.mrb[0].mxu0
        %v2047 = vadd.f32 %v1854, %v2046
        %v2048 = vpop.f32.mrb[0].mxu0
        %v2049 = vadd.f32 %v1856, %v2048
        %v2050 = vpop.f32.mrb[0].mxu0
        %v2051 = vadd.f32 %v1858, %v2050
        %2052 = vmatprep.mubr.bf16.mxu0 %v705
        %2053 = vmatmul.mubr.bf16.gmra.mrb[0].mxu0 %v704
        %v2054 = vpop.f32.mrb[0].mxu0
        %v2055 = vadd.f32 %v1862, %v2054
        %v2056 = vpop.f32.mrb[0].mxu0
        %v2057 = vadd.f32 %v1864, %v2056
        %v2058 = vpop.f32.mrb[0].mxu0
        %v2059 = vadd.f32 %v1866, %v2058
        %v2060 = vpop.f32.mrb[0].mxu0
        %v2061 = vadd.f32 %v1868, %v2060
        %2062 = vmatprep.mubr.bf16.mxu0 %v713
        %2063 = vmatmul.mubr.bf16.gmra.mrb[0].mxu0 %v712
        %v2064 = vpop.f32.mrb[0].mxu0
        %v2065 = vadd.f32 %v1872, %v2064
        %v2066 = vpop.f32.mrb[0].mxu0
        %v2067 = vadd.f32 %v1874, %v2066
        %v2068 = vpop.f32.mrb[0].mxu0
        %v2069 = vadd.f32 %v1876, %v2068
        %v2070 = vpop.f32.mrb[0].mxu0
        %v2071 = vadd.f32 %v1878, %v2070
        %2072 = vmatprep.mubr.bf16.mxu0 %v721
        %2073 = vmatmul.mubr.bf16.gmra.mrb[0].mxu0 %v720
        %v2074 = vpop.f32.mrb[0].mxu0
        %v2075 = vadd.f32 %v1882, %v2074
        %v2076 = vpop.f32.mrb[0].mxu0
        %v2077 = vadd.f32 %v1884, %v2076
        %v2078 = vpop.f32.mrb[0].mxu0
        %v2079 = vadd.f32 %v1886, %v2078
        %v2080 = vpop.f32.mrb[0].mxu0
        %v2081 = vadd.f32 %v1888, %v2080
        %2082 = vdwg.mxu0
        %2083 = vmatprep.subr.bf16.mxu0 %v1345
        %2084 = vmatpush1.bf16.msra.mxu0 %v1344
        %2085 = vmatprep.subr.bf16.mxu0 %v1347
        %2086 = vmatpush1.bf16.msra.mxu0 %v1346
        %2087 = vmatprep.subr.bf16.mxu0 %v1349
        %2088 = vmatpush1.bf16.msra.mxu0 %v1348
        %2089 = vmatprep.subr.bf16.mxu0 %v1351
        %2090 = vmatpush1.bf16.msra.mxu0 %v1350
        %2091 = vmatprep.subr.bf16.mxu0 %v1353
        %2092 = vmatpush1.bf16.msra.mxu0 %v1352
        %2093 = vmatprep.subr.bf16.mxu0 %v1355
        %2094 = vmatpush1.bf16.msra.mxu0 %v1354
        %2095 = vmatprep.subr.bf16.mxu0 %v1357
        %2096 = vmatpush1.bf16.msra.mxu0 %v1356
        %2097 = vmatprep.subr.bf16.mxu0 %v1359
        %2098 = vmatpush1.bf16.msra.mxu0 %v1358
        %2099 = vmatprep.subr.bf16.mxu0 %v1361
        %2100 = vmatpush1.bf16.msra.mxu0 %v1360
        %2101 = vmatprep.subr.bf16.mxu0 %v1363
        %2102 = vmatpush1.bf16.msra.mxu0 %v1362
        %2103 = vmatprep.subr.bf16.mxu0 %v1365
        %2104 = vmatpush1.bf16.msra.mxu0 %v1364
        %2105 = vmatprep.subr.bf16.mxu0 %v1367
        %2106 = vmatpush1.bf16.msra.mxu0 %v1366
        %2107 = vmatprep.subr.bf16.mxu0 %v1369
        %2108 = vmatpush1.bf16.msra.mxu0 %v1368
        %2109 = vmatprep.subr.bf16.mxu0 %v1371
        %2110 = vmatpush1.bf16.msra.mxu0 %v1370
        %2111 = vmatprep.subr.bf16.mxu0 %v1373
        %2112 = vmatpush1.bf16.msra.mxu0 %v1372
        %2113 = vmatprep.subr.bf16.mxu0 %v1375
        %2114 = vmatpush1.bf16.msra.mxu0 %v1374
        %2115 = vmatprep.mubr.bf16.mxu0 %v603
        %2116 = vmatmul.mubr.bf16.gmra.mrb[0].mxu0 %v602
        %v2117 = vpop.f32.mrb[0].mxu0
        %v2118 = vadd.f32 %v1925, %v2117
        %v2119 = vpop.f32.mrb[0].mxu0
        %v2120 = vadd.f32 %v1927, %v2119
        %v2121 = vpop.f32.mrb[0].mxu0
        %v2122 = vadd.f32 %v1929, %v2121
        %v2123 = vpop.f32.mrb[0].mxu0
        %v2124 = vadd.f32 %v1931, %v2123
        %2125 = vmatprep.mubr.bf16.mxu0 %v611
        %2126 = vmatmul.mubr.bf16.gmra.mrb[0].mxu0 %v610
        %v2127 = vpop.f32.mrb[0].mxu0
        %v2128 = vadd.f32 %v1935, %v2127
        %v2129 = vpop.f32.mrb[0].mxu0
        %v2130 = vadd.f32 %v1937, %v2129
        %v2131 = vpop.f32.mrb[0].mxu0
        %v2132 = vadd.f32 %v1939, %v2131
        %v2133 = vpop.f32.mrb[0].mxu0
        %v2134 = vadd.f32 %v1941, %v2133
        %2135 = vmatprep.mubr.bf16.mxu0 %v619
        %2136 = vmatmul.mubr.bf16.gmra.mrb[0].mxu0 %v618
        %v2137 = vpop.f32.mrb[0].mxu0
        %v2138 = vadd.f32 %v1945, %v2137
        %v2139 = vpop.f32.mrb[0].mxu0
        %v2140 = vadd.f32 %v1947, %v2139
        %v2141 = vpop.f32.mrb[0].mxu0
        %v2142 = vadd.f32 %v1949, %v2141
        %v2143 = vpop.f32.mrb[0].mxu0
        %v2144 = vadd.f32 %v1951, %v2143
        %2145 = vmatprep.mubr.bf16.mxu0 %v627
        %2146 = vmatmul.mubr.bf16.gmra.mrb[0].mxu0 %v626
        %v2147 = vpop.f32.mrb[0].mxu0
        %v2148 = vadd.f32 %v1955, %v2147
        %v2149 = vpop.f32.mrb[0].mxu0
        %v2150 = vadd.f32 %v1957, %v2149
        %v2151 = vpop.f32.mrb[0].mxu0
        %v2152 = vadd.f32 %v1959, %v2151
        %v2153 = vpop.f32.mrb[0].mxu0
        %v2154 = vadd.f32 %v1961, %v2153
        %2155 = vmatprep.mubr.bf16.mxu0 %v635
        %2156 = vmatmul.mubr.bf16.gmra.mrb[0].mxu0 %v634
        %v2157 = vpop.f32.mrb[0].mxu0
        %v2158 = vadd.f32 %v1965, %v2157
        %v2159 = vpop.f32.mrb[0].mxu0
        %v2160 = vadd.f32 %v1967, %v2159
        %v2161 = vpop.f32.mrb[0].mxu0
        %v2162 = vadd.f32 %v1969, %v2161
        %v2163 = vpop.f32.mrb[0].mxu0
        %v2164 = vadd.f32 %v1971, %v2163
        %2165 = vmatprep.mubr.bf16.mxu0 %v643
        %2166 = vmatmul.mubr.bf16.gmra.mrb[0].mxu0 %v642
        %v2167 = vpop.f32.mrb[0].mxu0
        %v2168 = vadd.f32 %v1975, %v2167
        %v2169 = vpop.f32.mrb[0].mxu0
        %v2170 = vadd.f32 %v1977, %v2169
        %v2171 = vpop.f32.mrb[0].mxu0
        %v2172 = vadd.f32 %v1979, %v2171
        %v2173 = vpop.f32.mrb[0].mxu0
        %v2174 = vadd.f32 %v1981, %v2173
        %2175 = vmatprep.mubr.bf16.mxu0 %v651
        %2176 = vmatmul.mubr.bf16.gmra.mrb[0].mxu0 %v650
        %v2177 = vpop.f32.mrb[0].mxu0
        %v2178 = vadd.f32 %v1985, %v2177
        %v2179 = vpop.f32.mrb[0].mxu0
        %v2180 = vadd.f32 %v1987, %v2179
        %v2181 = vpop.f32.mrb[0].mxu0
        %v2182 = vadd.f32 %v1989, %v2181
        %v2183 = vpop.f32.mrb[0].mxu0
        %v2184 = vadd.f32 %v1991, %v2183
        %2185 = vmatprep.mubr.bf16.mxu0 %v659
        %2186 = vmatmul.mubr.bf16.gmra.mrb[0].mxu0 %v658
        %v2187 = vpop.f32.mrb[0].mxu0
        %v2188 = vadd.f32 %v1995, %v2187
        %v2189 = vpop.f32.mrb[0].mxu0
        %v2190 = vadd.f32 %v1997, %v2189
        %v2191 = vpop.f32.mrb[0].mxu0
        %v2192 = vadd.f32 %v1999, %v2191
        %v2193 = vpop.f32.mrb[0].mxu0
        %v2194 = vadd.f32 %v2001, %v2193
        %2195 = vmatprep.mubr.bf16.mxu0 %v667
        %2196 = vmatmul.mubr.bf16.gmra.mrb[0].mxu0 %v666
        %v2197 = vpop.f32.mrb[0].mxu0
        %v2198 = vadd.f32 %v2005, %v2197
        %v2199 = vpop.f32.mrb[0].mxu0
        %v2200 = vadd.f32 %v2007, %v2199
        %v2201 = vpop.f32.mrb[0].mxu0
        %v2202 = vadd.f32 %v2009, %v2201
        %v2203 = vpop.f32.mrb[0].mxu0
        %v2204 = vadd.f32 %v2011, %v2203
        %2205 = vmatprep.mubr.bf16.mxu0 %v675
        %2206 = vmatmul.mubr.bf16.gmra.mrb[0].mxu0 %v674
        %v2207 = vpop.f32.mrb[0].mxu0
        %v2208 = vadd.f32 %v2015, %v2207
        %v2209 = vpop.f32.mrb[0].mxu0
        %v2210 = vadd.f32 %v2017, %v2209
        %v2211 = vpop.f32.mrb[0].mxu0
        %v2212 = vadd.f32 %v2019, %v2211
        %v2213 = vpop.f32.mrb[0].mxu0
        %v2214 = vadd.f32 %v2021, %v2213
        %2215 = vmatprep.mubr.bf16.mxu0 %v683
        %2216 = vmatmul.mubr.bf16.gmra.mrb[0].mxu0 %v682
        %v2217 = vpop.f32.mrb[0].mxu0
        %v2218 = vadd.f32 %v2025, %v2217
        %v2219 = vpop.f32.mrb[0].mxu0
        %v2220 = vadd.f32 %v2027, %v2219
        %v2221 = vpop.f32.mrb[0].mxu0
        %v2222 = vadd.f32 %v2029, %v2221
        %v2223 = vpop.f32.mrb[0].mxu0
        %v2224 = vadd.f32 %v2031, %v2223
        %2225 = vmatprep.mubr.bf16.mxu0 %v691
        %2226 = vmatmul.mubr.bf16.gmra.mrb[0].mxu0 %v690
        %v2227 = vpop.f32.mrb[0].mxu0
        %v2228 = vadd.f32 %v2035, %v2227
        %v2229 = vpop.f32.mrb[0].mxu0
        %v2230 = vadd.f32 %v2037, %v2229
        %v2231 = vpop.f32.mrb[0].mxu0
        %v2232 = vadd.f32 %v2039, %v2231
        %v2233 = vpop.f32.mrb[0].mxu0
        %v2234 = vadd.f32 %v2041, %v2233
        %2235 = vmatprep.mubr.bf16.mxu0 %v699
        %2236 = vmatmul.mubr.bf16.gmra.mrb[0].mxu0 %v698
        %v2237 = vpop.f32.mrb[0].mxu0
        %v2238 = vadd.f32 %v2045, %v2237
        %v2239 = vpop.f32.mrb[0].mxu0
        %v2240 = vadd.f32 %v2047, %v2239
        %v2241 = vpop.f32.mrb[0].mxu0
        %v2242 = vadd.f32 %v2049, %v2241
        %v2243 = vpop.f32.mrb[0].mxu0
        %v2244 = vadd.f32 %v2051, %v2243
        %2245 = vmatprep.mubr.bf16.mxu0 %v707
        %2246 = vmatmul.mubr.bf16.gmra.mrb[0].mxu0 %v706
        %v2247 = vpop.f32.mrb[0].mxu0
        %v2248 = vadd.f32 %v2055, %v2247
        %v2249 = vpop.f32.mrb[0].mxu0
        %v2250 = vadd.f32 %v2057, %v2249
        %v2251 = vpop.f32.mrb[0].mxu0
        %v2252 = vadd.f32 %v2059, %v2251
        %v2253 = vpop.f32.mrb[0].mxu0
        %v2254 = vadd.f32 %v2061, %v2253
        %2255 = vmatprep.mubr.bf16.mxu0 %v715
        %2256 = vmatmul.mubr.bf16.gmra.mrb[0].mxu0 %v714
        %v2257 = vpop.f32.mrb[0].mxu0
        %v2258 = vadd.f32 %v2065, %v2257
        %v2259 = vpop.f32.mrb[0].mxu0
        %v2260 = vadd.f32 %v2067, %v2259
        %v2261 = vpop.f32.mrb[0].mxu0
        %v2262 = vadd.f32 %v2069, %v2261
        %v2263 = vpop.f32.mrb[0].mxu0
        %v2264 = vadd.f32 %v2071, %v2263
        %2265 = vmatprep.mubr.bf16.mxu0 %v723
        %2266 = vmatmul.mubr.bf16.gmra.mrb[0].mxu0 %v722
        %v2267 = vpop.f32.mrb[0].mxu0
        %v2268 = vadd.f32 %v2075, %v2267
        %v2269 = vpop.f32.mrb[0].mxu0
        %v2270 = vadd.f32 %v2077, %v2269
        %v2271 = vpop.f32.mrb[0].mxu0
        %v2272 = vadd.f32 %v2079, %v2271
        %v2273 = vpop.f32.mrb[0].mxu0
        %v2274 = vadd.f32 %v2081, %v2273
        %2275 = vdwg.mxu0
        %v2276 = vmax.f32 %v2118, 0.0
        %v2277 = vmax.f32 %v2120, 0.0
        %v2278 = vmax.f32 %v2122, 0.0
        %v2279 = vmax.f32 %v2124, 0.0
        %v2280 = vmax.f32 %v2128, 0.0
        %v2281 = vmax.f32 %v2130, 0.0
        %v2282 = vmax.f32 %v2132, 0.0
        %v2283 = vmax.f32 %v2134, 0.0
        %v2284 = vmax.f32 %v2138, 0.0
        %v2285 = vmax.f32 %v2140, 0.0
        %v2286 = vmax.f32 %v2142, 0.0
        %v2287 = vmax.f32 %v2144, 0.0
        %v2288 = vmax.f32 %v2148, 0.0
        %v2289 = vmax.f32 %v2150, 0.0
        %v2290 = vmax.f32 %v2152, 0.0
        %v2291 = vmax.f32 %v2154, 0.0
        %v2292 = vmax.f32 %v2158, 0.0
        %v2293 = vmax.f32 %v2160, 0.0
        %v2294 = vmax.f32 %v2162, 0.0
        %v2295 = vmax.f32 %v2164, 0.0
        %v2296 = vmax.f32 %v2168, 0.0
        %v2297 = vmax.f32 %v2170, 0.0
        %v2298 = vmax.f32 %v2172, 0.0
        %v2299 = vmax.f32 %v2174, 0.0
        %v2300 = vmax.f32 %v2178, 0.0
        %v2301 = vmax.f32 %v2180, 0.0
        %v2302 = vmax.f32 %v2182, 0.0
        %v2303 = vmax.f32 %v2184, 0.0
        %v2304 = vmax.f32 %v2188, 0.0
        %v2305 = vmax.f32 %v2190, 0.0
        %v2306 = vmax.f32 %v2192, 0.0
        %v2307 = vmax.f32 %v2194, 0.0
        %v2308 = vmax.f32 %v2198, 0.0
        %v2309 = vmax.f32 %v2200, 0.0
        %v2310 = vmax.f32 %v2202, 0.0
        %v2311 = vmax.f32 %v2204, 0.0
        %v2312 = vmax.f32 %v2208, 0.0
        %v2313 = vmax.f32 %v2210, 0.0
        %v2314 = vmax.f32 %v2212, 0.0
        %v2315 = vmax.f32 %v2214, 0.0
        %v2316 = vmax.f32 %v2218, 0.0
        %v2317 = vmax.f32 %v2220, 0.0
        %v2318 = vmax.f32 %v2222, 0.0
        %v2319 = vmax.f32 %v2224, 0.0
        %v2320 = vmax.f32 %v2228, 0.0
        %v2321 = vmax.f32 %v2230, 0.0
        %v2322 = vmax.f32 %v2232, 0.0
        %v2323 = vmax.f32 %v2234, 0.0
        %v2324 = vmax.f32 %v2238, 0.0
        %v2325 = vmax.f32 %v2240, 0.0
        %v2326 = vmax.f32 %v2242, 0.0
        %v2327 = vmax.f32 %v2244, 0.0
        %v2328 = vmax.f32 %v2248, 0.0
        %v2329 = vmax.f32 %v2250, 0.0
        %v2330 = vmax.f32 %v2252, 0.0
        %v2331 = vmax.f32 %v2254, 0.0
        %v2332 = vmax.f32 %v2258, 0.0
        %v2333 = vmax.f32 %v2260, 0.0
        %v2334 = vmax.f32 %v2262, 0.0
        %v2335 = vmax.f32 %v2264, 0.0
        %v2336 = vmax.f32 %v2268, 0.0
        %v2337 = vmax.f32 %v2270, 0.0
        %v2338 = vmax.f32 %v2272, 0.0
        %v2339 = vmax.f32 %v2274, 0.0
        %s2340 = scalar_lea.vmem [#allocation6], 1
        %v2341 = vld [vmem:[%s2340] ss:$4 sm:$0x3]
        %s2342 = scalar_lea.vmem [#allocation6], 2
        %v2343 = vld [vmem:[%s2342] ss:$4 sm:$0x3]
        %v2344 = vadd.f32 %v2276, %v2278
        %v2345 = vadd.f32 %v2344, %v2280
        %v2346 = vadd.f32 %v2345, %v2282
        %v2347 = vadd.f32 %v2346, %v2284
        %v2348 = vadd.f32 %v2347, %v2286
        %v2349 = vadd.f32 %v2348, %v2288
        %v2350 = vadd.f32 %v2349, %v2290
        %v2351 = vadd.f32 %v2350, %v2292
        %v2352 = vadd.f32 %v2351, %v2294
        %v2353 = vadd.f32 %v2352, %v2296
        %v2354 = vadd.f32 %v2353, %v2298
        %v2355 = vadd.f32 %v2354, %v2300
        %v2356 = vadd.f32 %v2355, %v2302
        %v2357 = vadd.f32 %v2356, %v2304
        %v2358 = vadd.f32 %v2357, %v2306
        %v2359 = vadd.f32 %v2358, %v2308
        %v2360 = vadd.f32 %v2359, %v2310
        %v2361 = vadd.f32 %v2360, %v2312
        %v2362 = vadd.f32 %v2361, %v2314
        %v2363 = vadd.f32 %v2362, %v2316
        %v2364 = vadd.f32 %v2363, %v2318
        %v2365 = vadd.f32 %v2364, %v2320
        %v2366 = vadd.f32 %v2365, %v2322
        %v2367 = vadd.f32 %v2366, %v2324
        %v2368 = vadd.f32 %v2367, %v2326
        %v2369 = vadd.f32 %v2368, %v2328
        %v2370 = vadd.f32 %v2369, %v2330
        %v2371 = vadd.f32 %v2370, %v2332
        %v2372 = vadd.f32 %v2371, %v2334
        %v2373 = vadd.f32 %v2372, %v2336
        %v2374 = vadd.f32 %v2373, %v2338
        %v2375 = vrot.slane %v2374, 4
        %v2376 = vadd.f32 %v2374, %v2375
        %v2377 = vrot.slane %v2376, 2
        %v2378 = vadd.f32 %v2376, %v2377
        %v2379 = vrot.slane %v2378, 1
        %v2380 = vadd.f32 %v2378, %v2379
        %v2381 = vadd.f32 %v2277, %v2279
        %v2382 = vadd.f32 %v2381, %v2281
        %v2383 = vadd.f32 %v2382, %v2283
        %v2384 = vadd.f32 %v2383, %v2285
        %v2385 = vadd.f32 %v2384, %v2287
        %v2386 = vadd.f32 %v2385, %v2289
        %v2387 = vadd.f32 %v2386, %v2291
        %v2388 = vadd.f32 %v2387, %v2293
        %v2389 = vadd.f32 %v2388, %v2295
        %v2390 = vadd.f32 %v2389, %v2297
        %v2391 = vadd.f32 %v2390, %v2299
        %v2392 = vadd.f32 %v2391, %v2301
        %v2393 = vadd.f32 %v2392, %v2303
        %v2394 = vadd.f32 %v2393, %v2305
        %v2395 = vadd.f32 %v2394, %v2307
        %v2396 = vadd.f32 %v2395, %v2309
        %v2397 = vadd.f32 %v2396, %v2311
        %v2398 = vadd.f32 %v2397, %v2313
        %v2399 = vadd.f32 %v2398, %v2315
        %v2400 = vadd.f32 %v2399, %v2317
        %v2401 = vadd.f32 %v2400, %v2319
        %v2402 = vadd.f32 %v2401, %v2321
        %v2403 = vadd.f32 %v2402, %v2323
        %v2404 = vadd.f32 %v2403, %v2325
        %v2405 = vadd.f32 %v2404, %v2327
        %v2406 = vadd.f32 %v2405, %v2329
        %v2407 = vadd.f32 %v2406, %v2331
        %v2408 = vadd.f32 %v2407, %v2333
        %v2409 = vadd.f32 %v2408, %v2335
        %v2410 = vadd.f32 %v2409, %v2337
        %v2411 = vadd.f32 %v2410, %v2339
        %v2412 = vrot.slane %v2411, 4
        %v2413 = vadd.f32 %v2411, %v2412
        %v2414 = vrot.slane %v2413, 2
        %v2415 = vadd.f32 %v2413, %v2414
        %v2416 = vrot.slane %v2415, 1
        %v2417 = vadd.f32 %v2415, %v2416
        %v2418 = vmul.f32 %v2276, %v2276
        %v2419 = vmul.f32 %v2277, %v2277
        %v2420 = vmul.f32 %v2278, %v2278
        %v2421 = vmul.f32 %v2279, %v2279
        %v2422 = vmul.f32 %v2280, %v2280
        %v2423 = vmul.f32 %v2281, %v2281
        %v2424 = vmul.f32 %v2282, %v2282
        %v2425 = vmul.f32 %v2283, %v2283
        %v2426 = vmul.f32 %v2284, %v2284
        %v2427 = vmul.f32 %v2285, %v2285
        %v2428 = vmul.f32 %v2286, %v2286
        %v2429 = vmul.f32 %v2287, %v2287
        %v2430 = vmul.f32 %v2288, %v2288
        %v2431 = vmul.f32 %v2289, %v2289
        %v2432 = vmul.f32 %v2290, %v2290
        %v2433 = vmul.f32 %v2291, %v2291
        %v2434 = vmul.f32 %v2292, %v2292
        %v2435 = vmul.f32 %v2293, %v2293
        %v2436 = vmul.f32 %v2294, %v2294
        %v2437 = vmul.f32 %v2295, %v2295
        %v2438 = vmul.f32 %v2296, %v2296
        %v2439 = vmul.f32 %v2297, %v2297
        %v2440 = vmul.f32 %v2298, %v2298
        %v2441 = vmul.f32 %v2299, %v2299
        %v2442 = vmul.f32 %v2300, %v2300
        %v2443 = vmul.f32 %v2301, %v2301
        %v2444 = vmul.f32 %v2302, %v2302
        %v2445 = vmul.f32 %v2303, %v2303
        %v2446 = vmul.f32 %v2304, %v2304
        %v2447 = vmul.f32 %v2305, %v2305
        %v2448 = vmul.f32 %v2306, %v2306
        %v2449 = vmul.f32 %v2307, %v2307
        %v2450 = vmul.f32 %v2308, %v2308
        %v2451 = vmul.f32 %v2309, %v2309
        %v2452 = vmul.f32 %v2310, %v2310
        %v2453 = vmul.f32 %v2311, %v2311
        %v2454 = vmul.f32 %v2312, %v2312
        %v2455 = vmul.f32 %v2313, %v2313
        %v2456 = vmul.f32 %v2314, %v2314
        %v2457 = vmul.f32 %v2315, %v2315
        %v2458 = vmul.f32 %v2316, %v2316
        %v2459 = vmul.f32 %v2317, %v2317
        %v2460 = vmul.f32 %v2318, %v2318
        %v2461 = vmul.f32 %v2319, %v2319
        %v2462 = vmul.f32 %v2320, %v2320
        %v2463 = vmul.f32 %v2321, %v2321
        %v2464 = vmul.f32 %v2322, %v2322
        %v2465 = vmul.f32 %v2323, %v2323
        %v2466 = vmul.f32 %v2324, %v2324
        %v2467 = vmul.f32 %v2325, %v2325
        %v2468 = vmul.f32 %v2326, %v2326
        %v2469 = vmul.f32 %v2327, %v2327
        %v2470 = vmul.f32 %v2328, %v2328
        %v2471 = vmul.f32 %v2329, %v2329
        %v2472 = vmul.f32 %v2330, %v2330
        %v2473 = vmul.f32 %v2331, %v2331
        %v2474 = vmul.f32 %v2332, %v2332
        %v2475 = vmul.f32 %v2333, %v2333
        %v2476 = vmul.f32 %v2334, %v2334
        %v2477 = vmul.f32 %v2335, %v2335
        %v2478 = vmul.f32 %v2336, %v2336
        %v2479 = vmul.f32 %v2337, %v2337
        %v2480 = vmul.f32 %v2338, %v2338
        %v2481 = vmul.f32 %v2339, %v2339
        %v2482 = vadd.f32 %v2418, %v2420
        %v2483 = vadd.f32 %v2482, %v2422
        %v2484 = vadd.f32 %v2483, %v2424
        %v2485 = vadd.f32 %v2484, %v2426
        %v2486 = vadd.f32 %v2485, %v2428
        %v2487 = vadd.f32 %v2486, %v2430
        %v2488 = vadd.f32 %v2487, %v2432
        %v2489 = vadd.f32 %v2488, %v2434
        %v2490 = vadd.f32 %v2489, %v2436
        %v2491 = vadd.f32 %v2490, %v2438
        %v2492 = vadd.f32 %v2491, %v2440
        %v2493 = vadd.f32 %v2492, %v2442
        %v2494 = vadd.f32 %v2493, %v2444
        %v2495 = vadd.f32 %v2494, %v2446
        %v2496 = vadd.f32 %v2495, %v2448
        %v2497 = vadd.f32 %v2496, %v2450
        %v2498 = vadd.f32 %v2497, %v2452
        %v2499 = vadd.f32 %v2498, %v2454
        %v2500 = vadd.f32 %v2499, %v2456
        %v2501 = vadd.f32 %v2500, %v2458
        %v2502 = vadd.f32 %v2501, %v2460
        %v2503 = vadd.f32 %v2502, %v2462
        %v2504 = vadd.f32 %v2503, %v2464
        %v2505 = vadd.f32 %v2504, %v2466
        %v2506 = vadd.f32 %v2505, %v2468
        %v2507 = vadd.f32 %v2506, %v2470
        %v2508 = vadd.f32 %v2507, %v2472
        %v2509 = vadd.f32 %v2508, %v2474
        %v2510 = vadd.f32 %v2509, %v2476
        %v2511 = vadd.f32 %v2510, %v2478
        %v2512 = vadd.f32 %v2511, %v2480
        %v2513 = vrot.slane %v2512, 4
        %v2514 = vadd.f32 %v2512, %v2513
        %v2515 = vrot.slane %v2514, 2
        %v2516 = vadd.f32 %v2514, %v2515
        %v2517 = vrot.slane %v2516, 1
        %v2518 = vadd.f32 %v2516, %v2517
        %v2519 = vadd.f32 %v2419, %v2421
        %v2520 = vadd.f32 %v2519, %v2423
        %v2521 = vadd.f32 %v2520, %v2425
        %v2522 = vadd.f32 %v2521, %v2427
        %v2523 = vadd.f32 %v2522, %v2429
        %v2524 = vadd.f32 %v2523, %v2431
        %v2525 = vadd.f32 %v2524, %v2433
        %v2526 = vadd.f32 %v2525, %v2435
        %v2527 = vadd.f32 %v2526, %v2437
        %v2528 = vadd.f32 %v2527, %v2439
        %v2529 = vadd.f32 %v2528, %v2441
        %v2530 = vadd.f32 %v2529, %v2443
        %v2531 = vadd.f32 %v2530, %v2445
        %v2532 = vadd.f32 %v2531, %v2447
        %v2533 = vadd.f32 %v2532, %v2449
        %v2534 = vadd.f32 %v2533, %v2451
        %v2535 = vadd.f32 %v2534, %v2453
        %v2536 = vadd.f32 %v2535, %v2455
        %v2537 = vadd.f32 %v2536, %v2457
        %v2538 = vadd.f32 %v2537, %v2459
        %v2539 = vadd.f32 %v2538, %v2461
        %v2540 = vadd.f32 %v2539, %v2463
        %v2541 = vadd.f32 %v2540, %v2465
        %v2542 = vadd.f32 %v2541, %v2467
        %v2543 = vadd.f32 %v2542, %v2469
        %v2544 = vadd.f32 %v2543, %v2471
        %v2545 = vadd.f32 %v2544, %v2473
        %v2546 = vadd.f32 %v2545, %v2475
        %v2547 = vadd.f32 %v2546, %v2477
        %v2548 = vadd.f32 %v2547, %v2479
        %v2549 = vadd.f32 %v2548, %v2481
        %v2550 = vrot.slane %v2549, 4
        %v2551 = vadd.f32 %v2549, %v2550
        %v2552 = vrot.slane %v2551, 2
        %v2553 = vadd.f32 %v2551, %v2552
        %v2554 = vrot.slane %v2553, 1
        %v2555 = vadd.f32 %v2553, %v2554
        %v2556 = vmul.f32 %v2380, 0.00390625
        %v2557 = vmul.f32 %v2417, 0.00390625
        %v2558 = vmul.f32 %v2518, 0.00390625
        %v2559 = vmul.f32 %v2555, 0.00390625
        %v2560 = vmul.f32 %v2556, %v2556
        %v2561 = vmul.f32 %v2557, %v2557
        %v2562 = vsub.f32 %v2558, %v2560
        %v2563 = vsub.f32 %v2559, %v2561
        %v2564 = vmax.f32 %v2562, 0.0
        %v2565 = vmax.f32 %v2563, 0.0
        %v2566 = vadd.f32 %v2564, 1e-05
        %v2567 = vadd.f32 %v2565, 1e-05
        %v2568 = vrsqrt.pop %v2566
        %v2569 = vrsqrt.pop %v2567
        %v2572 = vcombine.low %v2568, %v2569
        %v2574 = vunpack.c.l.s4 1966171168
        %v2575 = vunpack.c.0.s8 %v2574
        %v2576 = vlaneseq
        %v2577 = vshrl.u32 %v2576, 7
        %v2578 = vsub.s32 %v2575, %v2577
        %v2579 = vrot.slane %v2572, %v2578
        %v2581 = vunpack.c.l.s4 1966171168
        %v2582 = vunpack.c.0.s8 %v2581
        %v2583 = vlaneseq
        %v2584 = vshrl.u32 %v2583, 7
        %v2585 = vsub.s32 %v2582, %v2584
        %v2586 = vrot.slane %v2579, %v2585
        %v2588 = vmul.f32 %v2341, %v2586
        %v2590 = vlaneseq
        %v2591 = vshrl.u32 %v2590, 7
        %v2592 = vsub.s32 0, %v2591
        %v2593 = vrot.slane %v2588, %v2592
        %v2594 = vlaneseq
        %v2595 = vshrl.u32 %v2594, 7
        %v2596 = vsub.s32 1, %v2595
        %v2597 = vrot.slane %v2588, %v2596
        %v2600 = vmul.f32 %v2556, %v2593
        %v2601 = vmul.f32 %v2557, %v2597
        %v2604 = vcombine.low %v2600, %v2601
        %v2606 = vunpack.c.l.s4 1966171168
        %v2607 = vunpack.c.0.s8 %v2606
        %v2608 = vlaneseq
        %v2609 = vshrl.u32 %v2608, 7
        %v2610 = vsub.s32 %v2607, %v2609
        %v2611 = vrot.slane %v2604, %v2610
        %v2613 = vunpack.c.l.s4 1966171168
        %v2614 = vunpack.c.0.s8 %v2613
        %v2615 = vlaneseq
        %v2616 = vshrl.u32 %v2615, 7
        %v2617 = vsub.s32 %v2614, %v2616
        %v2618 = vrot.slane %v2611, %v2617
        %v2620 = vsub.f32 %v2343, %v2618
        %v2621 = vmul.f32 %v2276, %v2593
        %v2622 = vmul.f32 %v2277, %v2597
        %v2623 = vmul.f32 %v2278, %v2593
        %v2624 = vmul.f32 %v2279, %v2597
        %v2625 = vmul.f32 %v2280, %v2593
        %v2626 = vmul.f32 %v2281, %v2597
        %v2627 = vmul.f32 %v2282, %v2593
        %v2628 = vmul.f32 %v2283, %v2597
        %v2629 = vmul.f32 %v2284, %v2593
        %v2630 = vmul.f32 %v2285, %v2597
        %v2631 = vmul.f32 %v2286, %v2593
        %v2632 = vmul.f32 %v2287, %v2597
        %v2633 = vmul.f32 %v2288, %v2593
        %v2634 = vmul.f32 %v2289, %v2597
        %v2635 = vmul.f32 %v2290, %v2593
        %v2636 = vmul.f32 %v2291, %v2597
        %v2637 = vmul.f32 %v2292, %v2593
        %v2638 = vmul.f32 %v2293, %v2597
        %v2639 = vmul.f32 %v2294, %v2593
        %v2640 = vmul.f32 %v2295, %v2597
        %v2641 = vmul.f32 %v2296, %v2593
        %v2642 = vmul.f32 %v2297, %v2597
        %v2643 = vmul.f32 %v2298, %v2593
        %v2644 = vmul.f32 %v2299, %v2597
        %v2645 = vmul.f32 %v2300, %v2593
        %v2646 = vmul.f32 %v2301, %v2597
        %v2647 = vmul.f32 %v2302, %v2593
        %v2648 = vmul.f32 %v2303, %v2597
        %v2649 = vmul.f32 %v2304, %v2593
        %v2650 = vmul.f32 %v2305, %v2597
        %v2651 = vmul.f32 %v2306, %v2593
        %v2652 = vmul.f32 %v2307, %v2597
        %v2653 = vmul.f32 %v2308, %v2593
        %v2654 = vmul.f32 %v2309, %v2597
        %v2655 = vmul.f32 %v2310, %v2593
        %v2656 = vmul.f32 %v2311, %v2597
        %v2657 = vmul.f32 %v2312, %v2593
        %v2658 = vmul.f32 %v2313, %v2597
        %v2659 = vmul.f32 %v2314, %v2593
        %v2660 = vmul.f32 %v2315, %v2597
        %v2661 = vmul.f32 %v2316, %v2593
        %v2662 = vmul.f32 %v2317, %v2597
        %v2663 = vmul.f32 %v2318, %v2593
        %v2664 = vmul.f32 %v2319, %v2597
        %v2665 = vmul.f32 %v2320, %v2593
        %v2666 = vmul.f32 %v2321, %v2597
        %v2667 = vmul.f32 %v2322, %v2593
        %v2668 = vmul.f32 %v2323, %v2597
        %v2669 = vmul.f32 %v2324, %v2593
        %v2670 = vmul.f32 %v2325, %v2597
        %v2671 = vmul.f32 %v2326, %v2593
        %v2672 = vmul.f32 %v2327, %v2597
        %v2673 = vmul.f32 %v2328, %v2593
        %v2674 = vmul.f32 %v2329, %v2597
        %v2675 = vmul.f32 %v2330, %v2593
        %v2676 = vmul.f32 %v2331, %v2597
        %v2677 = vmul.f32 %v2332, %v2593
        %v2678 = vmul.f32 %v2333, %v2597
        %v2679 = vmul.f32 %v2334, %v2593
        %v2680 = vmul.f32 %v2335, %v2597
        %v2681 = vmul.f32 %v2336, %v2593
        %v2682 = vmul.f32 %v2337, %v2597
        %v2683 = vmul.f32 %v2338, %v2593
        %v2684 = vmul.f32 %v2339, %v2597
        %v2686 = vlaneseq
        %v2687 = vshrl.u32 %v2686, 7
        %v2688 = vsub.s32 0, %v2687
        %v2689 = vrot.slane %v2620, %v2688
        %v2690 = vlaneseq
        %v2691 = vshrl.u32 %v2690, 7
        %v2692 = vsub.s32 1, %v2691
        %v2693 = vrot.slane %v2620, %v2692
        %v2696 = vadd.f32 %v2621, %v2689
        %v2697 = vadd.f32 %v2622, %v2693
        %v2698 = vadd.f32 %v2623, %v2689
        %v2699 = vadd.f32 %v2624, %v2693
        %v2700 = vadd.f32 %v2625, %v2689
        %v2701 = vadd.f32 %v2626, %v2693
        %v2702 = vadd.f32 %v2627, %v2689
        %v2703 = vadd.f32 %v2628, %v2693
        %v2704 = vadd.f32 %v2629, %v2689
        %v2705 = vadd.f32 %v2630, %v2693
        %v2706 = vadd.f32 %v2631, %v2689
        %v2707 = vadd.f32 %v2632, %v2693
        %v2708 = vadd.f32 %v2633, %v2689
        %v2709 = vadd.f32 %v2634, %v2693
        %v2710 = vadd.f32 %v2635, %v2689
        %v2711 = vadd.f32 %v2636, %v2693
        %v2712 = vadd.f32 %v2637, %v2689
        %v2713 = vadd.f32 %v2638, %v2693
        %v2714 = vadd.f32 %v2639, %v2689
        %v2715 = vadd.f32 %v2640, %v2693
        %v2716 = vadd.f32 %v2641, %v2689
        %v2717 = vadd.f32 %v2642, %v2693
        %v2718 = vadd.f32 %v2643, %v2689
        %v2719 = vadd.f32 %v2644, %v2693
        %v2720 = vadd.f32 %v2645, %v2689
        %v2721 = vadd.f32 %v2646, %v2693
        %v2722 = vadd.f32 %v2647, %v2689
        %v2723 = vadd.f32 %v2648, %v2693
        %v2724 = vadd.f32 %v2649, %v2689
        %v2725 = vadd.f32 %v2650, %v2693
        %v2726 = vadd.f32 %v2651, %v2689
        %v2727 = vadd.f32 %v2652, %v2693
        %v2728 = vadd.f32 %v2653, %v2689
        %v2729 = vadd.f32 %v2654, %v2693
        %v2730 = vadd.f32 %v2655, %v2689
        %v2731 = vadd.f32 %v2656, %v2693
        %v2732 = vadd.f32 %v2657, %v2689
        %v2733 = vadd.f32 %v2658, %v2693
        %v2734 = vadd.f32 %v2659, %v2689
        %v2735 = vadd.f32 %v2660, %v2693
        %v2736 = vadd.f32 %v2661, %v2689
        %v2737 = vadd.f32 %v2662, %v2693
        %v2738 = vadd.f32 %v2663, %v2689
        %v2739 = vadd.f32 %v2664, %v2693
        %v2740 = vadd.f32 %v2665, %v2689
        %v2741 = vadd.f32 %v2666, %v2693
        %v2742 = vadd.f32 %v2667, %v2689
        %v2743 = vadd.f32 %v2668, %v2693
        %v2744 = vadd.f32 %v2669, %v2689
        %v2745 = vadd.f32 %v2670, %v2693
        %v2746 = vadd.f32 %v2671, %v2689
        %v2747 = vadd.f32 %v2672, %v2693
        %v2748 = vadd.f32 %v2673, %v2689
        %v2749 = vadd.f32 %v2674, %v2693
        %v2750 = vadd.f32 %v2675, %v2689
        %v2751 = vadd.f32 %v2676, %v2693
        %v2752 = vadd.f32 %v2677, %v2689
        %v2753 = vadd.f32 %v2678, %v2693
        %v2754 = vadd.f32 %v2679, %v2689
        %v2755 = vadd.f32 %v2680, %v2693
        %v2756 = vadd.f32 %v2681, %v2689
        %v2757 = vadd.f32 %v2682, %v2693
        %v2758 = vadd.f32 %v2683, %v2689
        %v2759 = vadd.f32 %v2684, %v2693
        %v2760 = vpack.c.bf16 %v2698, %v2696
        %v2761 = vpack.c.bf16 %v2699, %v2697
        %v2762 = vpack.c.bf16 %v2702, %v2700
        %v2763 = vpack.c.bf16 %v2703, %v2701
        %v2764 = vpack.c.bf16 %v2706, %v2704
        %v2765 = vpack.c.bf16 %v2707, %v2705
        %v2766 = vpack.c.bf16 %v2710, %v2708
        %v2767 = vpack.c.bf16 %v2711, %v2709
        %v2768 = vpack.c.bf16 %v2714, %v2712
        %v2769 = vpack.c.bf16 %v2715, %v2713
        %v2770 = vpack.c.bf16 %v2718, %v2716
        %v2771 = vpack.c.bf16 %v2719, %v2717
        %v2772 = vpack.c.bf16 %v2722, %v2720
        %v2773 = vpack.c.bf16 %v2723, %v2721
        %v2774 = vpack.c.bf16 %v2726, %v2724
        %v2775 = vpack.c.bf16 %v2727, %v2725
        %v2776 = vpack.c.bf16 %v2730, %v2728
        %v2777 = vpack.c.bf16 %v2731, %v2729
        %v2778 = vpack.c.bf16 %v2734, %v2732
        %v2779 = vpack.c.bf16 %v2735, %v2733
        %v2780 = vpack.c.bf16 %v2738, %v2736
        %v2781 = vpack.c.bf16 %v2739, %v2737
        %v2782 = vpack.c.bf16 %v2742, %v2740
        %v2783 = vpack.c.bf16 %v2743, %v2741
        %v2784 = vpack.c.bf16 %v2746, %v2744
        %v2785 = vpack.c.bf16 %v2747, %v2745
        %v2786 = vpack.c.bf16 %v2750, %v2748
        %v2787 = vpack.c.bf16 %v2751, %v2749
        %v2788 = vpack.c.bf16 %v2754, %v2752
        %v2789 = vpack.c.bf16 %v2755, %v2753
        %v2790 = vpack.c.bf16 %v2758, %v2756
        %v2791 = vpack.c.bf16 %v2759, %v2757
        %v2792 = vld [vmem:[#allocation7] sm:$0xf]
        %v2793 = vld [vmem:[#allocation7 + $0x4] sm:$0xf]
        %v2794 = vld [vmem:[#allocation7 + $0x8] sm:$0xf]
        %v2795 = vld [vmem:[#allocation7 + $0xc] sm:$0xf]
        %v2796 = vld [vmem:[#allocation7 + $0x10] sm:$0xf]
        %v2797 = vld [vmem:[#allocation7 + $0x14] sm:$0xf]
        %v2798 = vld [vmem:[#allocation7 + $0x18] sm:$0xf]
        %v2799 = vld [vmem:[#allocation7 + $0x1c] sm:$0xf]
        %v2800 = vld [vmem:[#allocation7 + $0x20] sm:$0xf]
        %v2801 = vld [vmem:[#allocation7 + $0x24] sm:$0xf]
        %v2802 = vld [vmem:[#allocation7 + $0x28] sm:$0xf]
        %v2803 = vld [vmem:[#allocation7 + $0x2c] sm:$0xf]
        %v2804 = vld [vmem:[#allocation7 + $0x30] sm:$0xf]
        %v2805 = vld [vmem:[#allocation7 + $0x34] sm:$0xf]
        %v2806 = vld [vmem:[#allocation7 + $0x38] sm:$0xf]
        %v2807 = vld [vmem:[#allocation7 + $0x3c] sm:$0xf]
        %v2808 = vld [vmem:[#allocation7 + $0x40] sm:$0xf]
        %v2809 = vld [vmem:[#allocation7 + $0x44] sm:$0xf]
        %v2810 = vld [vmem:[#allocation7 + $0x48] sm:$0xf]
        %v2811 = vld [vmem:[#allocation7 + $0x4c] sm:$0xf]
        %v2812 = vld [vmem:[#allocation7 + $0x50] sm:$0xf]
        %v2813 = vld [vmem:[#allocation7 + $0x54] sm:$0xf]
        %v2814 = vld [vmem:[#allocation7 + $0x58] sm:$0xf]
        %v2815 = vld [vmem:[#allocation7 + $0x5c] sm:$0xf]
        %v2816 = vld [vmem:[#allocation7 + $0x60] sm:$0xf]
        %v2817 = vld [vmem:[#allocation7 + $0x64] sm:$0xf]
        %v2818 = vld [vmem:[#allocation7 + $0x68] sm:$0xf]
        %v2819 = vld [vmem:[#allocation7 + $0x6c] sm:$0xf]
        %v2820 = vld [vmem:[#allocation7 + $0x70] sm:$0xf]
        %v2821 = vld [vmem:[#allocation7 + $0x74] sm:$0xf]
        %v2822 = vld [vmem:[#allocation7 + $0x78] sm:$0xf]
        %v2823 = vld [vmem:[#allocation7 + $0x7c] sm:$0xf]
        %v2824 = vld [vmem:[#allocation9] sm:$0x1]
        %v2825 = vlaneseq
        %v2826 = vshrl.u32 %v2825, 7
        %v2827 = vsub.s32 0, %v2826
        %v2828 = vrot.slane %v2824, %v2827
        %v2861 = vunpack.c.l.b16 %v2792
        %v2862 = vunpack.c.l.b16 %v2793
        %v2863 = vunpack.c.l.b16 %v2794
        %v2864 = vunpack.c.l.b16 %v2795
        %v2865 = vunpack.c.l.b16 %v2796
        %v2866 = vunpack.c.l.b16 %v2797
        %v2867 = vunpack.c.l.b16 %v2798
        %v2868 = vunpack.c.l.b16 %v2799
        %v2869 = vunpack.c.l.b16 %v2800
        %v2870 = vunpack.c.l.b16 %v2801
        %v2871 = vunpack.c.l.b16 %v2802
        %v2872 = vunpack.c.l.b16 %v2803
        %v2873 = vunpack.c.l.b16 %v2804
        %v2874 = vunpack.c.l.b16 %v2805
        %v2875 = vunpack.c.l.b16 %v2806
        %v2876 = vunpack.c.l.b16 %v2807
        %v2877 = vunpack.c.l.b16 %v2808
        %v2878 = vunpack.c.l.b16 %v2809
        %v2879 = vunpack.c.l.b16 %v2810
        %v2880 = vunpack.c.l.b16 %v2811
        %v2881 = vunpack.c.l.b16 %v2812
        %v2882 = vunpack.c.l.b16 %v2813
        %v2883 = vunpack.c.l.b16 %v2814
        %v2884 = vunpack.c.l.b16 %v2815
        %v2885 = vunpack.c.l.b16 %v2816
        %v2886 = vunpack.c.l.b16 %v2817
        %v2887 = vunpack.c.l.b16 %v2818
        %v2888 = vunpack.c.l.b16 %v2819
        %v2889 = vunpack.c.l.b16 %v2820
        %v2890 = vunpack.c.l.b16 %v2821
        %v2891 = vunpack.c.l.b16 %v2822
        %v2892 = vunpack.c.l.b16 %v2823
        %v2893 = vpack.c.b16 %v2862, %v2861
        %v2894 = vpack.c.b16 %v2864, %v2863
        %v2895 = vpack.c.b16 %v2866, %v2865
        %v2896 = vpack.c.b16 %v2868, %v2867
        %v2897 = vpack.c.b16 %v2870, %v2869
        %v2898 = vpack.c.b16 %v2872, %v2871
        %v2899 = vpack.c.b16 %v2874, %v2873
        %v2900 = vpack.c.b16 %v2876, %v2875
        %v2901 = vpack.c.b16 %v2878, %v2877
        %v2902 = vpack.c.b16 %v2880, %v2879
        %v2903 = vpack.c.b16 %v2882, %v2881
        %v2904 = vpack.c.b16 %v2884, %v2883
        %v2905 = vpack.c.b16 %v2886, %v2885
        %v2906 = vpack.c.b16 %v2888, %v2887
        %v2907 = vpack.c.b16 %v2890, %v2889
        %v2908 = vpack.c.b16 %v2892, %v2891
        %2925 = vmatprep.subr.bf16.mxu0 0
        %2926 = vmatpush1.bf16.msra.mxu0 %v2893
        %2927 = vmatprep.subr.bf16.mxu0 0
        %2928 = vmatpush1.bf16.msra.mxu0 %v2894
        %2929 = vmatprep.subr.bf16.mxu0 0
        %2930 = vmatpush1.bf16.msra.mxu0 %v2895
        %2931 = vmatprep.subr.bf16.mxu0 0
        %2932 = vmatpush1.bf16.msra.mxu0 %v2896
        %2933 = vmatprep.subr.bf16.mxu0 0
        %2934 = vmatpush1.bf16.msra.mxu0 %v2897
        %2935 = vmatprep.subr.bf16.mxu0 0
        %2936 = vmatpush1.bf16.msra.mxu0 %v2898
        %2937 = vmatprep.subr.bf16.mxu0 0
        %2938 = vmatpush1.bf16.msra.mxu0 %v2899
        %2939 = vmatprep.subr.bf16.mxu0 0
        %2940 = vmatpush1.bf16.msra.mxu0 %v2900
        %2941 = vmatprep.subr.bf16.mxu0 0
        %2942 = vmatpush1.bf16.msra.mxu0 %v2901
        %2943 = vmatprep.subr.bf16.mxu0 0
        %2944 = vmatpush1.bf16.msra.mxu0 %v2902
        %2945 = vmatprep.subr.bf16.mxu0 0
        %2946 = vmatpush1.bf16.msra.mxu0 %v2903
        %2947 = vmatprep.subr.bf16.mxu0 0
        %2948 = vmatpush1.bf16.msra.mxu0 %v2904
        %2949 = vmatprep.subr.bf16.mxu0 0
        %2950 = vmatpush1.bf16.msra.mxu0 %v2905
        %2951 = vmatprep.subr.bf16.mxu0 0
        %2952 = vmatpush1.bf16.msra.mxu0 %v2906
        %2953 = vmatprep.subr.bf16.mxu0 0
        %2954 = vmatpush1.bf16.msra.mxu0 %v2907
        %2955 = vmatprep.subr.bf16.mxu0 0
        %2956 = vmatpush1.bf16.msra.mxu0 %v2908
        %2957 = vmatprep.mubr.bf16.mxu0 %v2761
        %2958 = vmatmul.mubr.bf16.gmra.mrb[0].mxu0 %v2760
        %v2959 = vpop.f32.mrb[0].mxu0
        %v2960 = vadd.f32 %v2828, %v2959
        %v2961 = vpop.f32.mrb[0].mxu0
        %v2962 = vpop.f32.mrb[0].mxu0
        %v2963 = vadd.f32 %v2828, %v2962
        %v2964 = vpop.f32.mrb[0].mxu0
        %2965 = vmatprep.mubr.bf16.mxu0 %v2763
        %2966 = vmatmul.mubr.bf16.gmra.mrb[0].mxu0 %v2762
        %v2967 = vpop.f32.mrb[0].mxu0
        %v2968 = vadd.f32 %v2828, %v2967
        %v2969 = vpop.f32.mrb[0].mxu0
        %v2970 = vpop.f32.mrb[0].mxu0
        %v2971 = vadd.f32 %v2828, %v2970
        %v2972 = vpop.f32.mrb[0].mxu0
        %2973 = vmatprep.mubr.bf16.mxu0 %v2765
        %2974 = vmatmul.mubr.bf16.gmra.mrb[0].mxu0 %v2764
        %v2975 = vpop.f32.mrb[0].mxu0
        %v2976 = vadd.f32 %v2828, %v2975
        %v2977 = vpop.f32.mrb[0].mxu0
        %v2978 = vpop.f32.mrb[0].mxu0
        %v2979 = vadd.f32 %v2828, %v2978
        %v2980 = vpop.f32.mrb[0].mxu0
        %2981 = vmatprep.mubr.bf16.mxu0 %v2767
        %2982 = vmatmul.mubr.bf16.gmra.mrb[0].mxu0 %v2766
        %v2983 = vpop.f32.mrb[0].mxu0
        %v2984 = vadd.f32 %v2828, %v2983
        %v2985 = vpop.f32.mrb[0].mxu0
        %v2986 = vpop.f32.mrb[0].mxu0
        %v2987 = vadd.f32 %v2828, %v2986
        %v2988 = vpop.f32.mrb[0].mxu0
        %2989 = vmatprep.mubr.bf16.mxu0 %v2769
        %2990 = vmatmul.mubr.bf16.gmra.mrb[0].mxu0 %v2768
        %v2991 = vpop.f32.mrb[0].mxu0
        %v2992 = vadd.f32 %v2828, %v2991
        %v2993 = vpop.f32.mrb[0].mxu0
        %v2994 = vpop.f32.mrb[0].mxu0
        %v2995 = vadd.f32 %v2828, %v2994
        %v2996 = vpop.f32.mrb[0].mxu0
        %2997 = vmatprep.mubr.bf16.mxu0 %v2771
        %2998 = vmatmul.mubr.bf16.gmra.mrb[0].mxu0 %v2770
        %v2999 = vpop.f32.mrb[0].mxu0
        %v3000 = vadd.f32 %v2828, %v2999
        %v3001 = vpop.f32.mrb[0].mxu0
        %v3002 = vpop.f32.mrb[0].mxu0
        %v3003 = vadd.f32 %v2828, %v3002
        %v3004 = vpop.f32.mrb[0].mxu0
        %3005 = vmatprep.mubr.bf16.mxu0 %v2773
        %3006 = vmatmul.mubr.bf16.gmra.mrb[0].mxu0 %v2772
        %v3007 = vpop.f32.mrb[0].mxu0
        %v3008 = vadd.f32 %v2828, %v3007
        %v3009 = vpop.f32.mrb[0].mxu0
        %v3010 = vpop.f32.mrb[0].mxu0
        %v3011 = vadd.f32 %v2828, %v3010
        %v3012 = vpop.f32.mrb[0].mxu0
        %3013 = vmatprep.mubr.bf16.mxu0 %v2775
        %3014 = vmatmul.mubr.bf16.gmra.mrb[0].mxu0 %v2774
        %v3015 = vpop.f32.mrb[0].mxu0
        %v3016 = vadd.f32 %v2828, %v3015
        %v3017 = vpop.f32.mrb[0].mxu0
        %v3018 = vpop.f32.mrb[0].mxu0
        %v3019 = vadd.f32 %v2828, %v3018
        %v3020 = vpop.f32.mrb[0].mxu0
        %3021 = vmatprep.mubr.bf16.mxu0 %v2777
        %3022 = vmatmul.mubr.bf16.gmra.mrb[0].mxu0 %v2776
        %v3023 = vpop.f32.mrb[0].mxu0
        %v3024 = vadd.f32 %v2828, %v3023
        %v3025 = vpop.f32.mrb[0].mxu0
        %v3026 = vpop.f32.mrb[0].mxu0
        %v3027 = vadd.f32 %v2828, %v3026
        %v3028 = vpop.f32.mrb[0].mxu0
        %3029 = vmatprep.mubr.bf16.mxu0 %v2779
        %3030 = vmatmul.mubr.bf16.gmra.mrb[0].mxu0 %v2778
        %v3031 = vpop.f32.mrb[0].mxu0
        %v3032 = vadd.f32 %v2828, %v3031
        %v3033 = vpop.f32.mrb[0].mxu0
        %v3034 = vpop.f32.mrb[0].mxu0
        %v3035 = vadd.f32 %v2828, %v3034
        %v3036 = vpop.f32.mrb[0].mxu0
        %3037 = vmatprep.mubr.bf16.mxu0 %v2781
        %3038 = vmatmul.mubr.bf16.gmra.mrb[0].mxu0 %v2780
        %v3039 = vpop.f32.mrb[0].mxu0
        %v3040 = vadd.f32 %v2828, %v3039
        %v3041 = vpop.f32.mrb[0].mxu0
        %v3042 = vpop.f32.mrb[0].mxu0
        %v3043 = vadd.f32 %v2828, %v3042
        %v3044 = vpop.f32.mrb[0].mxu0
        %3045 = vmatprep.mubr.bf16.mxu0 %v2783
        %3046 = vmatmul.mubr.bf16.gmra.mrb[0].mxu0 %v2782
        %v3047 = vpop.f32.mrb[0].mxu0
        %v3048 = vadd.f32 %v2828, %v3047
        %v3049 = vpop.f32.mrb[0].mxu0
        %v3050 = vpop.f32.mrb[0].mxu0
        %v3051 = vadd.f32 %v2828, %v3050
        %v3052 = vpop.f32.mrb[0].mxu0
        %3053 = vmatprep.mubr.bf16.mxu0 %v2785
        %3054 = vmatmul.mubr.bf16.gmra.mrb[0].mxu0 %v2784
        %v3055 = vpop.f32.mrb[0].mxu0
        %v3056 = vadd.f32 %v2828, %v3055
        %v3057 = vpop.f32.mrb[0].mxu0
        %v3058 = vpop.f32.mrb[0].mxu0
        %v3059 = vadd.f32 %v2828, %v3058
        %v3060 = vpop.f32.mrb[0].mxu0
        %3061 = vmatprep.mubr.bf16.mxu0 %v2787
        %3062 = vmatmul.mubr.bf16.gmra.mrb[0].mxu0 %v2786
        %v3063 = vpop.f32.mrb[0].mxu0
        %v3064 = vadd.f32 %v2828, %v3063
        %v3065 = vpop.f32.mrb[0].mxu0
        %v3066 = vpop.f32.mrb[0].mxu0
        %v3067 = vadd.f32 %v2828, %v3066
        %v3068 = vpop.f32.mrb[0].mxu0
        %3069 = vmatprep.mubr.bf16.mxu0 %v2789
        %3070 = vmatmul.mubr.bf16.gmra.mrb[0].mxu0 %v2788
        %v3071 = vpop.f32.mrb[0].mxu0
        %v3072 = vadd.f32 %v2828, %v3071
        %v3073 = vpop.f32.mrb[0].mxu0
        %v3074 = vpop.f32.mrb[0].mxu0
        %v3075 = vadd.f32 %v2828, %v3074
        %v3076 = vpop.f32.mrb[0].mxu0
        %3077 = vmatprep.mubr.bf16.mxu0 %v2791
        %3078 = vmatmul.mubr.bf16.gmra.mrb[0].mxu0 %v2790
        %v3079 = vpop.f32.mrb[0].mxu0
        %v3080 = vadd.f32 %v2828, %v3079
        %v3081 = vpop.f32.mrb[0].mxu0
        %v3082 = vpop.f32.mrb[0].mxu0
        %v3083 = vadd.f32 %v2828, %v3082
        %v3084 = vpop.f32.mrb[0].mxu0
        %3085 = vdwg.mxu0
        %v3086 = vmax.f32 %v2960, 0.0
        %v3087 = vmax.f32 %v2963, 0.0
        %v3088 = vmax.f32 %v2968, 0.0
        %v3089 = vmax.f32 %v2971, 0.0
        %v3090 = vmax.f32 %v2976, 0.0
        %v3091 = vmax.f32 %v2979, 0.0
        %v3092 = vmax.f32 %v2984, 0.0
        %v3093 = vmax.f32 %v2987, 0.0
        %v3094 = vmax.f32 %v2992, 0.0
        %v3095 = vmax.f32 %v2995, 0.0
        %v3096 = vmax.f32 %v3000, 0.0
        %v3097 = vmax.f32 %v3003, 0.0
        %v3098 = vmax.f32 %v3008, 0.0
        %v3099 = vmax.f32 %v3011, 0.0
        %v3100 = vmax.f32 %v3016, 0.0
        %v3101 = vmax.f32 %v3019, 0.0
        %v3102 = vmax.f32 %v3024, 0.0
        %v3103 = vmax.f32 %v3027, 0.0
        %v3104 = vmax.f32 %v3032, 0.0
        %v3105 = vmax.f32 %v3035, 0.0
        %v3106 = vmax.f32 %v3040, 0.0
        %v3107 = vmax.f32 %v3043, 0.0
        %v3108 = vmax.f32 %v3048, 0.0
        %v3109 = vmax.f32 %v3051, 0.0
        %v3110 = vmax.f32 %v3056, 0.0
        %v3111 = vmax.f32 %v3059, 0.0
        %v3112 = vmax.f32 %v3064, 0.0
        %v3113 = vmax.f32 %v3067, 0.0
        %v3114 = vmax.f32 %v3072, 0.0
        %v3115 = vmax.f32 %v3075, 0.0
        %v3116 = vmax.f32 %v3080, 0.0
        %v3117 = vmax.f32 %v3083, 0.0
        %v3118 = vld [vmem:[#allocation9 + $0x1] sm:$0x1]
        %v3119 = vld [vmem:[#allocation9 + $0x2] sm:$0x1]
        %v3120 = vadd.f32 %v3086, %v3087
        %v3121 = vadd.f32 %v3120, %v3088
        %v3122 = vadd.f32 %v3121, %v3089
        %v3123 = vadd.f32 %v3122, %v3090
        %v3124 = vadd.f32 %v3123, %v3091
        %v3125 = vadd.f32 %v3124, %v3092
        %v3126 = vadd.f32 %v3125, %v3093
        %v3127 = vadd.f32 %v3126, %v3094
        %v3128 = vadd.f32 %v3127, %v3095
        %v3129 = vadd.f32 %v3128, %v3096
        %v3130 = vadd.f32 %v3129, %v3097
        %v3131 = vadd.f32 %v3130, %v3098
        %v3132 = vadd.f32 %v3131, %v3099
        %v3133 = vadd.f32 %v3132, %v3100
        %v3134 = vadd.f32 %v3133, %v3101
        %v3135 = vadd.f32 %v3134, %v3102
        %v3136 = vadd.f32 %v3135, %v3103
        %v3137 = vadd.f32 %v3136, %v3104
        %v3138 = vadd.f32 %v3137, %v3105
        %v3139 = vadd.f32 %v3138, %v3106
        %v3140 = vadd.f32 %v3139, %v3107
        %v3141 = vadd.f32 %v3140, %v3108
        %v3142 = vadd.f32 %v3141, %v3109
        %v3143 = vadd.f32 %v3142, %v3110
        %v3144 = vadd.f32 %v3143, %v3111
        %v3145 = vadd.f32 %v3144, %v3112
        %v3146 = vadd.f32 %v3145, %v3113
        %v3147 = vadd.f32 %v3146, %v3114
        %v3148 = vadd.f32 %v3147, %v3115
        %v3149 = vadd.f32 %v3148, %v3116
        %v3150 = vadd.f32 %v3149, %v3117
        %v3151 = vrot.slane %v3150, 4
        %v3152 = vadd.f32 %v3150, %v3151
        %v3153 = vrot.slane %v3152, 2
        %v3154 = vadd.f32 %v3152, %v3153
        %v3155 = vrot.slane %v3154, 1
        %v3156 = vadd.f32 %v3154, %v3155
        %v3157 = vmul.f32 %v3086, %v3086
        %v3158 = vmul.f32 %v3087, %v3087
        %v3159 = vmul.f32 %v3088, %v3088
        %v3160 = vmul.f32 %v3089, %v3089
        %v3161 = vmul.f32 %v3090, %v3090
        %v3162 = vmul.f32 %v3091, %v3091
        %v3163 = vmul.f32 %v3092, %v3092
        %v3164 = vmul.f32 %v3093, %v3093
        %v3165 = vmul.f32 %v3094, %v3094
        %v3166 = vmul.f32 %v3095, %v3095
        %v3167 = vmul.f32 %v3096, %v3096
        %v3168 = vmul.f32 %v3097, %v3097
        %v3169 = vmul.f32 %v3098, %v3098
        %v3170 = vmul.f32 %v3099, %v3099
        %v3171 = vmul.f32 %v3100, %v3100
        %v3172 = vmul.f32 %v3101, %v3101
        %v3173 = vmul.f32 %v3102, %v3102
        %v3174 = vmul.f32 %v3103, %v3103
        %v3175 = vmul.f32 %v3104, %v3104
        %v3176 = vmul.f32 %v3105, %v3105
        %v3177 = vmul.f32 %v3106, %v3106
        %v3178 = vmul.f32 %v3107, %v3107
        %v3179 = vmul.f32 %v3108, %v3108
        %v3180 = vmul.f32 %v3109, %v3109
        %v3181 = vmul.f32 %v3110, %v3110
        %v3182 = vmul.f32 %v3111, %v3111
        %v3183 = vmul.f32 %v3112, %v3112
        %v3184 = vmul.f32 %v3113, %v3113
        %v3185 = vmul.f32 %v3114, %v3114
        %v3186 = vmul.f32 %v3115, %v3115
        %v3187 = vmul.f32 %v3116, %v3116
        %v3188 = vmul.f32 %v3117, %v3117
        %v3189 = vadd.f32 %v3157, %v3158
        %v3190 = vadd.f32 %v3189, %v3159
        %v3191 = vadd.f32 %v3190, %v3160
        %v3192 = vadd.f32 %v3191, %v3161
        %v3193 = vadd.f32 %v3192, %v3162
        %v3194 = vadd.f32 %v3193, %v3163
        %v3195 = vadd.f32 %v3194, %v3164
        %v3196 = vadd.f32 %v3195, %v3165
        %v3197 = vadd.f32 %v3196, %v3166
        %v3198 = vadd.f32 %v3197, %v3167
        %v3199 = vadd.f32 %v3198, %v3168
        %v3200 = vadd.f32 %v3199, %v3169
        %v3201 = vadd.f32 %v3200, %v3170
        %v3202 = vadd.f32 %v3201, %v3171
        %v3203 = vadd.f32 %v3202, %v3172
        %v3204 = vadd.f32 %v3203, %v3173
        %v3205 = vadd.f32 %v3204, %v3174
        %v3206 = vadd.f32 %v3205, %v3175
        %v3207 = vadd.f32 %v3206, %v3176
        %v3208 = vadd.f32 %v3207, %v3177
        %v3209 = vadd.f32 %v3208, %v3178
        %v3210 = vadd.f32 %v3209, %v3179
        %v3211 = vadd.f32 %v3210, %v3180
        %v3212 = vadd.f32 %v3211, %v3181
        %v3213 = vadd.f32 %v3212, %v3182
        %v3214 = vadd.f32 %v3213, %v3183
        %v3215 = vadd.f32 %v3214, %v3184
        %v3216 = vadd.f32 %v3215, %v3185
        %v3217 = vadd.f32 %v3216, %v3186
        %v3218 = vadd.f32 %v3217, %v3187
        %v3219 = vadd.f32 %v3218, %v3188
        %v3220 = vrot.slane %v3219, 4
        %v3221 = vadd.f32 %v3219, %v3220
        %v3222 = vrot.slane %v3221, 2
        %v3223 = vadd.f32 %v3221, %v3222
        %v3224 = vrot.slane %v3223, 1
        %v3225 = vadd.f32 %v3223, %v3224
        %v3226 = vmul.f32 %v3156, 0.00390625
        %v3227 = vmul.f32 %v3225, 0.00390625
        %v3228 = vmul.f32 %v3226, %v3226
        %v3229 = vsub.f32 %v3227, %v3228
        %v3230 = vmax.f32 %v3229, 0.0
        %v3231 = vadd.f32 %v3230, 1e-05
        %v3232 = vrsqrt.pop %v3231
        %v3233 = vmul.f32 %v3118, %v3232
        %v3234 = vmul.f32 %v3226, %v3233
        %v3235 = vsub.f32 %v3119, %v3234
        %v3236 = vld [vmem:[#allocation10] sm:$0x1]
        %v3237 = vld [vmem:[#allocation10 + $0x1] sm:$0x1]
        %v3238 = vmul.f32 %v3233, %v3236
        %v3239 = vmul.f32 %v3235, %v3236
        %vm3240 = vcmask 1040384
        %v3241 = vsel %vm3240, %v3239, 0.0
        %3242 = vadd.xlane.f32.xlu0 %v3241
        %v3243 = vpop.xlane.xlu0 %3242
        %v3244 = vadd.f32 %v3243, %v3237
        %v3245 = vlaneseq
        %v3246 = vshrl.u32 %v3245, 7
        %v3247 = vsub.s32 0, %v3246
        %v3248 = vrot.slane %v3238, %v3247
        %v3249 = vmul.f32 %v3086, %v3248
        %v3250 = vmul.f32 %v3087, %v3248
        %v3251 = vmul.f32 %v3088, %v3248
        %v3252 = vmul.f32 %v3089, %v3248
        %v3253 = vmul.f32 %v3090, %v3248
        %v3254 = vmul.f32 %v3091, %v3248
        %v3255 = vmul.f32 %v3092, %v3248
        %v3256 = vmul.f32 %v3093, %v3248
        %v3257 = vmul.f32 %v3094, %v3248
        %v3258 = vmul.f32 %v3095, %v3248
        %v3259 = vmul.f32 %v3096, %v3248
        %v3260 = vmul.f32 %v3097, %v3248
        %v3261 = vmul.f32 %v3098, %v3248
        %v3262 = vmul.f32 %v3099, %v3248
        %v3263 = vmul.f32 %v3100, %v3248
        %v3264 = vmul.f32 %v3101, %v3248
        %v3265 = vmul.f32 %v3102, %v3248
        %v3266 = vmul.f32 %v3103, %v3248
        %v3267 = vmul.f32 %v3104, %v3248
        %v3268 = vmul.f32 %v3105, %v3248
        %v3269 = vmul.f32 %v3106, %v3248
        %v3270 = vmul.f32 %v3107, %v3248
        %v3271 = vmul.f32 %v3108, %v3248
        %v3272 = vmul.f32 %v3109, %v3248
        %v3273 = vmul.f32 %v3110, %v3248
        %v3274 = vmul.f32 %v3111, %v3248
        %v3275 = vmul.f32 %v3112, %v3248
        %v3276 = vmul.f32 %v3113, %v3248
        %v3277 = vmul.f32 %v3114, %v3248
        %v3278 = vmul.f32 %v3115, %v3248
        %v3279 = vmul.f32 %v3116, %v3248
        %v3280 = vmul.f32 %v3117, %v3248
        %3281 = vadd.xlane.f32.xlu0 %v3249
        %v3282 = vpop.xlane.xlu0 %3281
        %3283 = vadd.xlane.f32.xlu0 %v3250
        %v3284 = vpop.xlane.xlu0 %3283
        %3285 = vadd.xlane.f32.xlu0 %v3251
        %v3286 = vpop.xlane.xlu0 %3285
        %3287 = vadd.xlane.f32.xlu0 %v3252
        %v3288 = vpop.xlane.xlu0 %3287
        %3289 = vadd.xlane.f32.xlu0 %v3253
        %v3290 = vpop.xlane.xlu0 %3289
        %3291 = vadd.xlane.f32.xlu0 %v3254
        %v3292 = vpop.xlane.xlu0 %3291
        %3293 = vadd.xlane.f32.xlu0 %v3255
        %v3294 = vpop.xlane.xlu0 %3293
        %3295 = vadd.xlane.f32.xlu0 %v3256
        %v3296 = vpop.xlane.xlu0 %3295
        %3297 = vadd.xlane.f32.xlu0 %v3257
        %v3298 = vpop.xlane.xlu0 %3297
        %3299 = vadd.xlane.f32.xlu0 %v3258
        %v3300 = vpop.xlane.xlu0 %3299
        %3301 = vadd.xlane.f32.xlu0 %v3259
        %v3302 = vpop.xlane.xlu0 %3301
        %3303 = vadd.xlane.f32.xlu0 %v3260
        %v3304 = vpop.xlane.xlu0 %3303
        %3305 = vadd.xlane.f32.xlu0 %v3261
        %v3306 = vpop.xlane.xlu0 %3305
        %3307 = vadd.xlane.f32.xlu0 %v3262
        %v3308 = vpop.xlane.xlu0 %3307
        %3309 = vadd.xlane.f32.xlu0 %v3263
        %v3310 = vpop.xlane.xlu0 %3309
        %3311 = vadd.xlane.f32.xlu0 %v3264
        %v3312 = vpop.xlane.xlu0 %3311
        %3313 = vadd.xlane.f32.xlu0 %v3265
        %v3314 = vpop.xlane.xlu0 %3313
        %3315 = vadd.xlane.f32.xlu0 %v3266
        %v3316 = vpop.xlane.xlu0 %3315
        %3317 = vadd.xlane.f32.xlu0 %v3267
        %v3318 = vpop.xlane.xlu0 %3317
        %3319 = vadd.xlane.f32.xlu0 %v3268
        %v3320 = vpop.xlane.xlu0 %3319
        %3321 = vadd.xlane.f32.xlu0 %v3269
        %v3322 = vpop.xlane.xlu0 %3321
        %3323 = vadd.xlane.f32.xlu0 %v3270
        %v3324 = vpop.xlane.xlu0 %3323
        %3325 = vadd.xlane.f32.xlu0 %v3271
        %v3326 = vpop.xlane.xlu0 %3325
        %3327 = vadd.xlane.f32.xlu0 %v3272
        %v3328 = vpop.xlane.xlu0 %3327
        %3329 = vadd.xlane.f32.xlu0 %v3273
        %v3330 = vpop.xlane.xlu0 %3329
        %3331 = vadd.xlane.f32.xlu0 %v3274
        %v3332 = vpop.xlane.xlu0 %3331
        %3333 = vadd.xlane.f32.xlu0 %v3275
        %v3334 = vpop.xlane.xlu0 %3333
        %3335 = vadd.xlane.f32.xlu0 %v3276
        %v3336 = vpop.xlane.xlu0 %3335
        %3337 = vadd.xlane.f32.xlu0 %v3277
        %v3338 = vpop.xlane.xlu0 %3337
        %3339 = vadd.xlane.f32.xlu0 %v3278
        %v3340 = vpop.xlane.xlu0 %3339
        %3341 = vadd.xlane.f32.xlu0 %v3279
        %v3342 = vpop.xlane.xlu0 %3341
        %3343 = vadd.xlane.f32.xlu0 %v3280
        %v3344 = vpop.xlane.xlu0 %3343
        %v3345 = vlaneseq
        %v3346 = vshrl.u32 %v3345, 7
        %v3347 = vsub.s32 0, %v3346
        %v3348 = vrot.slane %v3244, %v3347
        %v3349 = vadd.f32 %v3282, %v3348
        %v3350 = vadd.f32 %v3284, %v3348
        %v3351 = vadd.f32 %v3286, %v3348
        %v3352 = vadd.f32 %v3288, %v3348
        %v3353 = vadd.f32 %v3290, %v3348
        %v3354 = vadd.f32 %v3292, %v3348
        %v3355 = vadd.f32 %v3294, %v3348
        %v3356 = vadd.f32 %v3296, %v3348
        %v3357 = vadd.f32 %v3298, %v3348
        %v3358 = vadd.f32 %v3300, %v3348
        %v3359 = vadd.f32 %v3302, %v3348
        %v3360 = vadd.f32 %v3304, %v3348
        %v3361 = vadd.f32 %v3306, %v3348
        %v3362 = vadd.f32 %v3308, %v3348
        %v3363 = vadd.f32 %v3310, %v3348
        %v3364 = vadd.f32 %v3312, %v3348
        %v3365 = vadd.f32 %v3314, %v3348
        %v3366 = vadd.f32 %v3316, %v3348
        %v3367 = vadd.f32 %v3318, %v3348
        %v3368 = vadd.f32 %v3320, %v3348
        %v3369 = vadd.f32 %v3322, %v3348
        %v3370 = vadd.f32 %v3324, %v3348
        %v3371 = vadd.f32 %v3326, %v3348
        %v3372 = vadd.f32 %v3328, %v3348
        %v3373 = vadd.f32 %v3330, %v3348
        %v3374 = vadd.f32 %v3332, %v3348
        %v3375 = vadd.f32 %v3334, %v3348
        %v3376 = vadd.f32 %v3336, %v3348
        %v3377 = vadd.f32 %v3338, %v3348
        %v3378 = vadd.f32 %v3340, %v3348
        %v3379 = vadd.f32 %v3342, %v3348
        %v3380 = vadd.f32 %v3344, %v3348
        %vm3381 = vcmask 7168
        %3382 = vst.msk [vmem:[%s338] sm:$0xff] %vm3381, %v3349
        %3383 = vst.msk [vmem:[%s338 + $0x8] sm:$0xff] %vm3381, %v3350
        %3384 = vst.msk [vmem:[%s338 + $0x10] sm:$0xff] %vm3381, %v3351
        %3385 = vst.msk [vmem:[%s338 + $0x18] sm:$0xff] %vm3381, %v3352
        %3386 = vst.msk [vmem:[%s338 + $0x20] sm:$0xff] %vm3381, %v3353
        %3387 = vst.msk [vmem:[%s338 + $0x28] sm:$0xff] %vm3381, %v3354
        %3388 = vst.msk [vmem:[%s338 + $0x30] sm:$0xff] %vm3381, %v3355
        %3389 = vst.msk [vmem:[%s338 + $0x38] sm:$0xff] %vm3381, %v3356
        %3390 = vst.msk [vmem:[%s338 + $0x40] sm:$0xff] %vm3381, %v3357
        %3391 = vst.msk [vmem:[%s338 + $0x48] sm:$0xff] %vm3381, %v3358
        %3392 = vst.msk [vmem:[%s338 + $0x50] sm:$0xff] %vm3381, %v3359
        %3393 = vst.msk [vmem:[%s338 + $0x58] sm:$0xff] %vm3381, %v3360
        %3394 = vst.msk [vmem:[%s338 + $0x60] sm:$0xff] %vm3381, %v3361
        %3395 = vst.msk [vmem:[%s338 + $0x68] sm:$0xff] %vm3381, %v3362
        %3396 = vst.msk [vmem:[%s338 + $0x70] sm:$0xff] %vm3381, %v3363
        %3397 = vst.msk [vmem:[%s338 + $0x78] sm:$0xff] %vm3381, %v3364
        %3398 = vst.msk [vmem:[%s338 + $0x80] sm:$0xff] %vm3381, %v3365
        %3399 = vst.msk [vmem:[%s338 + $0x88] sm:$0xff] %vm3381, %v3366
        %3400 = vst.msk [vmem:[%s338 + $0x90] sm:$0xff] %vm3381, %v3367
        %3401 = vst.msk [vmem:[%s338 + $0x98] sm:$0xff] %vm3381, %v3368
        %3402 = vst.msk [vmem:[%s338 + $0xa0] sm:$0xff] %vm3381, %v3369
        %3403 = vst.msk [vmem:[%s338 + $0xa8] sm:$0xff] %vm3381, %v3370
        %3404 = vst.msk [vmem:[%s338 + $0xb0] sm:$0xff] %vm3381, %v3371
        %3405 = vst.msk [vmem:[%s338 + $0xb8] sm:$0xff] %vm3381, %v3372
        %3406 = vst.msk [vmem:[%s338 + $0xc0] sm:$0xff] %vm3381, %v3373
        %3407 = vst.msk [vmem:[%s338 + $0xc8] sm:$0xff] %vm3381, %v3374
        %3408 = vst.msk [vmem:[%s338 + $0xd0] sm:$0xff] %vm3381, %v3375
        %3409 = vst.msk [vmem:[%s338 + $0xd8] sm:$0xff] %vm3381, %v3376
        %3410 = vst.msk [vmem:[%s338 + $0xe0] sm:$0xff] %vm3381, %v3377
        %3411 = vst.msk [vmem:[%s338 + $0xe8] sm:$0xff] %vm3381, %v3378
        %3412 = vst.msk [vmem:[%s338 + $0xf0] sm:$0xff] %vm3381, %v3379
        %3413 = vst.msk [vmem:[%s338 + $0xf8] sm:$0xff] %vm3381, %v3380
        %p3414 = scmp.lt.s32.totalorder %s23, 1
        %s3415 = scalar_select %p3414, %s23, 1
        %s3416 = smul.addr %s3415, 32
        %s3417 = smul.addr %s3416, 8
        %s3418 = scalar_lea.vmem %s6, %s3417
        // Predicated region
        $region69: #{tpu_custom_call.1} parent=43 // pred_check
          %p3419 = pneg %p172
        $region70: #{tpu_custom_call.1} parent=43 // pred_check_branch
          %3421 = sbr.rel (%p3419) target = $region72
        $region71: #{tpu_custom_call.1} parent=43 // pred_region
          _
        $region72: #{tpu_custom_call.1} parent=43 // pred_fallthru
          _
      $region44: #{tpu_custom_call.1} parent=5 // pred_fallthru
        _
      %p3422 = scmp.le.s32.totalorder 2, %s18
      // Predicated region
      $region73: #{tpu_custom_call.1} parent=5 // pred_check
        %p3423 = pneg %p3422
      $region74: #{tpu_custom_call.1} parent=5 // pred_check_branch
        %3425 = sbr.rel (%p3423) target = $region76
      $region75: #{tpu_custom_call.1} parent=5 // pred_region
        %s3426 = ssub.s32 %s18, 2
        // Predicated region
        $region77: #{tpu_custom_call.1} parent=75 // pred_check
          %p3427 = pneg %p178
        $region78: #{tpu_custom_call.1} parent=75 // pred_check_branch
          %3429 = sbr.rel (%p3427) target = $region80
        $region79: #{tpu_custom_call.1} parent=75 // pred_region
          %p3430 = scmp.lt.s32.totalorder %s24, 1
          %s3431 = scalar_select %p3430, %s24, 1
          %s3432 = smul.addr %s3431, 32
          %s3433 = smul.addr %s3432, 8
          %s3434 = scalar_lea.vmem %s6, %s3433
        $region80: #{tpu_custom_call.1} parent=75 // pred_fallthru
          _
      $region76: #{tpu_custom_call.1} parent=5 // pred_fallthru
        _
    $region6: #{tpu_custom_call.1} parent=1 // loop_footer
      %s22 = sadd.s32 1, %s18
    $region7: #{tpu_custom_call.1} parent=1 // loop_footer_branch
      %17 = sbr.rel target = $region3
    $region8: #{tpu_custom_call.1} parent=1 // loop_exit
      _
    %3435 = vsyncpa [#allocation3], 1
    %s3436 = scalar_lea.sflag [#allocation3], 1
    %3437 = vsyncpa %s3436, 1
    %3438 = vsyncpa [#allocation5], 1
    %3439 = vsyncpa [#allocation8], 1
    %3440 = vsyncpa [#allocation11], 1

</llo_original>
